<compile_context>
chip_gen: v6e
topology: v6e:2x2x1
jax: 0.10.0
libtpu: 0.0.40
codegen_flags: <defaults>
</compile_context>

<pallas_src>
from functools import partial

import jax
import jax.numpy as jnp
from jax.experimental import pallas as pl
from jax.experimental.pallas import tpu as pltpu


def _shift_zero(v, s, axis):
    """r[i] = v[i + s] along `axis` (s in {-1, 0, 1}); zero where out of range."""
    if s == 0:
        return v
    n = v.shape[axis]
    zshape = list(v.shape)
    zshape[axis] = 1
    z = jnp.zeros(zshape, v.dtype)
    if s > 0:
        kept = jax.lax.slice_in_dim(v, 1, n, axis=axis)
        return jnp.concatenate([kept, z], axis=axis)
    kept = jax.lax.slice_in_dim(v, 0, n - 1, axis=axis)
    return jnp.concatenate([z, kept], axis=axis)


def _bottleneck_kernel(x_ref, w1_ref, w2f_ref, s1_ref, b1_ref, s2_ref, b2_ref,
                       out_ref, *, N, H, W, growth):
    # x_ref: (N*H*W, Cin) f32 -- batch*spatial flattened onto the matmul M dim.
    x = x_ref[...]

    # --- bn1 + relu (BN folded to per-channel scale/shift), f32 on the VPU ---
    a = jnp.maximum(x * s1_ref[...] + b1_ref[...], 0.0)

    # --- 1x1 conv: one (M, Cin) x (Cin, planes) MXU matmul, bf16 operands ---
    h = jnp.dot(a.astype(jnp.bfloat16), w1_ref[...],
                preferred_element_type=jnp.float32)            # (M, planes) f32

    # --- bn2 + relu, f32 ---
    h = jnp.maximum(h * s2_ref[...] + b2_ref[...], 0.0)

    # --- 3x3 conv, stride 1, pad 1: ONE wide matmul against the 9 pre-fused
    # taps -> (M, 9*growth), then sum the 9 spatially shifted slabs (zero
    # filled at the image borders). ---
    big = jnp.dot(h.astype(jnp.bfloat16), w2f_ref[...],
                  preferred_element_type=jnp.float32)          # (M, 9*growth)
    big = big.reshape(N, H, W, 9 * growth)

    acc = None
    for dy in range(3):
        for dx in range(3):
            t = dy * 3 + dx
            slab = big[:, :, :, t * growth:(t + 1) * growth]   # (N, H, W, G)
            slab = _shift_zero(slab, dx - 1, axis=2)           # W shift (sublanes)
            slab = _shift_zero(slab, dy - 1, axis=1)           # H shift (tile rows)
            acc = slab if acc is None else acc + slab

    out_ref[...] = acc.astype(out_ref.dtype)                   # single full store


def qfw_bottleneck(x_nchw, w1, w2_hwio, s1, b1, s2, b2, *, is_transition=False):
    """x_nchw: (N, Cin, H, W) f32.  Returns (N, Cin + growth, H, W) f32."""
    x = jnp.transpose(x_nchw, (0, 2, 3, 1))                    # NHWC: C -> lanes
    N, H, W, Cin = x.shape
    planes = w1.shape[1]
    growth = w2_hwio.shape[3]
    M = N * H * W

    # Pre-fuse the 9 conv2 taps into one (planes, 9*growth) matrix and pre-cast
    # matmul weights to bf16 (native MXU operand dtype on v6e/v7x).
    w1_bf = w1.astype(jnp.bfloat16)
    w2f = (w2_hwio.reshape(9, planes, growth)                  # [t, c, g], t = dy*3+dx
           .transpose(1, 0, 2)
           .reshape(planes, 9 * growth)
           .astype(jnp.bfloat16))

    x2 = x.reshape(M, Cin)                                     # flatten outside

    kernel = partial(_bottleneck_kernel, N=N, H=H, W=W, growth=growth)

    conv = pl.pallas_call(
        kernel,
        out_shape=jax.ShapeDtypeStruct((N, H, W, growth), jnp.float32),
        grid_spec=pltpu.PrefetchScalarGridSpec(
            num_scalar_prefetch=0,
            grid=(1,),                                         # whole batch per step
            in_specs=[
                pl.BlockSpec((M, Cin), lambda i: (0, 0)),              # x (flattened)
                pl.BlockSpec((Cin, planes), lambda i: (0, 0)),         # conv1 W (bf16)
                pl.BlockSpec((planes, 9 * growth), lambda i: (0, 0)),  # fused conv2 W
                pl.BlockSpec((1, Cin), lambda i: (0, 0)),              # bn1 scale
                pl.BlockSpec((1, Cin), lambda i: (0, 0)),              # bn1 shift
                pl.BlockSpec((1, planes), lambda i: (0, 0)),           # bn2 scale
                pl.BlockSpec((1, planes), lambda i: (0, 0)),           # bn2 shift
            ],
            out_specs=pl.BlockSpec((N, H, W, growth), lambda i: (0, 0, 0, 0)),
        ),
        compiler_params=pltpu.CompilerParams(
            dimension_semantics=("arbitrary",)),               # single step; with a
                                                               # batched grid use "parallel"
                                                               # to split across v7x cores
    )(x2, w1_bf, w2f, s1, b1, s2, b2)

    # Channel concat [x, conv]: the x passthrough is a pure copy, so it is done
    # here (fused by XLA with the NHWC->NCHW transpose under jit) instead of
    # re-writing those channels from inside the kernel.
    out_nchw = jnp.concatenate(
        [x_nchw, jnp.transpose(conv, (0, 3, 1, 2))], axis=1)
    # is_transition -> torch.dequantize(): no-op in the float path.
    return out_nchw


def _reference(x_nchw, w1, w2_hwio, s1, b1, s2, b2):
    """Mirrors the kernel's numerics: bf16 matmul/conv operands, f32 accumulation."""
    x = jnp.transpose(x_nchw, (0, 2, 3, 1))
    a = jnp.maximum(x * s1 + b1, 0.0).astype(jnp.bfloat16)
    h = jnp.einsum("nhwc,cp->nhwp", a, w1.astype(jnp.bfloat16),
                   preferred_element_type=jnp.float32)
    h = jnp.maximum(h * s2 + b2, 0.0).astype(jnp.bfloat16)
    c = jax.lax.conv_general_dilated(
        h, w2_hwio.astype(jnp.bfloat16), window_strides=(1, 1), padding="SAME",
        dimension_numbers=("NHWC", "HWIO", "NHWC"),
        preferred_element_type=jnp.float32)
    out = jnp.concatenate([x, c], axis=-1)
    return jnp.transpose(out, (0, 3, 1, 2))


if __name__ == "__main__":
    # Shapes consistent with the module: in_planes=16, growthRate=12,
    # expansion=4 -> planes=48.  Input (PyTorch NCHW): (2, 16, 16, 16).
    N, Cin, H, W = 2, 16, 16, 16
    expansion, growth = 4, 12
    planes = expansion * growth
    eps = 1e-5

    key = jax.random.PRNGKey(0)
    kx, kw1, kw2 = jax.random.split(key, 3)

    x = jax.random.normal(kx, (N, Cin, H, W), jnp.float32)

    # conv1: 1x1, torch OIHW (planes, Cin, 1, 1) -> stored as (Cin, planes)
    w1 = jax.random.normal(kw1, (Cin, planes), jnp.float32) * 0.1
    # conv2: 3x3, torch OIHW (growth, planes, 3, 3) -> stored as HWIO
    w2 = jax.random.normal(kw2, (3, 3, planes, growth), jnp.float32) * 0.1

    # bn1 (eval-mode running stats) folded to per-channel scale/shift
    g1 = 1.0 + 0.01 * jnp.arange(Cin, dtype=jnp.float32)
    be1 = 0.02 * jnp.arange(Cin, dtype=jnp.float32)
    m1 = 0.05 * jnp.arange(Cin, dtype=jnp.float32) - 0.3
    v1 = 1.0 + 0.03 * jnp.arange(Cin, dtype=jnp.float32)
    s1 = (g1 / jnp.sqrt(v1 + eps)).reshape(1, Cin)
    b1 = (be1 - m1 * g1 / jnp.sqrt(v1 + eps)).reshape(1, Cin)

    # bn2 folded
    g2 = 1.0 + 0.005 * jnp.arange(planes, dtype=jnp.float32)
    be2 = 0.01 * jnp.arange(planes, dtype=jnp.float32)
    m2 = 0.02 * jnp.arange(planes, dtype=jnp.float32) - 0.2
    v2 = 1.0 + 0.01 * jnp.arange(planes, dtype=jnp.float32)
    s2 = (g2 / jnp.sqrt(v2 + eps)).reshape(1, planes)
    b2 = (be2 - m2 * g2 / jnp.sqrt(v2 + eps)).reshape(1, planes)

    fwd = jax.jit(partial(qfw_bottleneck, is_transition=False))
    out = jax.block_until_ready(fwd(x, w1, w2, s1, b1, s2, b2))

    ref = _reference(x, w1, w2, s1, b1, s2, b2)
    assert out.shape == (N, Cin + growth, H, W), out.shape
    max_err = float(jnp.max(jnp.abs(out - ref)))
    assert jnp.allclose(out, ref, atol=2e-3, rtol=2e-3), max_err

    print("KERNEL_OK")
</pallas_src>

<mosaic_0001>
module attributes {stable_mosaic.version = 11 : i64} {
  func.func @_bottleneck_kernel(%arg0: i32, %arg1: memref<512x16xf32, #tpu.memory_space<vmem>>, %arg2: memref<16x48xbf16, #tpu.memory_space<vmem>>, %arg3: memref<48x108xbf16, #tpu.memory_space<vmem>>, %arg4: memref<1x16xf32, #tpu.memory_space<vmem>>, %arg5: memref<1x16xf32, #tpu.memory_space<vmem>>, %arg6: memref<1x48xf32, #tpu.memory_space<vmem>>, %arg7: memref<1x48xf32, #tpu.memory_space<vmem>>, %arg8: memref<2x16x16x12xf32, #tpu.memory_space<vmem>>) attributes {dimension_semantics = [#tpu.dimension_semantics<arbitrary>], iteration_bounds = array<i64: 1>, scalar_prefetch = 0 : i64, scratch_operands = 0 : i64, tpu.core_type = #tpu.core_type<tc>, window_params = [{pipeline_mode = #tpu.pipeline_mode<synchronous>, transform_indices = @transform_0, window_bounds = array<i64: 512, 16>}, {pipeline_mode = #tpu.pipeline_mode<synchronous>, transform_indices = @transform_1, window_bounds = array<i64: 16, 48>}, {pipeline_mode = #tpu.pipeline_mode<synchronous>, transform_indices = @transform_2, window_bounds = array<i64: 48, 108>}, {pipeline_mode = #tpu.pipeline_mode<synchronous>, transform_indices = @transform_3, window_bounds = array<i64: 1, 16>}, {pipeline_mode = #tpu.pipeline_mode<synchronous>, transform_indices = @transform_4, window_bounds = array<i64: 1, 16>}, {pipeline_mode = #tpu.pipeline_mode<synchronous>, transform_indices = @transform_5, window_bounds = array<i64: 1, 48>}, {pipeline_mode = #tpu.pipeline_mode<synchronous>, transform_indices = @transform_6, window_bounds = array<i64: 1, 48>}, {pipeline_mode = #tpu.pipeline_mode<synchronous>, transform_indices = @transform_7, window_bounds = array<i64: 2, 16, 16, 12>}]} {
    %c0 = arith.constant 0 : index
    %c0_0 = arith.constant 0 : index
    %0 = vector.load %arg1[%c0, %c0_0] : memref<512x16xf32, #tpu.memory_space<vmem>>, vector<512x16xf32>
    %c0_1 = arith.constant 0 : index
    %c0_2 = arith.constant 0 : index
    %1 = vector.load %arg4[%c0_1, %c0_2] : memref<1x16xf32, #tpu.memory_space<vmem>>, vector<1x16xf32>
    %2 = vector.broadcast %1 : vector<1x16xf32> to vector<512x16xf32>
    %3 = arith.mulf %0, %2 : vector<512x16xf32>
    %c0_3 = arith.constant 0 : index
    %c0_4 = arith.constant 0 : index
    %4 = vector.load %arg5[%c0_3, %c0_4] : memref<1x16xf32, #tpu.memory_space<vmem>>, vector<1x16xf32>
    %5 = vector.broadcast %4 : vector<1x16xf32> to vector<512x16xf32>
    %6 = arith.addf %3, %5 : vector<512x16xf32>
    %cst = arith.constant 0.000000e+00 : f32
    %7 = vector.broadcast %cst : f32 to vector<512x16xf32>
    %8 = arith.maximumf %6, %7 : vector<512x16xf32>
    %9 = arith.truncf %8 : vector<512x16xf32> to vector<512x16xbf16>
    %c0_5 = arith.constant 0 : index
    %c0_6 = arith.constant 0 : index
    %10 = vector.load %arg2[%c0_5, %c0_6] : memref<16x48xbf16, #tpu.memory_space<vmem>>, vector<16x48xbf16>
    %cst_7 = arith.constant dense<0.000000e+00> : vector<512x48xf32>
    %11 = tpu.matmul %9, %10, %cst_7 {dimension_numbers = #tpu.dot_dimension_numbers<[1], [0], [0], [1], [0, 0, 1, 1], [], []>} : vector<512x16xbf16>, vector<16x48xbf16>, vector<512x48xf32> -> vector<512x48xf32>
    %c0_8 = arith.constant 0 : index
    %c0_9 = arith.constant 0 : index
    %12 = vector.load %arg6[%c0_8, %c0_9] : memref<1x48xf32, #tpu.memory_space<vmem>>, vector<1x48xf32>
    %13 = vector.broadcast %12 : vector<1x48xf32> to vector<512x48xf32>
    %14 = arith.mulf %11, %13 : vector<512x48xf32>
    %c0_10 = arith.constant 0 : index
    %c0_11 = arith.constant 0 : index
    %15 = vector.load %arg7[%c0_10, %c0_11] : memref<1x48xf32, #tpu.memory_space<vmem>>, vector<1x48xf32>
    %16 = vector.broadcast %15 : vector<1x48xf32> to vector<512x48xf32>
    %17 = arith.addf %14, %16 : vector<512x48xf32>
    %cst_12 = arith.constant 0.000000e+00 : f32
    %18 = vector.broadcast %cst_12 : f32 to vector<512x48xf32>
    %19 = arith.maximumf %17, %18 : vector<512x48xf32>
    %20 = arith.truncf %19 : vector<512x48xf32> to vector<512x48xbf16>
    %c0_13 = arith.constant 0 : index
    %c0_14 = arith.constant 0 : index
    %21 = vector.load %arg3[%c0_13, %c0_14] : memref<48x108xbf16, #tpu.memory_space<vmem>>, vector<48x108xbf16>
    %cst_15 = arith.constant dense<0.000000e+00> : vector<512x108xf32>
    %22 = tpu.matmul %20, %21, %cst_15 {dimension_numbers = #tpu.dot_dimension_numbers<[1], [0], [0], [1], [0, 0, 1, 1], [], []>} : vector<512x48xbf16>, vector<48x108xbf16>, vector<512x108xf32> -> vector<512x108xf32>
    %23 = vector.shape_cast %22 : vector<512x108xf32> to vector<2x16x16x108xf32>
    %24 = vector.extract_strided_slice %23 {offsets = [0, 0, 0, 0], sizes = [2, 16, 16, 12], strides = [1, 1, 1, 1]} : vector<2x16x16x108xf32> to vector<2x16x16x12xf32>
    %cst_16 = arith.constant 0.000000e+00 : f32
    %25 = vector.broadcast %cst_16 : f32 to vector<2x16x1x12xf32>
    %26 = vector.extract_strided_slice %24 {offsets = [0, 0, 0, 0], sizes = [2, 16, 15, 12], strides = [1, 1, 1, 1]} : vector<2x16x16x12xf32> to vector<2x16x15x12xf32>
    %27 = tpu.concatenate %25, %26 in 2 : vector<2x16x1x12xf32>, vector<2x16x15x12xf32> -> vector<2x16x16x12xf32>
    %cst_17 = arith.constant 0.000000e+00 : f32
    %28 = vector.broadcast %cst_17 : f32 to vector<2x1x16x12xf32>
    %29 = vector.extract_strided_slice %27 {offsets = [0, 0, 0, 0], sizes = [2, 15, 16, 12], strides = [1, 1, 1, 1]} : vector<2x16x16x12xf32> to vector<2x15x16x12xf32>
    %30 = tpu.concatenate %28, %29 in 1 : vector<2x1x16x12xf32>, vector<2x15x16x12xf32> -> vector<2x16x16x12xf32>
    %31 = vector.extract_strided_slice %23 {offsets = [0, 0, 0, 12], sizes = [2, 16, 16, 12], strides = [1, 1, 1, 1]} : vector<2x16x16x108xf32> to vector<2x16x16x12xf32>
    %cst_18 = arith.constant 0.000000e+00 : f32
    %32 = vector.broadcast %cst_18 : f32 to vector<2x1x16x12xf32>
    %33 = vector.extract_strided_slice %31 {offsets = [0, 0, 0, 0], sizes = [2, 15, 16, 12], strides = [1, 1, 1, 1]} : vector<2x16x16x12xf32> to vector<2x15x16x12xf32>
    %34 = tpu.concatenate %32, %33 in 1 : vector<2x1x16x12xf32>, vector<2x15x16x12xf32> -> vector<2x16x16x12xf32>
    %35 = arith.addf %30, %34 : vector<2x16x16x12xf32>
    %36 = vector.extract_strided_slice %23 {offsets = [0, 0, 0, 24], sizes = [2, 16, 16, 12], strides = [1, 1, 1, 1]} : vector<2x16x16x108xf32> to vector<2x16x16x12xf32>
    %cst_19 = arith.constant 0.000000e+00 : f32
    %37 = vector.broadcast %cst_19 : f32 to vector<2x16x1x12xf32>
    %38 = vector.extract_strided_slice %36 {offsets = [0, 0, 1, 0], sizes = [2, 16, 15, 12], strides = [1, 1, 1, 1]} : vector<2x16x16x12xf32> to vector<2x16x15x12xf32>
    %39 = tpu.concatenate %38, %37 in 2 : vector<2x16x15x12xf32>, vector<2x16x1x12xf32> -> vector<2x16x16x12xf32>
    %cst_20 = arith.constant 0.000000e+00 : f32
    %40 = vector.broadcast %cst_20 : f32 to vector<2x1x16x12xf32>
    %41 = vector.extract_strided_slice %39 {offsets = [0, 0, 0, 0], sizes = [2, 15, 16, 12], strides = [1, 1, 1, 1]} : vector<2x16x16x12xf32> to vector<2x15x16x12xf32>
    %42 = tpu.concatenate %40, %41 in 1 : vector<2x1x16x12xf32>, vector<2x15x16x12xf32> -> vector<2x16x16x12xf32>
    %43 = arith.addf %35, %42 : vector<2x16x16x12xf32>
    %44 = vector.extract_strided_slice %23 {offsets = [0, 0, 0, 36], sizes = [2, 16, 16, 12], strides = [1, 1, 1, 1]} : vector<2x16x16x108xf32> to vector<2x16x16x12xf32>
    %cst_21 = arith.constant 0.000000e+00 : f32
    %45 = vector.broadcast %cst_21 : f32 to vector<2x16x1x12xf32>
    %46 = vector.extract_strided_slice %44 {offsets = [0, 0, 0, 0], sizes = [2, 16, 15, 12], strides = [1, 1, 1, 1]} : vector<2x16x16x12xf32> to vector<2x16x15x12xf32>
    %47 = tpu.concatenate %45, %46 in 2 : vector<2x16x1x12xf32>, vector<2x16x15x12xf32> -> vector<2x16x16x12xf32>
    %48 = arith.addf %43, %47 : vector<2x16x16x12xf32>
    %49 = vector.extract_strided_slice %23 {offsets = [0, 0, 0, 48], sizes = [2, 16, 16, 12], strides = [1, 1, 1, 1]} : vector<2x16x16x108xf32> to vector<2x16x16x12xf32>
    %50 = arith.addf %48, %49 : vector<2x16x16x12xf32>
    %51 = vector.extract_strided_slice %23 {offsets = [0, 0, 0, 60], sizes = [2, 16, 16, 12], strides = [1, 1, 1, 1]} : vector<2x16x16x108xf32> to vector<2x16x16x12xf32>
    %cst_22 = arith.constant 0.000000e+00 : f32
    %52 = vector.broadcast %cst_22 : f32 to vector<2x16x1x12xf32>
    %53 = vector.extract_strided_slice %51 {offsets = [0, 0, 1, 0], sizes = [2, 16, 15, 12], strides = [1, 1, 1, 1]} : vector<2x16x16x12xf32> to vector<2x16x15x12xf32>
    %54 = tpu.concatenate %53, %52 in 2 : vector<2x16x15x12xf32>, vector<2x16x1x12xf32> -> vector<2x16x16x12xf32>
    %55 = arith.addf %50, %54 : vector<2x16x16x12xf32>
    %56 = vector.extract_strided_slice %23 {offsets = [0, 0, 0, 72], sizes = [2, 16, 16, 12], strides = [1, 1, 1, 1]} : vector<2x16x16x108xf32> to vector<2x16x16x12xf32>
    %cst_23 = arith.constant 0.000000e+00 : f32
    %57 = vector.broadcast %cst_23 : f32 to vector<2x16x1x12xf32>
    %58 = vector.extract_strided_slice %56 {offsets = [0, 0, 0, 0], sizes = [2, 16, 15, 12], strides = [1, 1, 1, 1]} : vector<2x16x16x12xf32> to vector<2x16x15x12xf32>
    %59 = tpu.concatenate %57, %58 in 2 : vector<2x16x1x12xf32>, vector<2x16x15x12xf32> -> vector<2x16x16x12xf32>
    %cst_24 = arith.constant 0.000000e+00 : f32
    %60 = vector.broadcast %cst_24 : f32 to vector<2x1x16x12xf32>
    %61 = vector.extract_strided_slice %59 {offsets = [0, 1, 0, 0], sizes = [2, 15, 16, 12], strides = [1, 1, 1, 1]} : vector<2x16x16x12xf32> to vector<2x15x16x12xf32>
    %62 = tpu.concatenate %61, %60 in 1 : vector<2x15x16x12xf32>, vector<2x1x16x12xf32> -> vector<2x16x16x12xf32>
    %63 = arith.addf %55, %62 : vector<2x16x16x12xf32>
    %64 = vector.extract_strided_slice %23 {offsets = [0, 0, 0, 84], sizes = [2, 16, 16, 12], strides = [1, 1, 1, 1]} : vector<2x16x16x108xf32> to vector<2x16x16x12xf32>
    %cst_25 = arith.constant 0.000000e+00 : f32
    %65 = vector.broadcast %cst_25 : f32 to vector<2x1x16x12xf32>
    %66 = vector.extract_strided_slice %64 {offsets = [0, 1, 0, 0], sizes = [2, 15, 16, 12], strides = [1, 1, 1, 1]} : vector<2x16x16x12xf32> to vector<2x15x16x12xf32>
    %67 = tpu.concatenate %66, %65 in 1 : vector<2x15x16x12xf32>, vector<2x1x16x12xf32> -> vector<2x16x16x12xf32>
    %68 = arith.addf %63, %67 : vector<2x16x16x12xf32>
    %69 = vector.extract_strided_slice %23 {offsets = [0, 0, 0, 96], sizes = [2, 16, 16, 12], strides = [1, 1, 1, 1]} : vector<2x16x16x108xf32> to vector<2x16x16x12xf32>
    %cst_26 = arith.constant 0.000000e+00 : f32
    %70 = vector.broadcast %cst_26 : f32 to vector<2x16x1x12xf32>
    %71 = vector.extract_strided_slice %69 {offsets = [0, 0, 1, 0], sizes = [2, 16, 15, 12], strides = [1, 1, 1, 1]} : vector<2x16x16x12xf32> to vector<2x16x15x12xf32>
    %72 = tpu.concatenate %71, %70 in 2 : vector<2x16x15x12xf32>, vector<2x16x1x12xf32> -> vector<2x16x16x12xf32>
    %cst_27 = arith.constant 0.000000e+00 : f32
    %73 = vector.broadcast %cst_27 : f32 to vector<2x1x16x12xf32>
    %74 = vector.extract_strided_slice %72 {offsets = [0, 1, 0, 0], sizes = [2, 15, 16, 12], strides = [1, 1, 1, 1]} : vector<2x16x16x12xf32> to vector<2x15x16x12xf32>
    %75 = tpu.concatenate %74, %73 in 1 : vector<2x15x16x12xf32>, vector<2x1x16x12xf32> -> vector<2x16x16x12xf32>
    %76 = arith.addf %68, %75 : vector<2x16x16x12xf32>
    %c0_28 = arith.constant 0 : index
    %c0_29 = arith.constant 0 : index
    %c0_30 = arith.constant 0 : index
    %c0_31 = arith.constant 0 : index
    %77 = vector.load %arg8[%c0_28, %c0_29, %c0_30, %c0_31] : memref<2x16x16x12xf32, #tpu.memory_space<vmem>>, vector<2x16x16x12xf32>
    tpu.vector_store %arg8[%c0_28, %c0_29, %c0_30, %c0_31], %76 {strides = array<i32>} : memref<2x16x16x12xf32, #tpu.memory_space<vmem>>, vector<2x16x16x12xf32>,
    return
  }
  func.func @transform_0(%arg0: i32) -> (i32, i32) {
    %c0_i32 = arith.constant 0 : i32
    %c0_i32_0 = arith.constant 0 : i32
    %c0_i32_1 = arith.constant 0 : i32
    return %c0_i32, %c0_i32_0 : i32, i32
  }
  func.func @transform_1(%arg0: i32) -> (i32, i32) {
    %c0_i32 = arith.constant 0 : i32
    %c0_i32_0 = arith.constant 0 : i32
    %c0_i32_1 = arith.constant 0 : i32
    return %c0_i32, %c0_i32_0 : i32, i32
  }
  func.func @transform_2(%arg0: i32) -> (i32, i32) {
    %c0_i32 = arith.constant 0 : i32
    %c0_i32_0 = arith.constant 0 : i32
    %c0_i32_1 = arith.constant 0 : i32
    return %c0_i32, %c0_i32_0 : i32, i32
  }
  func.func @transform_3(%arg0: i32) -> (i32, i32) {
    %c0_i32 = arith.constant 0 : i32
    %c0_i32_0 = arith.constant 0 : i32
    %c0_i32_1 = arith.constant 0 : i32
    return %c0_i32, %c0_i32_0 : i32, i32
  }
  func.func @transform_4(%arg0: i32) -> (i32, i32) {
    %c0_i32 = arith.constant 0 : i32
    %c0_i32_0 = arith.constant 0 : i32
    %c0_i32_1 = arith.constant 0 : i32
    return %c0_i32, %c0_i32_0 : i32, i32
  }
  func.func @transform_5(%arg0: i32) -> (i32, i32) {
    %c0_i32 = arith.constant 0 : i32
    %c0_i32_0 = arith.constant 0 : i32
    %c0_i32_1 = arith.constant 0 : i32
    return %c0_i32, %c0_i32_0 : i32, i32
  }
  func.func @transform_6(%arg0: i32) -> (i32, i32) {
    %c0_i32 = arith.constant 0 : i32
    %c0_i32_0 = arith.constant 0 : i32
    %c0_i32_1 = arith.constant 0 : i32
    return %c0_i32, %c0_i32_0 : i32, i32
  }
  func.func @transform_7(%arg0: i32) -> (i32, i32, i32, i32) {
    %c0_i32 = arith.constant 0 : i32
    %c0_i32_0 = arith.constant 0 : i32
    %c0_i32_1 = arith.constant 0 : i32
    %c0_i32_2 = arith.constant 0 : i32
    %c0_i32_3 = arith.constant 0 : i32
    return %c0_i32, %c0_i32_0, %c0_i32_1, %c0_i32_2 : i32, i32, i32, i32
  }
}

</mosaic_0001>

<llo_original>
// kernel: qfw_bottleneck.1
$region0: #{qfw_bottleneck.1}
  #allocation0 [shape = 'u32[]', space=smem, size = 0x4, offset = 0x4, fixed_abs, tag = 'smem constant byte address 0x4 - core index']
  #allocation1 [shape = 'u32[144,128]{1,0:T(1,128)}', space=vmem, size = 0x12000, scoped, tag = 'internal scratch']
  %s0 = inlined_call_operand.vmem [shape: f32[512,16], index: 0, kind: input, shape index: {}]
  %s1 = inlined_call_operand.vmem [shape: bf16[16,48], index: 1, kind: input, shape index: {}]
  %s2 = inlined_call_operand.vmem [shape: bf16[48,108], index: 2, kind: input, shape index: {}]
  %s3 = inlined_call_operand.vmem [shape: f32[1,16], index: 3, kind: input, shape index: {}]
  %s4 = inlined_call_operand.vmem [shape: f32[1,16], index: 4, kind: input, shape index: {}]
  %s5 = inlined_call_operand.vmem [shape: f32[1,48], index: 5, kind: input, shape index: {}]
  %s6 = inlined_call_operand.vmem [shape: f32[1,48], index: 6, kind: input, shape index: {}]
  %s7 = inlined_call_operand.vmem [shape: f32[2,16,16,12], index: 7, kind: output, shape index: {}]
  %s8 = sld [smem:[#allocation0]]
  $region38: #{qfw_bottleneck.1} parent=0
    _
  %s10 = ssub.s32 1, %s8
  %s11 = scalar_select 0, %s10, %s8
  // Predicated region
  $region2: #{qfw_bottleneck.1} parent=0 // pred_check
    _
  $region3: #{qfw_bottleneck.1} parent=0 // pred_check_branch
    %13 = sbr.rel (0) target = $region5
  $region4: #{qfw_bottleneck.1} parent=0 // pred_region
    _
  $region5: #{qfw_bottleneck.1} parent=0 // pred_fallthru
    _
  // Predicated region
  $region6: #{qfw_bottleneck.1} parent=0 // pred_check
    _
  $region7: #{qfw_bottleneck.1} parent=0 // pred_check_branch
    %15 = sbr.rel (0) target = $region9
  $region8: #{qfw_bottleneck.1} parent=0 // pred_region
    _
  $region9: #{qfw_bottleneck.1} parent=0 // pred_fallthru
    _
  // Predicated region
  $region10: #{qfw_bottleneck.1} parent=0 // pred_check
    _
  $region11: #{qfw_bottleneck.1} parent=0 // pred_check_branch
    %17 = sbr.rel (0) target = $region13
  $region12: #{qfw_bottleneck.1} parent=0 // pred_region
    _
  $region13: #{qfw_bottleneck.1} parent=0 // pred_fallthru
    _
  // Predicated region
  $region14: #{qfw_bottleneck.1} parent=0 // pred_check
    _
  $region15: #{qfw_bottleneck.1} parent=0 // pred_check_branch
    %19 = sbr.rel (0) target = $region17
  $region16: #{qfw_bottleneck.1} parent=0 // pred_region
    _
  $region17: #{qfw_bottleneck.1} parent=0 // pred_fallthru
    _
  // Predicated region
  $region18: #{qfw_bottleneck.1} parent=0 // pred_check
    _
  $region19: #{qfw_bottleneck.1} parent=0 // pred_check_branch
    %21 = sbr.rel (0) target = $region21
  $region20: #{qfw_bottleneck.1} parent=0 // pred_region
    _
  $region21: #{qfw_bottleneck.1} parent=0 // pred_fallthru
    _
  // Predicated region
  $region22: #{qfw_bottleneck.1} parent=0 // pred_check
    _
  $region23: #{qfw_bottleneck.1} parent=0 // pred_check_branch
    %23 = sbr.rel (0) target = $region25
  $region24: #{qfw_bottleneck.1} parent=0 // pred_region
    _
  $region25: #{qfw_bottleneck.1} parent=0 // pred_fallthru
    _
  // Predicated region
  $region26: #{qfw_bottleneck.1} parent=0 // pred_check
    _
  $region27: #{qfw_bottleneck.1} parent=0 // pred_check_branch
    %25 = sbr.rel (0) target = $region29
  $region28: #{qfw_bottleneck.1} parent=0 // pred_region
    _
  $region29: #{qfw_bottleneck.1} parent=0 // pred_fallthru
    _
  %v27 = vld [vmem:[%s0] sm:$0xff]
  %v28 = vld [vmem:[%s0 + $0x8] sm:$0xff]
  %v29 = vld [vmem:[%s0 + $0x10] sm:$0xff]
  %v30 = vld [vmem:[%s0 + $0x18] sm:$0xff]
  %v31 = vld [vmem:[%s0 + $0x20] sm:$0xff]
  %v32 = vld [vmem:[%s0 + $0x28] sm:$0xff]
  %v33 = vld [vmem:[%s0 + $0x30] sm:$0xff]
  %v34 = vld [vmem:[%s0 + $0x38] sm:$0xff]
  %v35 = vld [vmem:[%s0 + $0x40] sm:$0xff]
  %v36 = vld [vmem:[%s0 + $0x48] sm:$0xff]
  %v37 = vld [vmem:[%s0 + $0x50] sm:$0xff]
  %v38 = vld [vmem:[%s0 + $0x58] sm:$0xff]
  %v39 = vld [vmem:[%s0 + $0x60] sm:$0xff]
  %v40 = vld [vmem:[%s0 + $0x68] sm:$0xff]
  %v41 = vld [vmem:[%s0 + $0x70] sm:$0xff]
  %v42 = vld [vmem:[%s0 + $0x78] sm:$0xff]
  %v43 = vld [vmem:[%s0 + $0x80] sm:$0xff]
  %v44 = vld [vmem:[%s0 + $0x88] sm:$0xff]
  %v45 = vld [vmem:[%s0 + $0x90] sm:$0xff]
  %v46 = vld [vmem:[%s0 + $0x98] sm:$0xff]
  %v47 = vld [vmem:[%s0 + $0xa0] sm:$0xff]
  %v48 = vld [vmem:[%s0 + $0xa8] sm:$0xff]
  %v49 = vld [vmem:[%s0 + $0xb0] sm:$0xff]
  %v50 = vld [vmem:[%s0 + $0xb8] sm:$0xff]
  %v51 = vld [vmem:[%s0 + $0xc0] sm:$0xff]
  %v52 = vld [vmem:[%s0 + $0xc8] sm:$0xff]
  %v53 = vld [vmem:[%s0 + $0xd0] sm:$0xff]
  %v54 = vld [vmem:[%s0 + $0xd8] sm:$0xff]
  %v55 = vld [vmem:[%s0 + $0xe0] sm:$0xff]
  %v56 = vld [vmem:[%s0 + $0xe8] sm:$0xff]
  %v57 = vld [vmem:[%s0 + $0xf0] sm:$0xff]
  %v58 = vld [vmem:[%s0 + $0xf8] sm:$0xff]
  %v59 = vld [vmem:[%s0 + $0x100] sm:$0xff]
  %v60 = vld [vmem:[%s0 + $0x108] sm:$0xff]
  %v61 = vld [vmem:[%s0 + $0x110] sm:$0xff]
  %v62 = vld [vmem:[%s0 + $0x118] sm:$0xff]
  %v63 = vld [vmem:[%s0 + $0x120] sm:$0xff]
  %v64 = vld [vmem:[%s0 + $0x128] sm:$0xff]
  %v65 = vld [vmem:[%s0 + $0x130] sm:$0xff]
  %v66 = vld [vmem:[%s0 + $0x138] sm:$0xff]
  %v67 = vld [vmem:[%s0 + $0x140] sm:$0xff]
  %v68 = vld [vmem:[%s0 + $0x148] sm:$0xff]
  %v69 = vld [vmem:[%s0 + $0x150] sm:$0xff]
  %v70 = vld [vmem:[%s0 + $0x158] sm:$0xff]
  %v71 = vld [vmem:[%s0 + $0x160] sm:$0xff]
  %v72 = vld [vmem:[%s0 + $0x168] sm:$0xff]
  %v73 = vld [vmem:[%s0 + $0x170] sm:$0xff]
  %v74 = vld [vmem:[%s0 + $0x178] sm:$0xff]
  %v75 = vld [vmem:[%s0 + $0x180] sm:$0xff]
  %v76 = vld [vmem:[%s0 + $0x188] sm:$0xff]
  %v77 = vld [vmem:[%s0 + $0x190] sm:$0xff]
  %v78 = vld [vmem:[%s0 + $0x198] sm:$0xff]
  %v79 = vld [vmem:[%s0 + $0x1a0] sm:$0xff]
  %v80 = vld [vmem:[%s0 + $0x1a8] sm:$0xff]
  %v81 = vld [vmem:[%s0 + $0x1b0] sm:$0xff]
  %v82 = vld [vmem:[%s0 + $0x1b8] sm:$0xff]
  %v83 = vld [vmem:[%s0 + $0x1c0] sm:$0xff]
  %v84 = vld [vmem:[%s0 + $0x1c8] sm:$0xff]
  %v85 = vld [vmem:[%s0 + $0x1d0] sm:$0xff]
  %v86 = vld [vmem:[%s0 + $0x1d8] sm:$0xff]
  %v87 = vld [vmem:[%s0 + $0x1e0] sm:$0xff]
  %v88 = vld [vmem:[%s0 + $0x1e8] sm:$0xff]
  %v89 = vld [vmem:[%s0 + $0x1f0] sm:$0xff]
  %v90 = vld [vmem:[%s0 + $0x1f8] sm:$0xff]
  %v91 = vld [vmem:[%s3] sm:$0x1]
  %v93 = vlaneseq
  %v94 = vshrl.u32 %v93, 7
  %v95 = vsub.s32 0, %v94
  %v96 = vrot.slane %v91, %v95
  %v98 = vmul.f32 %v27, %v96
  %v99 = vmul.f32 %v28, %v96
  %v100 = vmul.f32 %v29, %v96
  %v101 = vmul.f32 %v30, %v96
  %v102 = vmul.f32 %v31, %v96
  %v103 = vmul.f32 %v32, %v96
  %v104 = vmul.f32 %v33, %v96
  %v105 = vmul.f32 %v34, %v96
  %v106 = vmul.f32 %v35, %v96
  %v107 = vmul.f32 %v36, %v96
  %v108 = vmul.f32 %v37, %v96
  %v109 = vmul.f32 %v38, %v96
  %v110 = vmul.f32 %v39, %v96
  %v111 = vmul.f32 %v40, %v96
  %v112 = vmul.f32 %v41, %v96
  %v113 = vmul.f32 %v42, %v96
  %v114 = vmul.f32 %v43, %v96
  %v115 = vmul.f32 %v44, %v96
  %v116 = vmul.f32 %v45, %v96
  %v117 = vmul.f32 %v46, %v96
  %v118 = vmul.f32 %v47, %v96
  %v119 = vmul.f32 %v48, %v96
  %v120 = vmul.f32 %v49, %v96
  %v121 = vmul.f32 %v50, %v96
  %v122 = vmul.f32 %v51, %v96
  %v123 = vmul.f32 %v52, %v96
  %v124 = vmul.f32 %v53, %v96
  %v125 = vmul.f32 %v54, %v96
  %v126 = vmul.f32 %v55, %v96
  %v127 = vmul.f32 %v56, %v96
  %v128 = vmul.f32 %v57, %v96
  %v129 = vmul.f32 %v58, %v96
  %v130 = vmul.f32 %v59, %v96
  %v131 = vmul.f32 %v60, %v96
  %v132 = vmul.f32 %v61, %v96
  %v133 = vmul.f32 %v62, %v96
  %v134 = vmul.f32 %v63, %v96
  %v135 = vmul.f32 %v64, %v96
  %v136 = vmul.f32 %v65, %v96
  %v137 = vmul.f32 %v66, %v96
  %v138 = vmul.f32 %v67, %v96
  %v139 = vmul.f32 %v68, %v96
  %v140 = vmul.f32 %v69, %v96
  %v141 = vmul.f32 %v70, %v96
  %v142 = vmul.f32 %v71, %v96
  %v143 = vmul.f32 %v72, %v96
  %v144 = vmul.f32 %v73, %v96
  %v145 = vmul.f32 %v74, %v96
  %v146 = vmul.f32 %v75, %v96
  %v147 = vmul.f32 %v76, %v96
  %v148 = vmul.f32 %v77, %v96
  %v149 = vmul.f32 %v78, %v96
  %v150 = vmul.f32 %v79, %v96
  %v151 = vmul.f32 %v80, %v96
  %v152 = vmul.f32 %v81, %v96
  %v153 = vmul.f32 %v82, %v96
  %v154 = vmul.f32 %v83, %v96
  %v155 = vmul.f32 %v84, %v96
  %v156 = vmul.f32 %v85, %v96
  %v157 = vmul.f32 %v86, %v96
  %v158 = vmul.f32 %v87, %v96
  %v159 = vmul.f32 %v88, %v96
  %v160 = vmul.f32 %v89, %v96
  %v161 = vmul.f32 %v90, %v96
  %v162 = vld [vmem:[%s4] sm:$0x1]
  %v164 = vlaneseq
  %v165 = vshrl.u32 %v164, 7
  %v166 = vsub.s32 0, %v165
  %v167 = vrot.slane %v162, %v166
  %v169 = vadd.f32 %v98, %v167
  %v170 = vadd.f32 %v99, %v167
  %v171 = vadd.f32 %v100, %v167
  %v172 = vadd.f32 %v101, %v167
  %v173 = vadd.f32 %v102, %v167
  %v174 = vadd.f32 %v103, %v167
  %v175 = vadd.f32 %v104, %v167
  %v176 = vadd.f32 %v105, %v167
  %v177 = vadd.f32 %v106, %v167
  %v178 = vadd.f32 %v107, %v167
  %v179 = vadd.f32 %v108, %v167
  %v180 = vadd.f32 %v109, %v167
  %v181 = vadd.f32 %v110, %v167
  %v182 = vadd.f32 %v111, %v167
  %v183 = vadd.f32 %v112, %v167
  %v184 = vadd.f32 %v113, %v167
  %v185 = vadd.f32 %v114, %v167
  %v186 = vadd.f32 %v115, %v167
  %v187 = vadd.f32 %v116, %v167
  %v188 = vadd.f32 %v117, %v167
  %v189 = vadd.f32 %v118, %v167
  %v190 = vadd.f32 %v119, %v167
  %v191 = vadd.f32 %v120, %v167
  %v192 = vadd.f32 %v121, %v167
  %v193 = vadd.f32 %v122, %v167
  %v194 = vadd.f32 %v123, %v167
  %v195 = vadd.f32 %v124, %v167
  %v196 = vadd.f32 %v125, %v167
  %v197 = vadd.f32 %v126, %v167
  %v198 = vadd.f32 %v127, %v167
  %v199 = vadd.f32 %v128, %v167
  %v200 = vadd.f32 %v129, %v167
  %v201 = vadd.f32 %v130, %v167
  %v202 = vadd.f32 %v131, %v167
  %v203 = vadd.f32 %v132, %v167
  %v204 = vadd.f32 %v133, %v167
  %v205 = vadd.f32 %v134, %v167
  %v206 = vadd.f32 %v135, %v167
  %v207 = vadd.f32 %v136, %v167
  %v208 = vadd.f32 %v137, %v167
  %v209 = vadd.f32 %v138, %v167
  %v210 = vadd.f32 %v139, %v167
  %v211 = vadd.f32 %v140, %v167
  %v212 = vadd.f32 %v141, %v167
  %v213 = vadd.f32 %v142, %v167
  %v214 = vadd.f32 %v143, %v167
  %v215 = vadd.f32 %v144, %v167
  %v216 = vadd.f32 %v145, %v167
  %v217 = vadd.f32 %v146, %v167
  %v218 = vadd.f32 %v147, %v167
  %v219 = vadd.f32 %v148, %v167
  %v220 = vadd.f32 %v149, %v167
  %v221 = vadd.f32 %v150, %v167
  %v222 = vadd.f32 %v151, %v167
  %v223 = vadd.f32 %v152, %v167
  %v224 = vadd.f32 %v153, %v167
  %v225 = vadd.f32 %v154, %v167
  %v226 = vadd.f32 %v155, %v167
  %v227 = vadd.f32 %v156, %v167
  %v228 = vadd.f32 %v157, %v167
  %v229 = vadd.f32 %v158, %v167
  %v230 = vadd.f32 %v159, %v167
  %v231 = vadd.f32 %v160, %v167
  %v232 = vadd.f32 %v161, %v167
  %v233 = vmax.f32 %v169, 0.0
  %v234 = vmax.f32 %v170, 0.0
  %v235 = vmax.f32 %v171, 0.0
  %v236 = vmax.f32 %v172, 0.0
  %v237 = vmax.f32 %v173, 0.0
  %v238 = vmax.f32 %v174, 0.0
  %v239 = vmax.f32 %v175, 0.0
  %v240 = vmax.f32 %v176, 0.0
  %v241 = vmax.f32 %v177, 0.0
  %v242 = vmax.f32 %v178, 0.0
  %v243 = vmax.f32 %v179, 0.0
  %v244 = vmax.f32 %v180, 0.0
  %v245 = vmax.f32 %v181, 0.0
  %v246 = vmax.f32 %v182, 0.0
  %v247 = vmax.f32 %v183, 0.0
  %v248 = vmax.f32 %v184, 0.0
  %v249 = vmax.f32 %v185, 0.0
  %v250 = vmax.f32 %v186, 0.0
  %v251 = vmax.f32 %v187, 0.0
  %v252 = vmax.f32 %v188, 0.0
  %v253 = vmax.f32 %v189, 0.0
  %v254 = vmax.f32 %v190, 0.0
  %v255 = vmax.f32 %v191, 0.0
  %v256 = vmax.f32 %v192, 0.0
  %v257 = vmax.f32 %v193, 0.0
  %v258 = vmax.f32 %v194, 0.0
  %v259 = vmax.f32 %v195, 0.0
  %v260 = vmax.f32 %v196, 0.0
  %v261 = vmax.f32 %v197, 0.0
  %v262 = vmax.f32 %v198, 0.0
  %v263 = vmax.f32 %v199, 0.0
  %v264 = vmax.f32 %v200, 0.0
  %v265 = vmax.f32 %v201, 0.0
  %v266 = vmax.f32 %v202, 0.0
  %v267 = vmax.f32 %v203, 0.0
  %v268 = vmax.f32 %v204, 0.0
  %v269 = vmax.f32 %v205, 0.0
  %v270 = vmax.f32 %v206, 0.0
  %v271 = vmax.f32 %v207, 0.0
  %v272 = vmax.f32 %v208, 0.0
  %v273 = vmax.f32 %v209, 0.0
  %v274 = vmax.f32 %v210, 0.0
  %v275 = vmax.f32 %v211, 0.0
  %v276 = vmax.f32 %v212, 0.0
  %v277 = vmax.f32 %v213, 0.0
  %v278 = vmax.f32 %v214, 0.0
  %v279 = vmax.f32 %v215, 0.0
  %v280 = vmax.f32 %v216, 0.0
  %v281 = vmax.f32 %v217, 0.0
  %v282 = vmax.f32 %v218, 0.0
  %v283 = vmax.f32 %v219, 0.0
  %v284 = vmax.f32 %v220, 0.0
  %v285 = vmax.f32 %v221, 0.0
  %v286 = vmax.f32 %v222, 0.0
  %v287 = vmax.f32 %v223, 0.0
  %v288 = vmax.f32 %v224, 0.0
  %v289 = vmax.f32 %v225, 0.0
  %v290 = vmax.f32 %v226, 0.0
  %v291 = vmax.f32 %v227, 0.0
  %v292 = vmax.f32 %v228, 0.0
  %v293 = vmax.f32 %v229, 0.0
  %v294 = vmax.f32 %v230, 0.0
  %v295 = vmax.f32 %v231, 0.0
  %v296 = vmax.f32 %v232, 0.0
  %v297 = vpack.c.bf16 %v234, %v233
  %v298 = vpack.c.bf16 %v236, %v235
  %v299 = vpack.c.bf16 %v238, %v237
  %v300 = vpack.c.bf16 %v240, %v239
  %v301 = vpack.c.bf16 %v242, %v241
  %v302 = vpack.c.bf16 %v244, %v243
  %v303 = vpack.c.bf16 %v246, %v245
  %v304 = vpack.c.bf16 %v248, %v247
  %v305 = vpack.c.bf16 %v250, %v249
  %v306 = vpack.c.bf16 %v252, %v251
  %v307 = vpack.c.bf16 %v254, %v253
  %v308 = vpack.c.bf16 %v256, %v255
  %v309 = vpack.c.bf16 %v258, %v257
  %v310 = vpack.c.bf16 %v260, %v259
  %v311 = vpack.c.bf16 %v262, %v261
  %v312 = vpack.c.bf16 %v264, %v263
  %v313 = vpack.c.bf16 %v266, %v265
  %v314 = vpack.c.bf16 %v268, %v267
  %v315 = vpack.c.bf16 %v270, %v269
  %v316 = vpack.c.bf16 %v272, %v271
  %v317 = vpack.c.bf16 %v274, %v273
  %v318 = vpack.c.bf16 %v276, %v275
  %v319 = vpack.c.bf16 %v278, %v277
  %v320 = vpack.c.bf16 %v280, %v279
  %v321 = vpack.c.bf16 %v282, %v281
  %v322 = vpack.c.bf16 %v284, %v283
  %v323 = vpack.c.bf16 %v286, %v285
  %v324 = vpack.c.bf16 %v288, %v287
  %v325 = vpack.c.bf16 %v290, %v289
  %v326 = vpack.c.bf16 %v292, %v291
  %v327 = vpack.c.bf16 %v294, %v293
  %v328 = vpack.c.bf16 %v296, %v295
  %v329 = vld [vmem:[%s1] sm:$0xf]
  %v330 = vld [vmem:[%s1 + $0x4] sm:$0xf]
  %v333 = vunpack.c.l.b16 %v329
  %v334 = vunpack.c.l.b16 %v330
  %v335 = vpack.c.b16 %v334, %v333
  %vm337 = vcmask 130048
  %v339 = vsel %vm337, %v297, 0
  %v342 = vsel %vm337, %v298, 0
  %v345 = vsel %vm337, %v299, 0
  %v348 = vsel %vm337, %v300, 0
  %v351 = vsel %vm337, %v301, 0
  %v354 = vsel %vm337, %v302, 0
  %v357 = vsel %vm337, %v303, 0
  %v360 = vsel %vm337, %v304, 0
  %v363 = vsel %vm337, %v305, 0
  %v366 = vsel %vm337, %v306, 0
  %v369 = vsel %vm337, %v307, 0
  %v372 = vsel %vm337, %v308, 0
  %v375 = vsel %vm337, %v309, 0
  %v378 = vsel %vm337, %v310, 0
  %v381 = vsel %vm337, %v311, 0
  %v384 = vsel %vm337, %v312, 0
  %v387 = vsel %vm337, %v313, 0
  %v390 = vsel %vm337, %v314, 0
  %v393 = vsel %vm337, %v315, 0
  %v396 = vsel %vm337, %v316, 0
  %v399 = vsel %vm337, %v317, 0
  %v402 = vsel %vm337, %v318, 0
  %v405 = vsel %vm337, %v319, 0
  %v408 = vsel %vm337, %v320, 0
  %v411 = vsel %vm337, %v321, 0
  %v414 = vsel %vm337, %v322, 0
  %v417 = vsel %vm337, %v323, 0
  %v420 = vsel %vm337, %v324, 0
  %v423 = vsel %vm337, %v325, 0
  %v426 = vsel %vm337, %v326, 0
  %v429 = vsel %vm337, %v327, 0
  %v432 = vsel %vm337, %v328, 0
  %434 = vmatprep.subr.bf16.mxu0 0
  %435 = vmatpush1.bf16.msra.mxu0 0
  %436 = vmatprep.subr.bf16.mxu0 0
  %437 = vmatpush1.bf16.msra.mxu0 0
  %438 = vmatprep.subr.bf16.mxu0 0
  %439 = vmatpush1.bf16.msra.mxu0 0
  %440 = vmatprep.subr.bf16.mxu0 0
  %441 = vmatpush1.bf16.msra.mxu0 0
  %442 = vmatprep.subr.bf16.mxu0 0
  %443 = vmatpush1.bf16.msra.mxu0 0
  %444 = vmatprep.subr.bf16.mxu0 0
  %445 = vmatpush1.bf16.msra.mxu0 0
  %446 = vmatprep.subr.bf16.mxu0 0
  %447 = vmatpush1.bf16.msra.mxu0 0
  %448 = vmatprep.subr.bf16.mxu0 0
  %449 = vmatpush1.bf16.msra.mxu0 %v335
  %450 = vmatprep.subr.bf16.mxu0 0
  %451 = vmatpush2.bf16.msra.mxu0 0
  %452 = vmatprep.subr.bf16.mxu0 0
  %453 = vmatpush2.bf16.msra.mxu0 0
  %454 = vmatprep.subr.bf16.mxu0 0
  %455 = vmatpush2.bf16.msra.mxu0 0
  %456 = vmatprep.subr.bf16.mxu0 0
  %457 = vmatpush2.bf16.msra.mxu0 0
  %458 = vmatprep.subr.bf16.mxu0 0
  %459 = vmatpush2.bf16.msra.mxu0 0
  %460 = vmatprep.subr.bf16.mxu0 0
  %461 = vmatpush2.bf16.msra.mxu0 0
  %462 = vmatprep.subr.bf16.mxu0 0
  %463 = vmatpush2.bf16.msra.mxu0 0
  %464 = vmatprep.subr.bf16.mxu0 0
  %465 = vmatpush2.bf16.msra.mxu0 0
  %466 = vmatprep.mubr.bf16.mxu0 0
  %467 = vmatmul.mubr.bf16.gmra.mxu0 %v339
  %v468 = vpop.f32.mrf.mxu0
  %v469 = vadd.f32 0.0, %v468
  %v470 = vpop.f32.mrf.mxu0
  %v471 = vpop.f32.mrf.mxu0
  %v472 = vadd.f32 0.0, %v471
  %v473 = vpop.f32.mrf.mxu0
  %474 = vmatprep.mubr.bf16.mxu0 0
  %475 = vmatmul.mubr.bf16.gmra.mxu0 %v342
  %v476 = vpop.f32.mrf.mxu0
  %v477 = vadd.f32 0.0, %v476
  %v478 = vpop.f32.mrf.mxu0
  %v479 = vpop.f32.mrf.mxu0
  %v480 = vadd.f32 0.0, %v479
  %v481 = vpop.f32.mrf.mxu0
  %482 = vmatprep.mubr.bf16.mxu0 0
  %483 = vmatmul.mubr.bf16.gmra.mxu0 %v345
  %v484 = vpop.f32.mrf.mxu0
  %v485 = vadd.f32 0.0, %v484
  %v486 = vpop.f32.mrf.mxu0
  %v487 = vpop.f32.mrf.mxu0
  %v488 = vadd.f32 0.0, %v487
  %v489 = vpop.f32.mrf.mxu0
  %490 = vmatprep.mubr.bf16.mxu0 0
  %491 = vmatmul.mubr.bf16.gmra.mxu0 %v348
  %v492 = vpop.f32.mrf.mxu0
  %v493 = vadd.f32 0.0, %v492
  %v494 = vpop.f32.mrf.mxu0
  %v495 = vpop.f32.mrf.mxu0
  %v496 = vadd.f32 0.0, %v495
  %v497 = vpop.f32.mrf.mxu0
  %498 = vmatprep.mubr.bf16.mxu0 0
  %499 = vmatmul.mubr.bf16.gmra.mxu0 %v351
  %v500 = vpop.f32.mrf.mxu0
  %v501 = vadd.f32 0.0, %v500
  %v502 = vpop.f32.mrf.mxu0
  %v503 = vpop.f32.mrf.mxu0
  %v504 = vadd.f32 0.0, %v503
  %v505 = vpop.f32.mrf.mxu0
  %506 = vmatprep.mubr.bf16.mxu0 0
  %507 = vmatmul.mubr.bf16.gmra.mxu0 %v354
  %v508 = vpop.f32.mrf.mxu0
  %v509 = vadd.f32 0.0, %v508
  %v510 = vpop.f32.mrf.mxu0
  %v511 = vpop.f32.mrf.mxu0
  %v512 = vadd.f32 0.0, %v511
  %v513 = vpop.f32.mrf.mxu0
  %514 = vmatprep.mubr.bf16.mxu0 0
  %515 = vmatmul.mubr.bf16.gmra.mxu0 %v357
  %v516 = vpop.f32.mrf.mxu0
  %v517 = vadd.f32 0.0, %v516
  %v518 = vpop.f32.mrf.mxu0
  %v519 = vpop.f32.mrf.mxu0
  %v520 = vadd.f32 0.0, %v519
  %v521 = vpop.f32.mrf.mxu0
  %522 = vmatprep.mubr.bf16.mxu0 0
  %523 = vmatmul.mubr.bf16.gmra.mxu0 %v360
  %v524 = vpop.f32.mrf.mxu0
  %v525 = vadd.f32 0.0, %v524
  %v526 = vpop.f32.mrf.mxu0
  %v527 = vpop.f32.mrf.mxu0
  %v528 = vadd.f32 0.0, %v527
  %v529 = vpop.f32.mrf.mxu0
  %530 = vmatprep.mubr.bf16.mxu0 0
  %531 = vmatmul.mubr.bf16.gmra.mxu0 %v363
  %v532 = vpop.f32.mrf.mxu0
  %v533 = vadd.f32 0.0, %v532
  %v534 = vpop.f32.mrf.mxu0
  %v535 = vpop.f32.mrf.mxu0
  %v536 = vadd.f32 0.0, %v535
  %v537 = vpop.f32.mrf.mxu0
  %538 = vmatprep.mubr.bf16.mxu0 0
  %539 = vmatmul.mubr.bf16.gmra.mxu0 %v366
  %v540 = vpop.f32.mrf.mxu0
  %v541 = vadd.f32 0.0, %v540
  %v542 = vpop.f32.mrf.mxu0
  %v543 = vpop.f32.mrf.mxu0
  %v544 = vadd.f32 0.0, %v543
  %v545 = vpop.f32.mrf.mxu0
  %546 = vmatprep.mubr.bf16.mxu0 0
  %547 = vmatmul.mubr.bf16.gmra.mxu0 %v369
  %v548 = vpop.f32.mrf.mxu0
  %v549 = vadd.f32 0.0, %v548
  %v550 = vpop.f32.mrf.mxu0
  %v551 = vpop.f32.mrf.mxu0
  %v552 = vadd.f32 0.0, %v551
  %v553 = vpop.f32.mrf.mxu0
  %554 = vmatprep.mubr.bf16.mxu0 0
  %555 = vmatmul.mubr.bf16.gmra.mxu0 %v372
  %v556 = vpop.f32.mrf.mxu0
  %v557 = vadd.f32 0.0, %v556
  %v558 = vpop.f32.mrf.mxu0
  %v559 = vpop.f32.mrf.mxu0
  %v560 = vadd.f32 0.0, %v559
  %v561 = vpop.f32.mrf.mxu0
  %562 = vmatprep.mubr.bf16.mxu0 0
  %563 = vmatmul.mubr.bf16.gmra.mxu0 %v375
  %v564 = vpop.f32.mrf.mxu0
  %v565 = vadd.f32 0.0, %v564
  %v566 = vpop.f32.mrf.mxu0
  %v567 = vpop.f32.mrf.mxu0
  %v568 = vadd.f32 0.0, %v567
  %v569 = vpop.f32.mrf.mxu0
  %570 = vmatprep.mubr.bf16.mxu0 0
  %571 = vmatmul.mubr.bf16.gmra.mxu0 %v378
  %v572 = vpop.f32.mrf.mxu0
  %v573 = vadd.f32 0.0, %v572
  %v574 = vpop.f32.mrf.mxu0
  %v575 = vpop.f32.mrf.mxu0
  %v576 = vadd.f32 0.0, %v575
  %v577 = vpop.f32.mrf.mxu0
  %578 = vmatprep.mubr.bf16.mxu0 0
  %579 = vmatmul.mubr.bf16.gmra.mxu0 %v381
  %v580 = vpop.f32.mrf.mxu0
  %v581 = vadd.f32 0.0, %v580
  %v582 = vpop.f32.mrf.mxu0
  %v583 = vpop.f32.mrf.mxu0
  %v584 = vadd.f32 0.0, %v583
  %v585 = vpop.f32.mrf.mxu0
  %586 = vmatprep.mubr.bf16.mxu0 0
  %587 = vmatmul.mubr.bf16.gmra.mxu0 %v384
  %v588 = vpop.f32.mrf.mxu0
  %v589 = vadd.f32 0.0, %v588
  %v590 = vpop.f32.mrf.mxu0
  %v591 = vpop.f32.mrf.mxu0
  %v592 = vadd.f32 0.0, %v591
  %v593 = vpop.f32.mrf.mxu0
  %594 = vmatprep.mubr.bf16.mxu0 0
  %595 = vmatmul.mubr.bf16.gmra.mxu0 %v387
  %v596 = vpop.f32.mrf.mxu0
  %v597 = vadd.f32 0.0, %v596
  %v598 = vpop.f32.mrf.mxu0
  %v599 = vpop.f32.mrf.mxu0
  %v600 = vadd.f32 0.0, %v599
  %v601 = vpop.f32.mrf.mxu0
  %602 = vmatprep.mubr.bf16.mxu0 0
  %603 = vmatmul.mubr.bf16.gmra.mxu0 %v390
  %v604 = vpop.f32.mrf.mxu0
  %v605 = vadd.f32 0.0, %v604
  %v606 = vpop.f32.mrf.mxu0
  %v607 = vpop.f32.mrf.mxu0
  %v608 = vadd.f32 0.0, %v607
  %v609 = vpop.f32.mrf.mxu0
  %610 = vmatprep.mubr.bf16.mxu0 0
  %611 = vmatmul.mubr.bf16.gmra.mxu0 %v393
  %v612 = vpop.f32.mrf.mxu0
  %v613 = vadd.f32 0.0, %v612
  %v614 = vpop.f32.mrf.mxu0
  %v615 = vpop.f32.mrf.mxu0
  %v616 = vadd.f32 0.0, %v615
  %v617 = vpop.f32.mrf.mxu0
  %618 = vmatprep.mubr.bf16.mxu0 0
  %619 = vmatmul.mubr.bf16.gmra.mxu0 %v396
  %v620 = vpop.f32.mrf.mxu0
  %v621 = vadd.f32 0.0, %v620
  %v622 = vpop.f32.mrf.mxu0
  %v623 = vpop.f32.mrf.mxu0
  %v624 = vadd.f32 0.0, %v623
  %v625 = vpop.f32.mrf.mxu0
  %626 = vmatprep.mubr.bf16.mxu0 0
  %627 = vmatmul.mubr.bf16.gmra.mxu0 %v399
  %v628 = vpop.f32.mrf.mxu0
  %v629 = vadd.f32 0.0, %v628
  %v630 = vpop.f32.mrf.mxu0
  %v631 = vpop.f32.mrf.mxu0
  %v632 = vadd.f32 0.0, %v631
  %v633 = vpop.f32.mrf.mxu0
  %634 = vmatprep.mubr.bf16.mxu0 0
  %635 = vmatmul.mubr.bf16.gmra.mxu0 %v402
  %v636 = vpop.f32.mrf.mxu0
  %v637 = vadd.f32 0.0, %v636
  %v638 = vpop.f32.mrf.mxu0
  %v639 = vpop.f32.mrf.mxu0
  %v640 = vadd.f32 0.0, %v639
  %v641 = vpop.f32.mrf.mxu0
  %642 = vmatprep.mubr.bf16.mxu0 0
  %643 = vmatmul.mubr.bf16.gmra.mxu0 %v405
  %v644 = vpop.f32.mrf.mxu0
  %v645 = vadd.f32 0.0, %v644
  %v646 = vpop.f32.mrf.mxu0
  %v647 = vpop.f32.mrf.mxu0
  %v648 = vadd.f32 0.0, %v647
  %v649 = vpop.f32.mrf.mxu0
  %650 = vmatprep.mubr.bf16.mxu0 0
  %651 = vmatmul.mubr.bf16.gmra.mxu0 %v408
  %v652 = vpop.f32.mrf.mxu0
  %v653 = vadd.f32 0.0, %v652
  %v654 = vpop.f32.mrf.mxu0
  %v655 = vpop.f32.mrf.mxu0
  %v656 = vadd.f32 0.0, %v655
  %v657 = vpop.f32.mrf.mxu0
  %658 = vmatprep.mubr.bf16.mxu0 0
  %659 = vmatmul.mubr.bf16.gmra.mxu0 %v411
  %v660 = vpop.f32.mrf.mxu0
  %v661 = vadd.f32 0.0, %v660
  %v662 = vpop.f32.mrf.mxu0
  %v663 = vpop.f32.mrf.mxu0
  %v664 = vadd.f32 0.0, %v663
  %v665 = vpop.f32.mrf.mxu0
  %666 = vmatprep.mubr.bf16.mxu0 0
  %667 = vmatmul.mubr.bf16.gmra.mxu0 %v414
  %v668 = vpop.f32.mrf.mxu0
  %v669 = vadd.f32 0.0, %v668
  %v670 = vpop.f32.mrf.mxu0
  %v671 = vpop.f32.mrf.mxu0
  %v672 = vadd.f32 0.0, %v671
  %v673 = vpop.f32.mrf.mxu0
  %674 = vmatprep.mubr.bf16.mxu0 0
  %675 = vmatmul.mubr.bf16.gmra.mxu0 %v417
  %v676 = vpop.f32.mrf.mxu0
  %v677 = vadd.f32 0.0, %v676
  %v678 = vpop.f32.mrf.mxu0
  %v679 = vpop.f32.mrf.mxu0
  %v680 = vadd.f32 0.0, %v679
  %v681 = vpop.f32.mrf.mxu0
  %682 = vmatprep.mubr.bf16.mxu0 0
  %683 = vmatmul.mubr.bf16.gmra.mxu0 %v420
  %v684 = vpop.f32.mrf.mxu0
  %v685 = vadd.f32 0.0, %v684
  %v686 = vpop.f32.mrf.mxu0
  %v687 = vpop.f32.mrf.mxu0
  %v688 = vadd.f32 0.0, %v687
  %v689 = vpop.f32.mrf.mxu0
  %690 = vmatprep.mubr.bf16.mxu0 0
  %691 = vmatmul.mubr.bf16.gmra.mxu0 %v423
  %v692 = vpop.f32.mrf.mxu0
  %v693 = vadd.f32 0.0, %v692
  %v694 = vpop.f32.mrf.mxu0
  %v695 = vpop.f32.mrf.mxu0
  %v696 = vadd.f32 0.0, %v695
  %v697 = vpop.f32.mrf.mxu0
  %698 = vmatprep.mubr.bf16.mxu0 0
  %699 = vmatmul.mubr.bf16.gmra.mxu0 %v426
  %v700 = vpop.f32.mrf.mxu0
  %v701 = vadd.f32 0.0, %v700
  %v702 = vpop.f32.mrf.mxu0
  %v703 = vpop.f32.mrf.mxu0
  %v704 = vadd.f32 0.0, %v703
  %v705 = vpop.f32.mrf.mxu0
  %706 = vmatprep.mubr.bf16.mxu0 0
  %707 = vmatmul.mubr.bf16.gmra.mxu0 %v429
  %v708 = vpop.f32.mrf.mxu0
  %v709 = vadd.f32 0.0, %v708
  %v710 = vpop.f32.mrf.mxu0
  %v711 = vpop.f32.mrf.mxu0
  %v712 = vadd.f32 0.0, %v711
  %v713 = vpop.f32.mrf.mxu0
  %714 = vmatprep.mubr.bf16.mxu0 0
  %715 = vmatmul.mubr.bf16.gmra.mxu0 %v432
  %v716 = vpop.f32.mrf.mxu0
  %v717 = vadd.f32 0.0, %v716
  %v718 = vpop.f32.mrf.mxu0
  %v719 = vpop.f32.mrf.mxu0
  %v720 = vadd.f32 0.0, %v719
  %v721 = vpop.f32.mrf.mxu0
  %722 = vdwg.mxu0
  %v723 = vld [vmem:[%s5] sm:$0x1]
  %v725 = vlaneseq
  %v726 = vshrl.u32 %v725, 7
  %v727 = vsub.s32 0, %v726
  %v728 = vrot.slane %v723, %v727
  %v730 = vmul.f32 %v469, %v728
  %v731 = vmul.f32 %v472, %v728
  %v732 = vmul.f32 %v477, %v728
  %v733 = vmul.f32 %v480, %v728
  %v734 = vmul.f32 %v485, %v728
  %v735 = vmul.f32 %v488, %v728
  %v736 = vmul.f32 %v493, %v728
  %v737 = vmul.f32 %v496, %v728
  %v738 = vmul.f32 %v501, %v728
  %v739 = vmul.f32 %v504, %v728
  %v740 = vmul.f32 %v509, %v728
  %v741 = vmul.f32 %v512, %v728
  %v742 = vmul.f32 %v517, %v728
  %v743 = vmul.f32 %v520, %v728
  %v744 = vmul.f32 %v525, %v728
  %v745 = vmul.f32 %v528, %v728
  %v746 = vmul.f32 %v533, %v728
  %v747 = vmul.f32 %v536, %v728
  %v748 = vmul.f32 %v541, %v728
  %v749 = vmul.f32 %v544, %v728
  %v750 = vmul.f32 %v549, %v728
  %v751 = vmul.f32 %v552, %v728
  %v752 = vmul.f32 %v557, %v728
  %v753 = vmul.f32 %v560, %v728
  %v754 = vmul.f32 %v565, %v728
  %v755 = vmul.f32 %v568, %v728
  %v756 = vmul.f32 %v573, %v728
  %v757 = vmul.f32 %v576, %v728
  %v758 = vmul.f32 %v581, %v728
  %v759 = vmul.f32 %v584, %v728
  %v760 = vmul.f32 %v589, %v728
  %v761 = vmul.f32 %v592, %v728
  %v762 = vmul.f32 %v597, %v728
  %v763 = vmul.f32 %v600, %v728
  %v764 = vmul.f32 %v605, %v728
  %v765 = vmul.f32 %v608, %v728
  %v766 = vmul.f32 %v613, %v728
  %v767 = vmul.f32 %v616, %v728
  %v768 = vmul.f32 %v621, %v728
  %v769 = vmul.f32 %v624, %v728
  %v770 = vmul.f32 %v629, %v728
  %v771 = vmul.f32 %v632, %v728
  %v772 = vmul.f32 %v637, %v728
  %v773 = vmul.f32 %v640, %v728
  %v774 = vmul.f32 %v645, %v728
  %v775 = vmul.f32 %v648, %v728
  %v776 = vmul.f32 %v653, %v728
  %v777 = vmul.f32 %v656, %v728
  %v778 = vmul.f32 %v661, %v728
  %v779 = vmul.f32 %v664, %v728
  %v780 = vmul.f32 %v669, %v728
  %v781 = vmul.f32 %v672, %v728
  %v782 = vmul.f32 %v677, %v728
  %v783 = vmul.f32 %v680, %v728
  %v784 = vmul.f32 %v685, %v728
  %v785 = vmul.f32 %v688, %v728
  %v786 = vmul.f32 %v693, %v728
  %v787 = vmul.f32 %v696, %v728
  %v788 = vmul.f32 %v701, %v728
  %v789 = vmul.f32 %v704, %v728
  %v790 = vmul.f32 %v709, %v728
  %v791 = vmul.f32 %v712, %v728
  %v792 = vmul.f32 %v717, %v728
  %v793 = vmul.f32 %v720, %v728
  %v794 = vld [vmem:[%s6] sm:$0x1]
  %v796 = vlaneseq
  %v797 = vshrl.u32 %v796, 7
  %v798 = vsub.s32 0, %v797
  %v799 = vrot.slane %v794, %v798
  %v801 = vadd.f32 %v730, %v799
  %v802 = vadd.f32 %v731, %v799
  %v803 = vadd.f32 %v732, %v799
  %v804 = vadd.f32 %v733, %v799
  %v805 = vadd.f32 %v734, %v799
  %v806 = vadd.f32 %v735, %v799
  %v807 = vadd.f32 %v736, %v799
  %v808 = vadd.f32 %v737, %v799
  %v809 = vadd.f32 %v738, %v799
  %v810 = vadd.f32 %v739, %v799
  %v811 = vadd.f32 %v740, %v799
  %v812 = vadd.f32 %v741, %v799
  %v813 = vadd.f32 %v742, %v799
  %v814 = vadd.f32 %v743, %v799
  %v815 = vadd.f32 %v744, %v799
  %v816 = vadd.f32 %v745, %v799
  %v817 = vadd.f32 %v746, %v799
  %v818 = vadd.f32 %v747, %v799
  %v819 = vadd.f32 %v748, %v799
  %v820 = vadd.f32 %v749, %v799
  %v821 = vadd.f32 %v750, %v799
  %v822 = vadd.f32 %v751, %v799
  %v823 = vadd.f32 %v752, %v799
  %v824 = vadd.f32 %v753, %v799
  %v825 = vadd.f32 %v754, %v799
  %v826 = vadd.f32 %v755, %v799
  %v827 = vadd.f32 %v756, %v799
  %v828 = vadd.f32 %v757, %v799
  %v829 = vadd.f32 %v758, %v799
  %v830 = vadd.f32 %v759, %v799
  %v831 = vadd.f32 %v760, %v799
  %v832 = vadd.f32 %v761, %v799
  %v833 = vadd.f32 %v762, %v799
  %v834 = vadd.f32 %v763, %v799
  %v835 = vadd.f32 %v764, %v799
  %v836 = vadd.f32 %v765, %v799
  %v837 = vadd.f32 %v766, %v799
  %v838 = vadd.f32 %v767, %v799
  %v839 = vadd.f32 %v768, %v799
  %v840 = vadd.f32 %v769, %v799
  %v841 = vadd.f32 %v770, %v799
  %v842 = vadd.f32 %v771, %v799
  %v843 = vadd.f32 %v772, %v799
  %v844 = vadd.f32 %v773, %v799
  %v845 = vadd.f32 %v774, %v799
  %v846 = vadd.f32 %v775, %v799
  %v847 = vadd.f32 %v776, %v799
  %v848 = vadd.f32 %v777, %v799
  %v849 = vadd.f32 %v778, %v799
  %v850 = vadd.f32 %v779, %v799
  %v851 = vadd.f32 %v780, %v799
  %v852 = vadd.f32 %v781, %v799
  %v853 = vadd.f32 %v782, %v799
  %v854 = vadd.f32 %v783, %v799
  %v855 = vadd.f32 %v784, %v799
  %v856 = vadd.f32 %v785, %v799
  %v857 = vadd.f32 %v786, %v799
  %v858 = vadd.f32 %v787, %v799
  %v859 = vadd.f32 %v788, %v799
  %v860 = vadd.f32 %v789, %v799
  %v861 = vadd.f32 %v790, %v799
  %v862 = vadd.f32 %v791, %v799
  %v863 = vadd.f32 %v792, %v799
  %v864 = vadd.f32 %v793, %v799
  %v865 = vmax.f32 %v801, 0.0
  %v866 = vmax.f32 %v802, 0.0
  %v867 = vmax.f32 %v803, 0.0
  %v868 = vmax.f32 %v804, 0.0
  %v869 = vmax.f32 %v805, 0.0
  %v870 = vmax.f32 %v806, 0.0
  %v871 = vmax.f32 %v807, 0.0
  %v872 = vmax.f32 %v808, 0.0
  %v873 = vmax.f32 %v809, 0.0
  %v874 = vmax.f32 %v810, 0.0
  %v875 = vmax.f32 %v811, 0.0
  %v876 = vmax.f32 %v812, 0.0
  %v877 = vmax.f32 %v813, 0.0
  %v878 = vmax.f32 %v814, 0.0
  %v879 = vmax.f32 %v815, 0.0
  %v880 = vmax.f32 %v816, 0.0
  %v881 = vmax.f32 %v817, 0.0
  %v882 = vmax.f32 %v818, 0.0
  %v883 = vmax.f32 %v819, 0.0
  %v884 = vmax.f32 %v820, 0.0
  %v885 = vmax.f32 %v821, 0.0
  %v886 = vmax.f32 %v822, 0.0
  %v887 = vmax.f32 %v823, 0.0
  %v888 = vmax.f32 %v824, 0.0
  %v889 = vmax.f32 %v825, 0.0
  %v890 = vmax.f32 %v826, 0.0
  %v891 = vmax.f32 %v827, 0.0
  %v892 = vmax.f32 %v828, 0.0
  %v893 = vmax.f32 %v829, 0.0
  %v894 = vmax.f32 %v830, 0.0
  %v895 = vmax.f32 %v831, 0.0
  %v896 = vmax.f32 %v832, 0.0
  %v897 = vmax.f32 %v833, 0.0
  %v898 = vmax.f32 %v834, 0.0
  %v899 = vmax.f32 %v835, 0.0
  %v900 = vmax.f32 %v836, 0.0
  %v901 = vmax.f32 %v837, 0.0
  %v902 = vmax.f32 %v838, 0.0
  %v903 = vmax.f32 %v839, 0.0
  %v904 = vmax.f32 %v840, 0.0
  %v905 = vmax.f32 %v841, 0.0
  %v906 = vmax.f32 %v842, 0.0
  %v907 = vmax.f32 %v843, 0.0
  %v908 = vmax.f32 %v844, 0.0
  %v909 = vmax.f32 %v845, 0.0
  %v910 = vmax.f32 %v846, 0.0
  %v911 = vmax.f32 %v847, 0.0
  %v912 = vmax.f32 %v848, 0.0
  %v913 = vmax.f32 %v849, 0.0
  %v914 = vmax.f32 %v850, 0.0
  %v915 = vmax.f32 %v851, 0.0
  %v916 = vmax.f32 %v852, 0.0
  %v917 = vmax.f32 %v853, 0.0
  %v918 = vmax.f32 %v854, 0.0
  %v919 = vmax.f32 %v855, 0.0
  %v920 = vmax.f32 %v856, 0.0
  %v921 = vmax.f32 %v857, 0.0
  %v922 = vmax.f32 %v858, 0.0
  %v923 = vmax.f32 %v859, 0.0
  %v924 = vmax.f32 %v860, 0.0
  %v925 = vmax.f32 %v861, 0.0
  %v926 = vmax.f32 %v862, 0.0
  %v927 = vmax.f32 %v863, 0.0
  %v928 = vmax.f32 %v864, 0.0
  %v929 = vpack.c.bf16 %v866, %v865
  %v930 = vpack.c.bf16 %v868, %v867
  %v931 = vpack.c.bf16 %v870, %v869
  %v932 = vpack.c.bf16 %v872, %v871
  %v933 = vpack.c.bf16 %v874, %v873
  %v934 = vpack.c.bf16 %v876, %v875
  %v935 = vpack.c.bf16 %v878, %v877
  %v936 = vpack.c.bf16 %v880, %v879
  %v937 = vpack.c.bf16 %v882, %v881
  %v938 = vpack.c.bf16 %v884, %v883
  %v939 = vpack.c.bf16 %v886, %v885
  %v940 = vpack.c.bf16 %v888, %v887
  %v941 = vpack.c.bf16 %v890, %v889
  %v942 = vpack.c.bf16 %v892, %v891
  %v943 = vpack.c.bf16 %v894, %v893
  %v944 = vpack.c.bf16 %v896, %v895
  %v945 = vpack.c.bf16 %v898, %v897
  %v946 = vpack.c.bf16 %v900, %v899
  %v947 = vpack.c.bf16 %v902, %v901
  %v948 = vpack.c.bf16 %v904, %v903
  %v949 = vpack.c.bf16 %v906, %v905
  %v950 = vpack.c.bf16 %v908, %v907
  %v951 = vpack.c.bf16 %v910, %v909
  %v952 = vpack.c.bf16 %v912, %v911
  %v953 = vpack.c.bf16 %v914, %v913
  %v954 = vpack.c.bf16 %v916, %v915
  %v955 = vpack.c.bf16 %v918, %v917
  %v956 = vpack.c.bf16 %v920, %v919
  %v957 = vpack.c.bf16 %v922, %v921
  %v958 = vpack.c.bf16 %v924, %v923
  %v959 = vpack.c.bf16 %v926, %v925
  %v960 = vpack.c.bf16 %v928, %v927
  %v961 = vld [vmem:[%s2] sm:$0xf]
  %v962 = vld [vmem:[%s2 + $0x4] sm:$0xf]
  %v963 = vld [vmem:[%s2 + $0x8] sm:$0xf]
  %v964 = vld [vmem:[%s2 + $0xc] sm:$0xf]
  %v965 = vld [vmem:[%s2 + $0x10] sm:$0xf]
  %v966 = vld [vmem:[%s2 + $0x14] sm:$0xf]
  %v973 = vunpack.c.l.b16 %v961
  %v974 = vunpack.c.l.b16 %v962
  %v975 = vunpack.c.l.b16 %v963
  %v976 = vunpack.c.l.b16 %v964
  %v977 = vunpack.c.l.b16 %v965
  %v978 = vunpack.c.l.b16 %v966
  %v979 = vpack.c.b16 %v974, %v973
  %v980 = vpack.c.b16 %v976, %v975
  %v981 = vpack.c.b16 %v978, %v977
  %vm985 = vcmask 392192
  %v987 = vsel %vm985, %v929, 0
  %v990 = vsel %vm985, %v930, 0
  %v993 = vsel %vm985, %v931, 0
  %v996 = vsel %vm985, %v932, 0
  %v999 = vsel %vm985, %v933, 0
  %v1002 = vsel %vm985, %v934, 0
  %v1005 = vsel %vm985, %v935, 0
  %v1008 = vsel %vm985, %v936, 0
  %v1011 = vsel %vm985, %v937, 0
  %v1014 = vsel %vm985, %v938, 0
  %v1017 = vsel %vm985, %v939, 0
  %v1020 = vsel %vm985, %v940, 0
  %v1023 = vsel %vm985, %v941, 0
  %v1026 = vsel %vm985, %v942, 0
  %v1029 = vsel %vm985, %v943, 0
  %v1032 = vsel %vm985, %v944, 0
  %v1035 = vsel %vm985, %v945, 0
  %v1038 = vsel %vm985, %v946, 0
  %v1041 = vsel %vm985, %v947, 0
  %v1044 = vsel %vm985, %v948, 0
  %v1047 = vsel %vm985, %v949, 0
  %v1050 = vsel %vm985, %v950, 0
  %v1053 = vsel %vm985, %v951, 0
  %v1056 = vsel %vm985, %v952, 0
  %v1059 = vsel %vm985, %v953, 0
  %v1062 = vsel %vm985, %v954, 0
  %v1065 = vsel %vm985, %v955, 0
  %v1068 = vsel %vm985, %v956, 0
  %v1071 = vsel %vm985, %v957, 0
  %v1074 = vsel %vm985, %v958, 0
  %v1077 = vsel %vm985, %v959, 0
  %v1080 = vsel %vm985, %v960, 0
  %1082 = vmatprep.subr.bf16.mxu0 0
  %1083 = vmatpush1.bf16.msra.mxu0 0
  %1084 = vmatprep.subr.bf16.mxu0 0
  %1085 = vmatpush1.bf16.msra.mxu0 0
  %1086 = vmatprep.subr.bf16.mxu0 0
  %1087 = vmatpush1.bf16.msra.mxu0 0
  %1088 = vmatprep.subr.bf16.mxu0 0
  %1089 = vmatpush1.bf16.msra.mxu0 0
  %1090 = vmatprep.subr.bf16.mxu0 0
  %1091 = vmatpush1.bf16.msra.mxu0 0
  %1092 = vmatprep.subr.bf16.mxu0 0
  %1093 = vmatpush1.bf16.msra.mxu0 %v981
  %1094 = vmatprep.subr.bf16.mxu0 0
  %1095 = vmatpush1.bf16.msra.mxu0 %v980
  %1096 = vmatprep.subr.bf16.mxu0 0
  %1097 = vmatpush1.bf16.msra.mxu0 %v979
  %1098 = vmatprep.subr.bf16.mxu0 0
  %1099 = vmatpush2.bf16.msra.mxu0 0
  %1100 = vmatprep.subr.bf16.mxu0 0
  %1101 = vmatpush2.bf16.msra.mxu0 0
  %1102 = vmatprep.subr.bf16.mxu0 0
  %1103 = vmatpush2.bf16.msra.mxu0 0
  %1104 = vmatprep.subr.bf16.mxu0 0
  %1105 = vmatpush2.bf16.msra.mxu0 0
  %1106 = vmatprep.subr.bf16.mxu0 0
  %1107 = vmatpush2.bf16.msra.mxu0 0
  %1108 = vmatprep.subr.bf16.mxu0 0
  %1109 = vmatpush2.bf16.msra.mxu0 0
  %1110 = vmatprep.subr.bf16.mxu0 0
  %1111 = vmatpush2.bf16.msra.mxu0 0
  %1112 = vmatprep.subr.bf16.mxu0 0
  %1113 = vmatpush2.bf16.msra.mxu0 0
  %1114 = vmatprep.mubr.bf16.mxu0 0
  %1115 = vmatmul.mubr.bf16.gmra.mxu0 %v987
  %v1116 = vpop.f32.mrf.mxu0
  %v1117 = vadd.f32 0.0, %v1116
  %v1118 = vpop.f32.mrf.mxu0
  %v1119 = vpop.f32.mrf.mxu0
  %v1120 = vadd.f32 0.0, %v1119
  %v1121 = vpop.f32.mrf.mxu0
  %1122 = vmatprep.mubr.bf16.mxu0 0
  %1123 = vmatmul.mubr.bf16.gmra.mxu0 %v990
  %v1124 = vpop.f32.mrf.mxu0
  %v1125 = vadd.f32 0.0, %v1124
  %v1126 = vpop.f32.mrf.mxu0
  %v1127 = vpop.f32.mrf.mxu0
  %v1128 = vadd.f32 0.0, %v1127
  %v1129 = vpop.f32.mrf.mxu0
  %1130 = vmatprep.mubr.bf16.mxu0 0
  %1131 = vmatmul.mubr.bf16.gmra.mxu0 %v993
  %v1132 = vpop.f32.mrf.mxu0
  %v1133 = vadd.f32 0.0, %v1132
  %v1134 = vpop.f32.mrf.mxu0
  %v1135 = vpop.f32.mrf.mxu0
  %v1136 = vadd.f32 0.0, %v1135
  %v1137 = vpop.f32.mrf.mxu0
  %1138 = vmatprep.mubr.bf16.mxu0 0
  %1139 = vmatmul.mubr.bf16.gmra.mxu0 %v996
  %v1140 = vpop.f32.mrf.mxu0
  %v1141 = vadd.f32 0.0, %v1140
  %v1142 = vpop.f32.mrf.mxu0
  %v1143 = vpop.f32.mrf.mxu0
  %v1144 = vadd.f32 0.0, %v1143
  %v1145 = vpop.f32.mrf.mxu0
  %1146 = vmatprep.mubr.bf16.mxu0 0
  %1147 = vmatmul.mubr.bf16.gmra.mxu0 %v999
  %v1148 = vpop.f32.mrf.mxu0
  %v1149 = vadd.f32 0.0, %v1148
  %v1150 = vpop.f32.mrf.mxu0
  %v1151 = vpop.f32.mrf.mxu0
  %v1152 = vadd.f32 0.0, %v1151
  %v1153 = vpop.f32.mrf.mxu0
  %1154 = vmatprep.mubr.bf16.mxu0 0
  %1155 = vmatmul.mubr.bf16.gmra.mxu0 %v1002
  %v1156 = vpop.f32.mrf.mxu0
  %v1157 = vadd.f32 0.0, %v1156
  %v1158 = vpop.f32.mrf.mxu0
  %v1159 = vpop.f32.mrf.mxu0
  %v1160 = vadd.f32 0.0, %v1159
  %v1161 = vpop.f32.mrf.mxu0
  %1162 = vmatprep.mubr.bf16.mxu0 0
  %1163 = vmatmul.mubr.bf16.gmra.mxu0 %v1005
  %v1164 = vpop.f32.mrf.mxu0
  %v1165 = vadd.f32 0.0, %v1164
  %v1166 = vpop.f32.mrf.mxu0
  %v1167 = vpop.f32.mrf.mxu0
  %v1168 = vadd.f32 0.0, %v1167
  %v1169 = vpop.f32.mrf.mxu0
  %1170 = vmatprep.mubr.bf16.mxu0 0
  %1171 = vmatmul.mubr.bf16.gmra.mxu0 %v1008
  %v1172 = vpop.f32.mrf.mxu0
  %v1173 = vadd.f32 0.0, %v1172
  %v1174 = vpop.f32.mrf.mxu0
  %v1175 = vpop.f32.mrf.mxu0
  %v1176 = vadd.f32 0.0, %v1175
  %v1177 = vpop.f32.mrf.mxu0
  %1178 = vmatprep.mubr.bf16.mxu0 0
  %1179 = vmatmul.mubr.bf16.gmra.mxu0 %v1011
  %v1180 = vpop.f32.mrf.mxu0
  %v1181 = vadd.f32 0.0, %v1180
  %v1182 = vpop.f32.mrf.mxu0
  %v1183 = vpop.f32.mrf.mxu0
  %v1184 = vadd.f32 0.0, %v1183
  %v1185 = vpop.f32.mrf.mxu0
  %1186 = vmatprep.mubr.bf16.mxu0 0
  %1187 = vmatmul.mubr.bf16.gmra.mxu0 %v1014
  %v1188 = vpop.f32.mrf.mxu0
  %v1189 = vadd.f32 0.0, %v1188
  %v1190 = vpop.f32.mrf.mxu0
  %v1191 = vpop.f32.mrf.mxu0
  %v1192 = vadd.f32 0.0, %v1191
  %v1193 = vpop.f32.mrf.mxu0
  %1194 = vmatprep.mubr.bf16.mxu0 0
  %1195 = vmatmul.mubr.bf16.gmra.mxu0 %v1017
  %v1196 = vpop.f32.mrf.mxu0
  %v1197 = vadd.f32 0.0, %v1196
  %v1198 = vpop.f32.mrf.mxu0
  %v1199 = vpop.f32.mrf.mxu0
  %v1200 = vadd.f32 0.0, %v1199
  %v1201 = vpop.f32.mrf.mxu0
  %1202 = vmatprep.mubr.bf16.mxu0 0
  %1203 = vmatmul.mubr.bf16.gmra.mxu0 %v1020
  %v1204 = vpop.f32.mrf.mxu0
  %v1205 = vadd.f32 0.0, %v1204
  %v1206 = vpop.f32.mrf.mxu0
  %v1207 = vpop.f32.mrf.mxu0
  %v1208 = vadd.f32 0.0, %v1207
  %v1209 = vpop.f32.mrf.mxu0
  %1210 = vmatprep.mubr.bf16.mxu0 0
  %1211 = vmatmul.mubr.bf16.gmra.mxu0 %v1023
  %v1212 = vpop.f32.mrf.mxu0
  %v1213 = vadd.f32 0.0, %v1212
  %v1214 = vpop.f32.mrf.mxu0
  %v1215 = vpop.f32.mrf.mxu0
  %v1216 = vadd.f32 0.0, %v1215
  %v1217 = vpop.f32.mrf.mxu0
  %1218 = vmatprep.mubr.bf16.mxu0 0
  %1219 = vmatmul.mubr.bf16.gmra.mxu0 %v1026
  %v1220 = vpop.f32.mrf.mxu0
  %v1221 = vadd.f32 0.0, %v1220
  %v1222 = vpop.f32.mrf.mxu0
  %v1223 = vpop.f32.mrf.mxu0
  %v1224 = vadd.f32 0.0, %v1223
  %v1225 = vpop.f32.mrf.mxu0
  %1226 = vmatprep.mubr.bf16.mxu0 0
  %1227 = vmatmul.mubr.bf16.gmra.mxu0 %v1029
  %v1228 = vpop.f32.mrf.mxu0
  %v1229 = vadd.f32 0.0, %v1228
  %v1230 = vpop.f32.mrf.mxu0
  %v1231 = vpop.f32.mrf.mxu0
  %v1232 = vadd.f32 0.0, %v1231
  %v1233 = vpop.f32.mrf.mxu0
  %1234 = vmatprep.mubr.bf16.mxu0 0
  %1235 = vmatmul.mubr.bf16.gmra.mxu0 %v1032
  %v1236 = vpop.f32.mrf.mxu0
  %v1237 = vadd.f32 0.0, %v1236
  %v1238 = vpop.f32.mrf.mxu0
  %v1239 = vpop.f32.mrf.mxu0
  %v1240 = vadd.f32 0.0, %v1239
  %v1241 = vpop.f32.mrf.mxu0
  %1242 = vmatprep.mubr.bf16.mxu0 0
  %1243 = vmatmul.mubr.bf16.gmra.mxu0 %v1035
  %v1244 = vpop.f32.mrf.mxu0
  %v1245 = vadd.f32 0.0, %v1244
  %v1246 = vpop.f32.mrf.mxu0
  %v1247 = vpop.f32.mrf.mxu0
  %v1248 = vadd.f32 0.0, %v1247
  %v1249 = vpop.f32.mrf.mxu0
  %1250 = vmatprep.mubr.bf16.mxu0 0
  %1251 = vmatmul.mubr.bf16.gmra.mxu0 %v1038
  %v1252 = vpop.f32.mrf.mxu0
  %v1253 = vadd.f32 0.0, %v1252
  %v1254 = vpop.f32.mrf.mxu0
  %v1255 = vpop.f32.mrf.mxu0
  %v1256 = vadd.f32 0.0, %v1255
  %v1257 = vpop.f32.mrf.mxu0
  %1258 = vmatprep.mubr.bf16.mxu0 0
  %1259 = vmatmul.mubr.bf16.gmra.mxu0 %v1041
  %v1260 = vpop.f32.mrf.mxu0
  %v1261 = vadd.f32 0.0, %v1260
  %v1262 = vpop.f32.mrf.mxu0
  %v1263 = vpop.f32.mrf.mxu0
  %v1264 = vadd.f32 0.0, %v1263
  %v1265 = vpop.f32.mrf.mxu0
  %1266 = vmatprep.mubr.bf16.mxu0 0
  %1267 = vmatmul.mubr.bf16.gmra.mxu0 %v1044
  %v1268 = vpop.f32.mrf.mxu0
  %v1269 = vadd.f32 0.0, %v1268
  %v1270 = vpop.f32.mrf.mxu0
  %v1271 = vpop.f32.mrf.mxu0
  %v1272 = vadd.f32 0.0, %v1271
  %v1273 = vpop.f32.mrf.mxu0
  %1274 = vmatprep.mubr.bf16.mxu0 0
  %1275 = vmatmul.mubr.bf16.gmra.mxu0 %v1047
  %v1276 = vpop.f32.mrf.mxu0
  %v1277 = vadd.f32 0.0, %v1276
  %v1278 = vpop.f32.mrf.mxu0
  %v1279 = vpop.f32.mrf.mxu0
  %v1280 = vadd.f32 0.0, %v1279
  %v1281 = vpop.f32.mrf.mxu0
  %1282 = vmatprep.mubr.bf16.mxu0 0
  %1283 = vmatmul.mubr.bf16.gmra.mxu0 %v1050
  %v1284 = vpop.f32.mrf.mxu0
  %v1285 = vadd.f32 0.0, %v1284
  %v1286 = vpop.f32.mrf.mxu0
  %v1287 = vpop.f32.mrf.mxu0
  %v1288 = vadd.f32 0.0, %v1287
  %v1289 = vpop.f32.mrf.mxu0
  %1290 = vmatprep.mubr.bf16.mxu0 0
  %1291 = vmatmul.mubr.bf16.gmra.mxu0 %v1053
  %v1292 = vpop.f32.mrf.mxu0
  %v1293 = vadd.f32 0.0, %v1292
  %v1294 = vpop.f32.mrf.mxu0
  %v1295 = vpop.f32.mrf.mxu0
  %v1296 = vadd.f32 0.0, %v1295
  %v1297 = vpop.f32.mrf.mxu0
  %1298 = vmatprep.mubr.bf16.mxu0 0
  %1299 = vmatmul.mubr.bf16.gmra.mxu0 %v1056
  %v1300 = vpop.f32.mrf.mxu0
  %v1301 = vadd.f32 0.0, %v1300
  %v1302 = vpop.f32.mrf.mxu0
  %v1303 = vpop.f32.mrf.mxu0
  %v1304 = vadd.f32 0.0, %v1303
  %v1305 = vpop.f32.mrf.mxu0
  %1306 = vmatprep.mubr.bf16.mxu0 0
  %1307 = vmatmul.mubr.bf16.gmra.mxu0 %v1059
  %v1308 = vpop.f32.mrf.mxu0
  %v1309 = vadd.f32 0.0, %v1308
  %v1310 = vpop.f32.mrf.mxu0
  %v1311 = vpop.f32.mrf.mxu0
  %v1312 = vadd.f32 0.0, %v1311
  %v1313 = vpop.f32.mrf.mxu0
  %1314 = vmatprep.mubr.bf16.mxu0 0
  %1315 = vmatmul.mubr.bf16.gmra.mxu0 %v1062
  %v1316 = vpop.f32.mrf.mxu0
  %v1317 = vadd.f32 0.0, %v1316
  %v1318 = vpop.f32.mrf.mxu0
  %v1319 = vpop.f32.mrf.mxu0
  %v1320 = vadd.f32 0.0, %v1319
  %v1321 = vpop.f32.mrf.mxu0
  %1322 = vmatprep.mubr.bf16.mxu0 0
  %1323 = vmatmul.mubr.bf16.gmra.mxu0 %v1065
  %v1324 = vpop.f32.mrf.mxu0
  %v1325 = vadd.f32 0.0, %v1324
  %v1326 = vpop.f32.mrf.mxu0
  %v1327 = vpop.f32.mrf.mxu0
  %v1328 = vadd.f32 0.0, %v1327
  %v1329 = vpop.f32.mrf.mxu0
  %1330 = vmatprep.mubr.bf16.mxu0 0
  %1331 = vmatmul.mubr.bf16.gmra.mxu0 %v1068
  %v1332 = vpop.f32.mrf.mxu0
  %v1333 = vadd.f32 0.0, %v1332
  %v1334 = vpop.f32.mrf.mxu0
  %v1335 = vpop.f32.mrf.mxu0
  %v1336 = vadd.f32 0.0, %v1335
  %v1337 = vpop.f32.mrf.mxu0
  %1338 = vmatprep.mubr.bf16.mxu0 0
  %1339 = vmatmul.mubr.bf16.gmra.mxu0 %v1071
  %v1340 = vpop.f32.mrf.mxu0
  %v1341 = vadd.f32 0.0, %v1340
  %v1342 = vpop.f32.mrf.mxu0
  %v1343 = vpop.f32.mrf.mxu0
  %v1344 = vadd.f32 0.0, %v1343
  %v1345 = vpop.f32.mrf.mxu0
  %1346 = vmatprep.mubr.bf16.mxu0 0
  %1347 = vmatmul.mubr.bf16.gmra.mxu0 %v1074
  %v1348 = vpop.f32.mrf.mxu0
  %v1349 = vadd.f32 0.0, %v1348
  %v1350 = vpop.f32.mrf.mxu0
  %v1351 = vpop.f32.mrf.mxu0
  %v1352 = vadd.f32 0.0, %v1351
  %v1353 = vpop.f32.mrf.mxu0
  %1354 = vmatprep.mubr.bf16.mxu0 0
  %1355 = vmatmul.mubr.bf16.gmra.mxu0 %v1077
  %v1356 = vpop.f32.mrf.mxu0
  %v1357 = vadd.f32 0.0, %v1356
  %v1358 = vpop.f32.mrf.mxu0
  %v1359 = vpop.f32.mrf.mxu0
  %v1360 = vadd.f32 0.0, %v1359
  %v1361 = vpop.f32.mrf.mxu0
  %1362 = vmatprep.mubr.bf16.mxu0 0
  %1363 = vmatmul.mubr.bf16.gmra.mxu0 %v1080
  %v1364 = vpop.f32.mrf.mxu0
  %v1365 = vadd.f32 0.0, %v1364
  %v1366 = vpop.f32.mrf.mxu0
  %v1367 = vpop.f32.mrf.mxu0
  %v1368 = vadd.f32 0.0, %v1367
  %v1369 = vpop.f32.mrf.mxu0
  %1370 = vdwg.mxu0
  %vm1431 = vcmask 1040384
  %v1432 = vrot.slane %v1117, 7
  %v1433 = vrot.slane %v1120, 7
  %v1434 = vsel %vm1431, %v1432, %v1433
  %v1435 = vrot.slane %v1125, 7
  %v1436 = vrot.slane %v1128, 7
  %v1437 = vsel %vm1431, %v1435, %v1436
  %v1438 = vrot.slane %v1133, 7
  %v1439 = vrot.slane %v1136, 7
  %v1440 = vsel %vm1431, %v1438, %v1439
  %v1441 = vrot.slane %v1141, 7
  %v1442 = vrot.slane %v1144, 7
  %v1443 = vsel %vm1431, %v1441, %v1442
  %v1444 = vrot.slane %v1149, 7
  %v1445 = vrot.slane %v1152, 7
  %v1446 = vsel %vm1431, %v1444, %v1445
  %v1447 = vrot.slane %v1157, 7
  %v1448 = vrot.slane %v1160, 7
  %v1449 = vsel %vm1431, %v1447, %v1448
  %v1450 = vrot.slane %v1165, 7
  %v1451 = vrot.slane %v1168, 7
  %v1452 = vsel %vm1431, %v1450, %v1451
  %v1453 = vrot.slane %v1173, 7
  %v1454 = vrot.slane %v1176, 7
  %v1455 = vsel %vm1431, %v1453, %v1454
  %v1456 = vrot.slane %v1181, 7
  %v1457 = vrot.slane %v1184, 7
  %v1458 = vsel %vm1431, %v1456, %v1457
  %v1459 = vrot.slane %v1189, 7
  %v1460 = vrot.slane %v1192, 7
  %v1461 = vsel %vm1431, %v1459, %v1460
  %v1462 = vrot.slane %v1197, 7
  %v1463 = vrot.slane %v1200, 7
  %v1464 = vsel %vm1431, %v1462, %v1463
  %v1465 = vrot.slane %v1205, 7
  %v1466 = vrot.slane %v1208, 7
  %v1467 = vsel %vm1431, %v1465, %v1466
  %v1468 = vrot.slane %v1213, 7
  %v1469 = vrot.slane %v1216, 7
  %v1470 = vsel %vm1431, %v1468, %v1469
  %v1471 = vrot.slane %v1221, 7
  %v1472 = vrot.slane %v1224, 7
  %v1473 = vsel %vm1431, %v1471, %v1472
  %v1474 = vrot.slane %v1229, 7
  %v1475 = vrot.slane %v1232, 7
  %v1476 = vsel %vm1431, %v1474, %v1475
  %v1477 = vrot.slane %v1245, 7
  %v1478 = vrot.slane %v1248, 7
  %v1479 = vsel %vm1431, %v1477, %v1478
  %v1480 = vrot.slane %v1253, 7
  %v1481 = vrot.slane %v1256, 7
  %v1482 = vsel %vm1431, %v1480, %v1481
  %v1483 = vrot.slane %v1261, 7
  %v1484 = vrot.slane %v1264, 7
  %v1485 = vsel %vm1431, %v1483, %v1484
  %v1486 = vrot.slane %v1269, 7
  %v1487 = vrot.slane %v1272, 7
  %v1488 = vsel %vm1431, %v1486, %v1487
  %v1489 = vrot.slane %v1277, 7
  %v1490 = vrot.slane %v1280, 7
  %v1491 = vsel %vm1431, %v1489, %v1490
  %v1492 = vrot.slane %v1285, 7
  %v1493 = vrot.slane %v1288, 7
  %v1494 = vsel %vm1431, %v1492, %v1493
  %v1495 = vrot.slane %v1293, 7
  %v1496 = vrot.slane %v1296, 7
  %v1497 = vsel %vm1431, %v1495, %v1496
  %v1498 = vrot.slane %v1301, 7
  %v1499 = vrot.slane %v1304, 7
  %v1500 = vsel %vm1431, %v1498, %v1499
  %v1501 = vrot.slane %v1309, 7
  %v1502 = vrot.slane %v1312, 7
  %v1503 = vsel %vm1431, %v1501, %v1502
  %v1504 = vrot.slane %v1317, 7
  %v1505 = vrot.slane %v1320, 7
  %v1506 = vsel %vm1431, %v1504, %v1505
  %v1507 = vrot.slane %v1325, 7
  %v1508 = vrot.slane %v1328, 7
  %v1509 = vsel %vm1431, %v1507, %v1508
  %v1510 = vrot.slane %v1333, 7
  %v1511 = vrot.slane %v1336, 7
  %v1512 = vsel %vm1431, %v1510, %v1511
  %v1513 = vrot.slane %v1341, 7
  %v1514 = vrot.slane %v1344, 7
  %v1515 = vsel %vm1431, %v1513, %v1514
  %v1516 = vrot.slane %v1349, 7
  %v1517 = vrot.slane %v1352, 7
  %v1518 = vsel %vm1431, %v1516, %v1517
  %v1519 = vrot.slane %v1357, 7
  %v1520 = vrot.slane %v1360, 7
  %v1521 = vsel %vm1431, %v1519, %v1520
  %v1582 = vsel %vm1431, 0.0, %v1432
  %v1583 = vsel %vm1431, 0.0, %v1435
  %v1584 = vsel %vm1431, 0.0, %v1438
  %v1585 = vsel %vm1431, 0.0, %v1441
  %v1586 = vsel %vm1431, 0.0, %v1444
  %v1587 = vsel %vm1431, 0.0, %v1447
  %v1588 = vsel %vm1431, 0.0, %v1450
  %v1589 = vsel %vm1431, 0.0, %v1453
  %v1590 = vsel %vm1431, 0.0, %v1456
  %v1591 = vsel %vm1431, 0.0, %v1459
  %v1592 = vsel %vm1431, 0.0, %v1462
  %v1593 = vsel %vm1431, 0.0, %v1465
  %v1594 = vsel %vm1431, 0.0, %v1468
  %v1595 = vsel %vm1431, 0.0, %v1471
  %v1596 = vsel %vm1431, 0.0, %v1474
  %v1597 = vsel %vm1431, 0.0, %v1477
  %v1598 = vsel %vm1431, 0.0, %v1480
  %v1599 = vsel %vm1431, 0.0, %v1483
  %v1600 = vsel %vm1431, 0.0, %v1486
  %v1601 = vsel %vm1431, 0.0, %v1489
  %v1602 = vsel %vm1431, 0.0, %v1492
  %v1603 = vsel %vm1431, 0.0, %v1495
  %v1604 = vsel %vm1431, 0.0, %v1498
  %v1605 = vsel %vm1431, 0.0, %v1501
  %v1606 = vsel %vm1431, 0.0, %v1504
  %v1607 = vsel %vm1431, 0.0, %v1507
  %v1608 = vsel %vm1431, 0.0, %v1510
  %v1609 = vsel %vm1431, 0.0, %v1513
  %v1610 = vsel %vm1431, 0.0, %v1516
  %v1611 = vsel %vm1431, 0.0, %v1519
  %1612 = vrot.lane.b32.xlu0 %v1117, 116
  %v1613 = vpop.permute.xlu0 %1612
  %1614 = vrot.lane.b32.xlu0 %v1120, 116
  %v1615 = vpop.permute.xlu0 %1614
  %1616 = vrot.lane.b32.xlu0 %v1125, 116
  %v1617 = vpop.permute.xlu0 %1616
  %1618 = vrot.lane.b32.xlu0 %v1128, 116
  %v1619 = vpop.permute.xlu0 %1618
  %1620 = vrot.lane.b32.xlu0 %v1133, 116
  %v1621 = vpop.permute.xlu0 %1620
  %1622 = vrot.lane.b32.xlu0 %v1136, 116
  %v1623 = vpop.permute.xlu0 %1622
  %1624 = vrot.lane.b32.xlu0 %v1141, 116
  %v1625 = vpop.permute.xlu0 %1624
  %1626 = vrot.lane.b32.xlu0 %v1144, 116
  %v1627 = vpop.permute.xlu0 %1626
  %1628 = vrot.lane.b32.xlu0 %v1149, 116
  %v1629 = vpop.permute.xlu0 %1628
  %1630 = vrot.lane.b32.xlu0 %v1152, 116
  %v1631 = vpop.permute.xlu0 %1630
  %1632 = vrot.lane.b32.xlu0 %v1157, 116
  %v1633 = vpop.permute.xlu0 %1632
  %1634 = vrot.lane.b32.xlu0 %v1160, 116
  %v1635 = vpop.permute.xlu0 %1634
  %1636 = vrot.lane.b32.xlu0 %v1165, 116
  %v1637 = vpop.permute.xlu0 %1636
  %1638 = vrot.lane.b32.xlu0 %v1168, 116
  %v1639 = vpop.permute.xlu0 %1638
  %1640 = vrot.lane.b32.xlu0 %v1173, 116
  %v1641 = vpop.permute.xlu0 %1640
  %1642 = vrot.lane.b32.xlu0 %v1176, 116
  %v1643 = vpop.permute.xlu0 %1642
  %1644 = vrot.lane.b32.xlu0 %v1181, 116
  %v1645 = vpop.permute.xlu0 %1644
  %1646 = vrot.lane.b32.xlu0 %v1184, 116
  %v1647 = vpop.permute.xlu0 %1646
  %1648 = vrot.lane.b32.xlu0 %v1189, 116
  %v1649 = vpop.permute.xlu0 %1648
  %1650 = vrot.lane.b32.xlu0 %v1192, 116
  %v1651 = vpop.permute.xlu0 %1650
  %1652 = vrot.lane.b32.xlu0 %v1197, 116
  %v1653 = vpop.permute.xlu0 %1652
  %1654 = vrot.lane.b32.xlu0 %v1200, 116
  %v1655 = vpop.permute.xlu0 %1654
  %1656 = vrot.lane.b32.xlu0 %v1205, 116
  %v1657 = vpop.permute.xlu0 %1656
  %1658 = vrot.lane.b32.xlu0 %v1208, 116
  %v1659 = vpop.permute.xlu0 %1658
  %1660 = vrot.lane.b32.xlu0 %v1213, 116
  %v1661 = vpop.permute.xlu0 %1660
  %1662 = vrot.lane.b32.xlu0 %v1216, 116
  %v1663 = vpop.permute.xlu0 %1662
  %1664 = vrot.lane.b32.xlu0 %v1221, 116
  %v1665 = vpop.permute.xlu0 %1664
  %1666 = vrot.lane.b32.xlu0 %v1224, 116
  %v1667 = vpop.permute.xlu0 %1666
  %1668 = vrot.lane.b32.xlu0 %v1229, 116
  %v1669 = vpop.permute.xlu0 %1668
  %1670 = vrot.lane.b32.xlu0 %v1232, 116
  %v1671 = vpop.permute.xlu0 %1670
  %1672 = vrot.lane.b32.xlu0 %v1245, 116
  %v1673 = vpop.permute.xlu0 %1672
  %1674 = vrot.lane.b32.xlu0 %v1248, 116
  %v1675 = vpop.permute.xlu0 %1674
  %1676 = vrot.lane.b32.xlu0 %v1253, 116
  %v1677 = vpop.permute.xlu0 %1676
  %1678 = vrot.lane.b32.xlu0 %v1256, 116
  %v1679 = vpop.permute.xlu0 %1678
  %1680 = vrot.lane.b32.xlu0 %v1261, 116
  %v1681 = vpop.permute.xlu0 %1680
  %1682 = vrot.lane.b32.xlu0 %v1264, 116
  %v1683 = vpop.permute.xlu0 %1682
  %1684 = vrot.lane.b32.xlu0 %v1269, 116
  %v1685 = vpop.permute.xlu0 %1684
  %1686 = vrot.lane.b32.xlu0 %v1272, 116
  %v1687 = vpop.permute.xlu0 %1686
  %1688 = vrot.lane.b32.xlu0 %v1277, 116
  %v1689 = vpop.permute.xlu0 %1688
  %1690 = vrot.lane.b32.xlu0 %v1280, 116
  %v1691 = vpop.permute.xlu0 %1690
  %1692 = vrot.lane.b32.xlu0 %v1285, 116
  %v1693 = vpop.permute.xlu0 %1692
  %1694 = vrot.lane.b32.xlu0 %v1288, 116
  %v1695 = vpop.permute.xlu0 %1694
  %1696 = vrot.lane.b32.xlu0 %v1293, 116
  %v1697 = vpop.permute.xlu0 %1696
  %1698 = vrot.lane.b32.xlu0 %v1296, 116
  %v1699 = vpop.permute.xlu0 %1698
  %1700 = vrot.lane.b32.xlu0 %v1301, 116
  %v1701 = vpop.permute.xlu0 %1700
  %1702 = vrot.lane.b32.xlu0 %v1304, 116
  %v1703 = vpop.permute.xlu0 %1702
  %1704 = vrot.lane.b32.xlu0 %v1309, 116
  %v1705 = vpop.permute.xlu0 %1704
  %1706 = vrot.lane.b32.xlu0 %v1312, 116
  %v1707 = vpop.permute.xlu0 %1706
  %1708 = vrot.lane.b32.xlu0 %v1317, 116
  %v1709 = vpop.permute.xlu0 %1708
  %1710 = vrot.lane.b32.xlu0 %v1320, 116
  %v1711 = vpop.permute.xlu0 %1710
  %1712 = vrot.lane.b32.xlu0 %v1325, 116
  %v1713 = vpop.permute.xlu0 %1712
  %1714 = vrot.lane.b32.xlu0 %v1328, 116
  %v1715 = vpop.permute.xlu0 %1714
  %1716 = vrot.lane.b32.xlu0 %v1333, 116
  %v1717 = vpop.permute.xlu0 %1716
  %1718 = vrot.lane.b32.xlu0 %v1336, 116
  %v1719 = vpop.permute.xlu0 %1718
  %1720 = vrot.lane.b32.xlu0 %v1341, 116
  %v1721 = vpop.permute.xlu0 %1720
  %1722 = vrot.lane.b32.xlu0 %v1344, 116
  %v1723 = vpop.permute.xlu0 %1722
  %1724 = vrot.lane.b32.xlu0 %v1349, 116
  %v1725 = vpop.permute.xlu0 %1724
  %1726 = vrot.lane.b32.xlu0 %v1352, 116
  %v1727 = vpop.permute.xlu0 %1726
  %1728 = vrot.lane.b32.xlu0 %v1357, 116
  %v1729 = vpop.permute.xlu0 %1728
  %1730 = vrot.lane.b32.xlu0 %v1360, 116
  %v1731 = vpop.permute.xlu0 %1730
  %v1792 = vadd.f32 %v1582, %v1613
  %v1793 = vadd.f32 %v1434, %v1615
  %v1794 = vadd.f32 %v1583, %v1617
  %v1795 = vadd.f32 %v1437, %v1619
  %v1796 = vadd.f32 %v1584, %v1621
  %v1797 = vadd.f32 %v1440, %v1623
  %v1798 = vadd.f32 %v1585, %v1625
  %v1799 = vadd.f32 %v1443, %v1627
  %v1800 = vadd.f32 %v1586, %v1629
  %v1801 = vadd.f32 %v1446, %v1631
  %v1802 = vadd.f32 %v1587, %v1633
  %v1803 = vadd.f32 %v1449, %v1635
  %v1804 = vadd.f32 %v1588, %v1637
  %v1805 = vadd.f32 %v1452, %v1639
  %v1806 = vadd.f32 %v1589, %v1641
  %v1807 = vadd.f32 %v1455, %v1643
  %v1808 = vadd.f32 %v1590, %v1645
  %v1809 = vadd.f32 %v1458, %v1647
  %v1810 = vadd.f32 %v1591, %v1649
  %v1811 = vadd.f32 %v1461, %v1651
  %v1812 = vadd.f32 %v1592, %v1653
  %v1813 = vadd.f32 %v1464, %v1655
  %v1814 = vadd.f32 %v1593, %v1657
  %v1815 = vadd.f32 %v1467, %v1659
  %v1816 = vadd.f32 %v1594, %v1661
  %v1817 = vadd.f32 %v1470, %v1663
  %v1818 = vadd.f32 %v1595, %v1665
  %v1819 = vadd.f32 %v1473, %v1667
  %v1820 = vadd.f32 %v1596, %v1669
  %v1821 = vadd.f32 %v1476, %v1671
  %v1822 = vadd.f32 %v1597, %v1673
  %v1823 = vadd.f32 %v1479, %v1675
  %v1824 = vadd.f32 %v1598, %v1677
  %v1825 = vadd.f32 %v1482, %v1679
  %v1826 = vadd.f32 %v1599, %v1681
  %v1827 = vadd.f32 %v1485, %v1683
  %v1828 = vadd.f32 %v1600, %v1685
  %v1829 = vadd.f32 %v1488, %v1687
  %v1830 = vadd.f32 %v1601, %v1689
  %v1831 = vadd.f32 %v1491, %v1691
  %v1832 = vadd.f32 %v1602, %v1693
  %v1833 = vadd.f32 %v1494, %v1695
  %v1834 = vadd.f32 %v1603, %v1697
  %v1835 = vadd.f32 %v1497, %v1699
  %v1836 = vadd.f32 %v1604, %v1701
  %v1837 = vadd.f32 %v1500, %v1703
  %v1838 = vadd.f32 %v1605, %v1705
  %v1839 = vadd.f32 %v1503, %v1707
  %v1840 = vadd.f32 %v1606, %v1709
  %v1841 = vadd.f32 %v1506, %v1711
  %v1842 = vadd.f32 %v1607, %v1713
  %v1843 = vadd.f32 %v1509, %v1715
  %v1844 = vadd.f32 %v1608, %v1717
  %v1845 = vadd.f32 %v1512, %v1719
  %v1846 = vadd.f32 %v1609, %v1721
  %v1847 = vadd.f32 %v1515, %v1723
  %v1848 = vadd.f32 %v1610, %v1725
  %v1849 = vadd.f32 %v1518, %v1727
  %v1850 = vadd.f32 %v1611, %v1729
  %v1851 = vadd.f32 %v1521, %v1731
  %vm1852 = vcmask 1046528
  %v1853 = vrot.slane %v1117, 1
  %v1854 = vrot.slane %v1120, 1
  %v1855 = vsel %vm1852, %v1853, %v1854
  %v1856 = vrot.slane %v1125, 1
  %v1857 = vrot.slane %v1128, 1
  %v1858 = vsel %vm1852, %v1856, %v1857
  %v1859 = vrot.slane %v1133, 1
  %v1860 = vrot.slane %v1136, 1
  %v1861 = vsel %vm1852, %v1859, %v1860
  %v1862 = vrot.slane %v1141, 1
  %v1863 = vrot.slane %v1144, 1
  %v1864 = vsel %vm1852, %v1862, %v1863
  %v1865 = vrot.slane %v1149, 1
  %v1866 = vrot.slane %v1152, 1
  %v1867 = vsel %vm1852, %v1865, %v1866
  %v1868 = vrot.slane %v1157, 1
  %v1869 = vrot.slane %v1160, 1
  %v1870 = vsel %vm1852, %v1868, %v1869
  %v1871 = vrot.slane %v1165, 1
  %v1872 = vrot.slane %v1168, 1
  %v1873 = vsel %vm1852, %v1871, %v1872
  %v1874 = vrot.slane %v1173, 1
  %v1875 = vrot.slane %v1176, 1
  %v1876 = vsel %vm1852, %v1874, %v1875
  %v1877 = vrot.slane %v1181, 1
  %v1878 = vrot.slane %v1184, 1
  %v1879 = vsel %vm1852, %v1877, %v1878
  %v1880 = vrot.slane %v1189, 1
  %v1881 = vrot.slane %v1192, 1
  %v1882 = vsel %vm1852, %v1880, %v1881
  %v1883 = vrot.slane %v1197, 1
  %v1884 = vrot.slane %v1200, 1
  %v1885 = vsel %vm1852, %v1883, %v1884
  %v1886 = vrot.slane %v1205, 1
  %v1887 = vrot.slane %v1208, 1
  %v1888 = vsel %vm1852, %v1886, %v1887
  %v1889 = vrot.slane %v1213, 1
  %v1890 = vrot.slane %v1216, 1
  %v1891 = vsel %vm1852, %v1889, %v1890
  %v1892 = vrot.slane %v1221, 1
  %v1893 = vrot.slane %v1224, 1
  %v1894 = vsel %vm1852, %v1892, %v1893
  %v1895 = vrot.slane %v1229, 1
  %v1896 = vrot.slane %v1232, 1
  %v1897 = vsel %vm1852, %v1895, %v1896
  %v1898 = vrot.slane %v1245, 1
  %v1899 = vrot.slane %v1248, 1
  %v1900 = vsel %vm1852, %v1898, %v1899
  %v1901 = vrot.slane %v1253, 1
  %v1902 = vrot.slane %v1256, 1
  %v1903 = vsel %vm1852, %v1901, %v1902
  %v1904 = vrot.slane %v1261, 1
  %v1905 = vrot.slane %v1264, 1
  %v1906 = vsel %vm1852, %v1904, %v1905
  %v1907 = vrot.slane %v1269, 1
  %v1908 = vrot.slane %v1272, 1
  %v1909 = vsel %vm1852, %v1907, %v1908
  %v1910 = vrot.slane %v1277, 1
  %v1911 = vrot.slane %v1280, 1
  %v1912 = vsel %vm1852, %v1910, %v1911
  %v1913 = vrot.slane %v1285, 1
  %v1914 = vrot.slane %v1288, 1
  %v1915 = vsel %vm1852, %v1913, %v1914
  %v1916 = vrot.slane %v1293, 1
  %v1917 = vrot.slane %v1296, 1
  %v1918 = vsel %vm1852, %v1916, %v1917
  %v1919 = vrot.slane %v1301, 1
  %v1920 = vrot.slane %v1304, 1
  %v1921 = vsel %vm1852, %v1919, %v1920
  %v1922 = vrot.slane %v1309, 1
  %v1923 = vrot.slane %v1312, 1
  %v1924 = vsel %vm1852, %v1922, %v1923
  %v1925 = vrot.slane %v1317, 1
  %v1926 = vrot.slane %v1320, 1
  %v1927 = vsel %vm1852, %v1925, %v1926
  %v1928 = vrot.slane %v1325, 1
  %v1929 = vrot.slane %v1328, 1
  %v1930 = vsel %vm1852, %v1928, %v1929
  %v1931 = vrot.slane %v1333, 1
  %v1932 = vrot.slane %v1336, 1
  %v1933 = vsel %vm1852, %v1931, %v1932
  %v1934 = vrot.slane %v1341, 1
  %v1935 = vrot.slane %v1344, 1
  %v1936 = vsel %vm1852, %v1934, %v1935
  %v1937 = vrot.slane %v1349, 1
  %v1938 = vrot.slane %v1352, 1
  %v1939 = vsel %vm1852, %v1937, %v1938
  %v1940 = vrot.slane %v1357, 1
  %v1941 = vrot.slane %v1360, 1
  %v1942 = vsel %vm1852, %v1940, %v1941
  %v1973 = vsel %vm1852, %v1854, 0.0
  %v1974 = vsel %vm1852, %v1857, 0.0
  %v1975 = vsel %vm1852, %v1860, 0.0
  %v1976 = vsel %vm1852, %v1863, 0.0
  %v1977 = vsel %vm1852, %v1866, 0.0
  %v1978 = vsel %vm1852, %v1869, 0.0
  %v1979 = vsel %vm1852, %v1872, 0.0
  %v1980 = vsel %vm1852, %v1875, 0.0
  %v1981 = vsel %vm1852, %v1878, 0.0
  %v1982 = vsel %vm1852, %v1881, 0.0
  %v1983 = vsel %vm1852, %v1884, 0.0
  %v1984 = vsel %vm1852, %v1887, 0.0
  %v1985 = vsel %vm1852, %v1890, 0.0
  %v1986 = vsel %vm1852, %v1893, 0.0
  %v1987 = vsel %vm1852, %v1896, 0.0
  %v1988 = vsel %vm1852, %v1899, 0.0
  %v1989 = vsel %vm1852, %v1902, 0.0
  %v1990 = vsel %vm1852, %v1905, 0.0
  %v1991 = vsel %vm1852, %v1908, 0.0
  %v1992 = vsel %vm1852, %v1911, 0.0
  %v1993 = vsel %vm1852, %v1914, 0.0
  %v1994 = vsel %vm1852, %v1917, 0.0
  %v1995 = vsel %vm1852, %v1920, 0.0
  %v1996 = vsel %vm1852, %v1923, 0.0
  %v1997 = vsel %vm1852, %v1926, 0.0
  %v1998 = vsel %vm1852, %v1929, 0.0
  %v1999 = vsel %vm1852, %v1932, 0.0
  %v2000 = vsel %vm1852, %v1935, 0.0
  %v2001 = vsel %vm1852, %v1938, 0.0
  %v2002 = vsel %vm1852, %v1941, 0.0
  %2033 = vrot.lane.b32.xlu0 %v1855, 104
  %v2034 = vpop.permute.xlu0 %2033
  %2035 = vrot.lane.b32.xlu0 %v1973, 104
  %v2036 = vpop.permute.xlu0 %2035
  %2037 = vrot.lane.b32.xlu0 %v1858, 104
  %v2038 = vpop.permute.xlu0 %2037
  %2039 = vrot.lane.b32.xlu0 %v1974, 104
  %v2040 = vpop.permute.xlu0 %2039
  %2041 = vrot.lane.b32.xlu0 %v1861, 104
  %v2042 = vpop.permute.xlu0 %2041
  %2043 = vrot.lane.b32.xlu0 %v1975, 104
  %v2044 = vpop.permute.xlu0 %2043
  %2045 = vrot.lane.b32.xlu0 %v1864, 104
  %v2046 = vpop.permute.xlu0 %2045
  %2047 = vrot.lane.b32.xlu0 %v1976, 104
  %v2048 = vpop.permute.xlu0 %2047
  %2049 = vrot.lane.b32.xlu0 %v1867, 104
  %v2050 = vpop.permute.xlu0 %2049
  %2051 = vrot.lane.b32.xlu0 %v1977, 104
  %v2052 = vpop.permute.xlu0 %2051
  %2053 = vrot.lane.b32.xlu0 %v1870, 104
  %v2054 = vpop.permute.xlu0 %2053
  %2055 = vrot.lane.b32.xlu0 %v1978, 104
  %v2056 = vpop.permute.xlu0 %2055
  %2057 = vrot.lane.b32.xlu0 %v1873, 104
  %v2058 = vpop.permute.xlu0 %2057
  %2059 = vrot.lane.b32.xlu0 %v1979, 104
  %v2060 = vpop.permute.xlu0 %2059
  %2061 = vrot.lane.b32.xlu0 %v1876, 104
  %v2062 = vpop.permute.xlu0 %2061
  %2063 = vrot.lane.b32.xlu0 %v1980, 104
  %v2064 = vpop.permute.xlu0 %2063
  %2065 = vrot.lane.b32.xlu0 %v1879, 104
  %v2066 = vpop.permute.xlu0 %2065
  %2067 = vrot.lane.b32.xlu0 %v1981, 104
  %v2068 = vpop.permute.xlu0 %2067
  %2069 = vrot.lane.b32.xlu0 %v1882, 104
  %v2070 = vpop.permute.xlu0 %2069
  %2071 = vrot.lane.b32.xlu0 %v1982, 104
  %v2072 = vpop.permute.xlu0 %2071
  %2073 = vrot.lane.b32.xlu0 %v1885, 104
  %v2074 = vpop.permute.xlu0 %2073
  %2075 = vrot.lane.b32.xlu0 %v1983, 104
  %v2076 = vpop.permute.xlu0 %2075
  %2077 = vrot.lane.b32.xlu0 %v1888, 104
  %v2078 = vpop.permute.xlu0 %2077
  %2079 = vrot.lane.b32.xlu0 %v1984, 104
  %v2080 = vpop.permute.xlu0 %2079
  %2081 = vrot.lane.b32.xlu0 %v1891, 104
  %v2082 = vpop.permute.xlu0 %2081
  %2083 = vrot.lane.b32.xlu0 %v1985, 104
  %v2084 = vpop.permute.xlu0 %2083
  %2085 = vrot.lane.b32.xlu0 %v1894, 104
  %v2086 = vpop.permute.xlu0 %2085
  %2087 = vrot.lane.b32.xlu0 %v1986, 104
  %v2088 = vpop.permute.xlu0 %2087
  %2089 = vrot.lane.b32.xlu0 %v1897, 104
  %v2090 = vpop.permute.xlu0 %2089
  %2091 = vrot.lane.b32.xlu0 %v1987, 104
  %v2092 = vpop.permute.xlu0 %2091
  %2093 = vrot.lane.b32.xlu0 %v1900, 104
  %v2094 = vpop.permute.xlu0 %2093
  %2095 = vrot.lane.b32.xlu0 %v1988, 104
  %v2096 = vpop.permute.xlu0 %2095
  %2097 = vrot.lane.b32.xlu0 %v1903, 104
  %v2098 = vpop.permute.xlu0 %2097
  %2099 = vrot.lane.b32.xlu0 %v1989, 104
  %v2100 = vpop.permute.xlu0 %2099
  %2101 = vrot.lane.b32.xlu0 %v1906, 104
  %v2102 = vpop.permute.xlu0 %2101
  %2103 = vrot.lane.b32.xlu0 %v1990, 104
  %v2104 = vpop.permute.xlu0 %2103
  %2105 = vrot.lane.b32.xlu0 %v1909, 104
  %v2106 = vpop.permute.xlu0 %2105
  %2107 = vrot.lane.b32.xlu0 %v1991, 104
  %v2108 = vpop.permute.xlu0 %2107
  %2109 = vrot.lane.b32.xlu0 %v1912, 104
  %v2110 = vpop.permute.xlu0 %2109
  %2111 = vrot.lane.b32.xlu0 %v1992, 104
  %v2112 = vpop.permute.xlu0 %2111
  %2113 = vrot.lane.b32.xlu0 %v1915, 104
  %v2114 = vpop.permute.xlu0 %2113
  %2115 = vrot.lane.b32.xlu0 %v1993, 104
  %v2116 = vpop.permute.xlu0 %2115
  %2117 = vrot.lane.b32.xlu0 %v1918, 104
  %v2118 = vpop.permute.xlu0 %2117
  %2119 = vrot.lane.b32.xlu0 %v1994, 104
  %v2120 = vpop.permute.xlu0 %2119
  %2121 = vrot.lane.b32.xlu0 %v1921, 104
  %v2122 = vpop.permute.xlu0 %2121
  %2123 = vrot.lane.b32.xlu0 %v1995, 104
  %v2124 = vpop.permute.xlu0 %2123
  %2125 = vrot.lane.b32.xlu0 %v1924, 104
  %v2126 = vpop.permute.xlu0 %2125
  %2127 = vrot.lane.b32.xlu0 %v1996, 104
  %v2128 = vpop.permute.xlu0 %2127
  %2129 = vrot.lane.b32.xlu0 %v1927, 104
  %v2130 = vpop.permute.xlu0 %2129
  %2131 = vrot.lane.b32.xlu0 %v1997, 104
  %v2132 = vpop.permute.xlu0 %2131
  %2133 = vrot.lane.b32.xlu0 %v1930, 104
  %v2134 = vpop.permute.xlu0 %2133
  %2135 = vrot.lane.b32.xlu0 %v1998, 104
  %v2136 = vpop.permute.xlu0 %2135
  %2137 = vrot.lane.b32.xlu0 %v1933, 104
  %v2138 = vpop.permute.xlu0 %2137
  %2139 = vrot.lane.b32.xlu0 %v1999, 104
  %v2140 = vpop.permute.xlu0 %2139
  %2141 = vrot.lane.b32.xlu0 %v1936, 104
  %v2142 = vpop.permute.xlu0 %2141
  %2143 = vrot.lane.b32.xlu0 %v2000, 104
  %v2144 = vpop.permute.xlu0 %2143
  %2145 = vrot.lane.b32.xlu0 %v1939, 104
  %v2146 = vpop.permute.xlu0 %2145
  %2147 = vrot.lane.b32.xlu0 %v2001, 104
  %v2148 = vpop.permute.xlu0 %2147
  %2149 = vrot.lane.b32.xlu0 %v1942, 104
  %v2150 = vpop.permute.xlu0 %2149
  %2151 = vrot.lane.b32.xlu0 %v2002, 104
  %v2152 = vpop.permute.xlu0 %2151
  %v2213 = vadd.f32 %v1792, %v2034
  %v2214 = vadd.f32 %v1793, %v2036
  %v2215 = vadd.f32 %v1794, %v2038
  %v2216 = vadd.f32 %v1795, %v2040
  %v2217 = vadd.f32 %v1796, %v2042
  %v2218 = vadd.f32 %v1797, %v2044
  %v2219 = vadd.f32 %v1798, %v2046
  %v2220 = vadd.f32 %v1799, %v2048
  %v2221 = vadd.f32 %v1800, %v2050
  %v2222 = vadd.f32 %v1801, %v2052
  %v2223 = vadd.f32 %v1802, %v2054
  %v2224 = vadd.f32 %v1803, %v2056
  %v2225 = vadd.f32 %v1804, %v2058
  %v2226 = vadd.f32 %v1805, %v2060
  %v2227 = vadd.f32 %v1806, %v2062
  %v2228 = vadd.f32 %v1807, %v2064
  %v2229 = vadd.f32 %v1808, %v2066
  %v2230 = vadd.f32 %v1809, %v2068
  %v2231 = vadd.f32 %v1810, %v2070
  %v2232 = vadd.f32 %v1811, %v2072
  %v2233 = vadd.f32 %v1812, %v2074
  %v2234 = vadd.f32 %v1813, %v2076
  %v2235 = vadd.f32 %v1814, %v2078
  %v2236 = vadd.f32 %v1815, %v2080
  %v2237 = vadd.f32 %v1816, %v2082
  %v2238 = vadd.f32 %v1817, %v2084
  %v2239 = vadd.f32 %v1818, %v2086
  %v2240 = vadd.f32 %v1819, %v2088
  %v2241 = vadd.f32 %v1820, %v2090
  %v2242 = vadd.f32 %v1821, %v2092
  %v2243 = vadd.f32 %v1822, %v2094
  %v2244 = vadd.f32 %v1823, %v2096
  %v2245 = vadd.f32 %v1824, %v2098
  %v2246 = vadd.f32 %v1825, %v2100
  %v2247 = vadd.f32 %v1826, %v2102
  %v2248 = vadd.f32 %v1827, %v2104
  %v2249 = vadd.f32 %v1828, %v2106
  %v2250 = vadd.f32 %v1829, %v2108
  %v2251 = vadd.f32 %v1830, %v2110
  %v2252 = vadd.f32 %v1831, %v2112
  %v2253 = vadd.f32 %v1832, %v2114
  %v2254 = vadd.f32 %v1833, %v2116
  %v2255 = vadd.f32 %v1834, %v2118
  %v2256 = vadd.f32 %v1835, %v2120
  %v2257 = vadd.f32 %v1836, %v2122
  %v2258 = vadd.f32 %v1837, %v2124
  %v2259 = vadd.f32 %v1838, %v2126
  %v2260 = vadd.f32 %v1839, %v2128
  %v2261 = vadd.f32 %v1840, %v2130
  %v2262 = vadd.f32 %v1841, %v2132
  %v2263 = vadd.f32 %v1842, %v2134
  %v2264 = vadd.f32 %v1843, %v2136
  %v2265 = vadd.f32 %v1844, %v2138
  %v2266 = vadd.f32 %v1845, %v2140
  %v2267 = vadd.f32 %v1846, %v2142
  %v2268 = vadd.f32 %v1847, %v2144
  %v2269 = vadd.f32 %v1848, %v2146
  %v2270 = vadd.f32 %v1849, %v2148
  %v2271 = vadd.f32 %v1850, %v2150
  %v2272 = vadd.f32 %v1851, %v2152
  %v2277 = vrot.slane %v1237, 7
  %v2278 = vrot.slane %v1240, 7
  %v2279 = vsel %vm1431, %v2277, %v2278
  %v2280 = vrot.slane %v1365, 7
  %v2281 = vrot.slane %v1368, 7
  %v2282 = vsel %vm1431, %v2280, %v2281
  %2283 = vrot.lane.b32.xlu0 %v1432, 92
  %v2284 = vpop.permute.xlu0 %2283
  %2285 = vrot.lane.b32.xlu0 %v1434, 92
  %v2286 = vpop.permute.xlu0 %2285
  %2287 = vrot.lane.b32.xlu0 %v1435, 92
  %v2288 = vpop.permute.xlu0 %2287
  %2289 = vrot.lane.b32.xlu0 %v1437, 92
  %v2290 = vpop.permute.xlu0 %2289
  %2291 = vrot.lane.b32.xlu0 %v1438, 92
  %v2292 = vpop.permute.xlu0 %2291
  %2293 = vrot.lane.b32.xlu0 %v1440, 92
  %v2294 = vpop.permute.xlu0 %2293
  %2295 = vrot.lane.b32.xlu0 %v1441, 92
  %v2296 = vpop.permute.xlu0 %2295
  %2297 = vrot.lane.b32.xlu0 %v1443, 92
  %v2298 = vpop.permute.xlu0 %2297
  %2299 = vrot.lane.b32.xlu0 %v1444, 92
  %v2300 = vpop.permute.xlu0 %2299
  %2301 = vrot.lane.b32.xlu0 %v1446, 92
  %v2302 = vpop.permute.xlu0 %2301
  %2303 = vrot.lane.b32.xlu0 %v1447, 92
  %v2304 = vpop.permute.xlu0 %2303
  %2305 = vrot.lane.b32.xlu0 %v1449, 92
  %v2306 = vpop.permute.xlu0 %2305
  %2307 = vrot.lane.b32.xlu0 %v1450, 92
  %v2308 = vpop.permute.xlu0 %2307
  %2309 = vrot.lane.b32.xlu0 %v1452, 92
  %v2310 = vpop.permute.xlu0 %2309
  %2311 = vrot.lane.b32.xlu0 %v1453, 92
  %v2312 = vpop.permute.xlu0 %2311
  %2313 = vrot.lane.b32.xlu0 %v1455, 92
  %v2314 = vpop.permute.xlu0 %2313
  %2315 = vrot.lane.b32.xlu0 %v1456, 92
  %v2316 = vpop.permute.xlu0 %2315
  %2317 = vrot.lane.b32.xlu0 %v1458, 92
  %v2318 = vpop.permute.xlu0 %2317
  %2319 = vrot.lane.b32.xlu0 %v1459, 92
  %v2320 = vpop.permute.xlu0 %2319
  %2321 = vrot.lane.b32.xlu0 %v1461, 92
  %v2322 = vpop.permute.xlu0 %2321
  %2323 = vrot.lane.b32.xlu0 %v1462, 92
  %v2324 = vpop.permute.xlu0 %2323
  %2325 = vrot.lane.b32.xlu0 %v1464, 92
  %v2326 = vpop.permute.xlu0 %2325
  %2327 = vrot.lane.b32.xlu0 %v1465, 92
  %v2328 = vpop.permute.xlu0 %2327
  %2329 = vrot.lane.b32.xlu0 %v1467, 92
  %v2330 = vpop.permute.xlu0 %2329
  %2331 = vrot.lane.b32.xlu0 %v1468, 92
  %v2332 = vpop.permute.xlu0 %2331
  %2333 = vrot.lane.b32.xlu0 %v1470, 92
  %v2334 = vpop.permute.xlu0 %2333
  %2335 = vrot.lane.b32.xlu0 %v1471, 92
  %v2336 = vpop.permute.xlu0 %2335
  %2337 = vrot.lane.b32.xlu0 %v1473, 92
  %v2338 = vpop.permute.xlu0 %2337
  %2339 = vrot.lane.b32.xlu0 %v1474, 92
  %v2340 = vpop.permute.xlu0 %2339
  %2341 = vrot.lane.b32.xlu0 %v1476, 92
  %v2342 = vpop.permute.xlu0 %2341
  %2343 = vrot.lane.b32.xlu0 %v2277, 92
  %v2344 = vpop.permute.xlu0 %2343
  %2345 = vrot.lane.b32.xlu0 %v2279, 92
  %v2346 = vpop.permute.xlu0 %2345
  %2347 = vrot.lane.b32.xlu0 %v1477, 92
  %v2348 = vpop.permute.xlu0 %2347
  %2349 = vrot.lane.b32.xlu0 %v1479, 92
  %v2350 = vpop.permute.xlu0 %2349
  %2351 = vrot.lane.b32.xlu0 %v1480, 92
  %v2352 = vpop.permute.xlu0 %2351
  %2353 = vrot.lane.b32.xlu0 %v1482, 92
  %v2354 = vpop.permute.xlu0 %2353
  %2355 = vrot.lane.b32.xlu0 %v1483, 92
  %v2356 = vpop.permute.xlu0 %2355
  %2357 = vrot.lane.b32.xlu0 %v1485, 92
  %v2358 = vpop.permute.xlu0 %2357
  %2359 = vrot.lane.b32.xlu0 %v1486, 92
  %v2360 = vpop.permute.xlu0 %2359
  %2361 = vrot.lane.b32.xlu0 %v1488, 92
  %v2362 = vpop.permute.xlu0 %2361
  %2363 = vrot.lane.b32.xlu0 %v1489, 92
  %v2364 = vpop.permute.xlu0 %2363
  %2365 = vrot.lane.b32.xlu0 %v1491, 92
  %v2366 = vpop.permute.xlu0 %2365
  %2367 = vrot.lane.b32.xlu0 %v1492, 92
  %v2368 = vpop.permute.xlu0 %2367
  %2369 = vrot.lane.b32.xlu0 %v1494, 92
  %v2370 = vpop.permute.xlu0 %2369
  %2371 = vrot.lane.b32.xlu0 %v1495, 92
  %v2372 = vpop.permute.xlu0 %2371
  %2373 = vrot.lane.b32.xlu0 %v1497, 92
  %v2374 = vpop.permute.xlu0 %2373
  %2375 = vrot.lane.b32.xlu0 %v1498, 92
  %v2376 = vpop.permute.xlu0 %2375
  %2377 = vrot.lane.b32.xlu0 %v1500, 92
  %v2378 = vpop.permute.xlu0 %2377
  %2379 = vrot.lane.b32.xlu0 %v1501, 92
  %v2380 = vpop.permute.xlu0 %2379
  %2381 = vrot.lane.b32.xlu0 %v1503, 92
  %v2382 = vpop.permute.xlu0 %2381
  %2383 = vrot.lane.b32.xlu0 %v1504, 92
  %v2384 = vpop.permute.xlu0 %2383
  %2385 = vrot.lane.b32.xlu0 %v1506, 92
  %v2386 = vpop.permute.xlu0 %2385
  %2387 = vrot.lane.b32.xlu0 %v1507, 92
  %v2388 = vpop.permute.xlu0 %2387
  %2389 = vrot.lane.b32.xlu0 %v1509, 92
  %v2390 = vpop.permute.xlu0 %2389
  %2391 = vrot.lane.b32.xlu0 %v1510, 92
  %v2392 = vpop.permute.xlu0 %2391
  %2393 = vrot.lane.b32.xlu0 %v1512, 92
  %v2394 = vpop.permute.xlu0 %2393
  %2395 = vrot.lane.b32.xlu0 %v1513, 92
  %v2396 = vpop.permute.xlu0 %2395
  %2397 = vrot.lane.b32.xlu0 %v1515, 92
  %v2398 = vpop.permute.xlu0 %2397
  %2399 = vrot.lane.b32.xlu0 %v1516, 92
  %v2400 = vpop.permute.xlu0 %2399
  %2401 = vrot.lane.b32.xlu0 %v1518, 92
  %v2402 = vpop.permute.xlu0 %2401
  %2403 = vrot.lane.b32.xlu0 %v1519, 92
  %v2404 = vpop.permute.xlu0 %2403
  %2405 = vrot.lane.b32.xlu0 %v1521, 92
  %v2406 = vpop.permute.xlu0 %2405
  %2407 = vrot.lane.b32.xlu0 %v2280, 92
  %v2408 = vpop.permute.xlu0 %2407
  %2409 = vrot.lane.b32.xlu0 %v2282, 92
  %v2410 = vpop.permute.xlu0 %2409
  %v2475 = vsel %vm1431, 0.0, %v2284
  %v2476 = vsel %vm1431, 0.0, %v2288
  %v2477 = vsel %vm1431, 0.0, %v2292
  %v2478 = vsel %vm1431, 0.0, %v2296
  %v2479 = vsel %vm1431, 0.0, %v2300
  %v2480 = vsel %vm1431, 0.0, %v2304
  %v2481 = vsel %vm1431, 0.0, %v2308
  %v2482 = vsel %vm1431, 0.0, %v2312
  %v2483 = vsel %vm1431, 0.0, %v2316
  %v2484 = vsel %vm1431, 0.0, %v2320
  %v2485 = vsel %vm1431, 0.0, %v2324
  %v2486 = vsel %vm1431, 0.0, %v2328
  %v2487 = vsel %vm1431, 0.0, %v2332
  %v2488 = vsel %vm1431, 0.0, %v2336
  %v2489 = vsel %vm1431, 0.0, %v2340
  %v2490 = vsel %vm1431, 0.0, %v2344
  %v2491 = vsel %vm1431, 0.0, %v2348
  %v2492 = vsel %vm1431, 0.0, %v2352
  %v2493 = vsel %vm1431, 0.0, %v2356
  %v2494 = vsel %vm1431, 0.0, %v2360
  %v2495 = vsel %vm1431, 0.0, %v2364
  %v2496 = vsel %vm1431, 0.0, %v2368
  %v2497 = vsel %vm1431, 0.0, %v2372
  %v2498 = vsel %vm1431, 0.0, %v2376
  %v2499 = vsel %vm1431, 0.0, %v2380
  %v2500 = vsel %vm1431, 0.0, %v2384
  %v2501 = vsel %vm1431, 0.0, %v2388
  %v2502 = vsel %vm1431, 0.0, %v2392
  %v2503 = vsel %vm1431, 0.0, %v2396
  %v2504 = vsel %vm1431, 0.0, %v2400
  %v2505 = vsel %vm1431, 0.0, %v2404
  %v2506 = vsel %vm1431, 0.0, %v2408
  %v2507 = vadd.f32 %v2475, 0.0
  %v2508 = vadd.f32 %v2286, 0.0
  %v2509 = vadd.f32 %v2213, %v2476
  %v2510 = vadd.f32 %v2214, %v2290
  %v2511 = vadd.f32 %v2215, %v2477
  %v2512 = vadd.f32 %v2216, %v2294
  %v2513 = vadd.f32 %v2217, %v2478
  %v2514 = vadd.f32 %v2218, %v2298
  %v2515 = vadd.f32 %v2219, %v2479
  %v2516 = vadd.f32 %v2220, %v2302
  %v2517 = vadd.f32 %v2221, %v2480
  %v2518 = vadd.f32 %v2222, %v2306
  %v2519 = vadd.f32 %v2223, %v2481
  %v2520 = vadd.f32 %v2224, %v2310
  %v2521 = vadd.f32 %v2225, %v2482
  %v2522 = vadd.f32 %v2226, %v2314
  %v2523 = vadd.f32 %v2227, %v2483
  %v2524 = vadd.f32 %v2228, %v2318
  %v2525 = vadd.f32 %v2229, %v2484
  %v2526 = vadd.f32 %v2230, %v2322
  %v2527 = vadd.f32 %v2231, %v2485
  %v2528 = vadd.f32 %v2232, %v2326
  %v2529 = vadd.f32 %v2233, %v2486
  %v2530 = vadd.f32 %v2234, %v2330
  %v2531 = vadd.f32 %v2235, %v2487
  %v2532 = vadd.f32 %v2236, %v2334
  %v2533 = vadd.f32 %v2237, %v2488
  %v2534 = vadd.f32 %v2238, %v2338
  %v2535 = vadd.f32 %v2239, %v2489
  %v2536 = vadd.f32 %v2240, %v2342
  %v2537 = vadd.f32 %v2241, %v2490
  %v2538 = vadd.f32 %v2242, %v2346
  %v2539 = vadd.f32 %v2491, 0.0
  %v2540 = vadd.f32 %v2350, 0.0
  %v2541 = vadd.f32 %v2243, %v2492
  %v2542 = vadd.f32 %v2244, %v2354
  %v2543 = vadd.f32 %v2245, %v2493
  %v2544 = vadd.f32 %v2246, %v2358
  %v2545 = vadd.f32 %v2247, %v2494
  %v2546 = vadd.f32 %v2248, %v2362
  %v2547 = vadd.f32 %v2249, %v2495
  %v2548 = vadd.f32 %v2250, %v2366
  %v2549 = vadd.f32 %v2251, %v2496
  %v2550 = vadd.f32 %v2252, %v2370
  %v2551 = vadd.f32 %v2253, %v2497
  %v2552 = vadd.f32 %v2254, %v2374
  %v2553 = vadd.f32 %v2255, %v2498
  %v2554 = vadd.f32 %v2256, %v2378
  %v2555 = vadd.f32 %v2257, %v2499
  %v2556 = vadd.f32 %v2258, %v2382
  %v2557 = vadd.f32 %v2259, %v2500
  %v2558 = vadd.f32 %v2260, %v2386
  %v2559 = vadd.f32 %v2261, %v2501
  %v2560 = vadd.f32 %v2262, %v2390
  %v2561 = vadd.f32 %v2263, %v2502
  %v2562 = vadd.f32 %v2264, %v2394
  %v2563 = vadd.f32 %v2265, %v2503
  %v2564 = vadd.f32 %v2266, %v2398
  %v2565 = vadd.f32 %v2267, %v2504
  %v2566 = vadd.f32 %v2268, %v2402
  %v2567 = vadd.f32 %v2269, %v2505
  %v2568 = vadd.f32 %v2270, %v2406
  %v2569 = vadd.f32 %v2271, %v2506
  %v2570 = vadd.f32 %v2272, %v2410
  %2571 = vrot.lane.b32.xlu0 %v1117, 80
  %v2572 = vpop.permute.xlu0 %2571
  %2573 = vrot.lane.b32.xlu0 %v1120, 80
  %v2574 = vpop.permute.xlu0 %2573
  %2575 = vrot.lane.b32.xlu0 %v1125, 80
  %v2576 = vpop.permute.xlu0 %2575
  %2577 = vrot.lane.b32.xlu0 %v1128, 80
  %v2578 = vpop.permute.xlu0 %2577
  %2579 = vrot.lane.b32.xlu0 %v1133, 80
  %v2580 = vpop.permute.xlu0 %2579
  %2581 = vrot.lane.b32.xlu0 %v1136, 80
  %v2582 = vpop.permute.xlu0 %2581
  %2583 = vrot.lane.b32.xlu0 %v1141, 80
  %v2584 = vpop.permute.xlu0 %2583
  %2585 = vrot.lane.b32.xlu0 %v1144, 80
  %v2586 = vpop.permute.xlu0 %2585
  %2587 = vrot.lane.b32.xlu0 %v1149, 80
  %v2588 = vpop.permute.xlu0 %2587
  %2589 = vrot.lane.b32.xlu0 %v1152, 80
  %v2590 = vpop.permute.xlu0 %2589
  %2591 = vrot.lane.b32.xlu0 %v1157, 80
  %v2592 = vpop.permute.xlu0 %2591
  %2593 = vrot.lane.b32.xlu0 %v1160, 80
  %v2594 = vpop.permute.xlu0 %2593
  %2595 = vrot.lane.b32.xlu0 %v1165, 80
  %v2596 = vpop.permute.xlu0 %2595
  %2597 = vrot.lane.b32.xlu0 %v1168, 80
  %v2598 = vpop.permute.xlu0 %2597
  %2599 = vrot.lane.b32.xlu0 %v1173, 80
  %v2600 = vpop.permute.xlu0 %2599
  %2601 = vrot.lane.b32.xlu0 %v1176, 80
  %v2602 = vpop.permute.xlu0 %2601
  %2603 = vrot.lane.b32.xlu0 %v1181, 80
  %v2604 = vpop.permute.xlu0 %2603
  %2605 = vrot.lane.b32.xlu0 %v1184, 80
  %v2606 = vpop.permute.xlu0 %2605
  %2607 = vrot.lane.b32.xlu0 %v1189, 80
  %v2608 = vpop.permute.xlu0 %2607
  %2609 = vrot.lane.b32.xlu0 %v1192, 80
  %v2610 = vpop.permute.xlu0 %2609
  %2611 = vrot.lane.b32.xlu0 %v1197, 80
  %v2612 = vpop.permute.xlu0 %2611
  %2613 = vrot.lane.b32.xlu0 %v1200, 80
  %v2614 = vpop.permute.xlu0 %2613
  %2615 = vrot.lane.b32.xlu0 %v1205, 80
  %v2616 = vpop.permute.xlu0 %2615
  %2617 = vrot.lane.b32.xlu0 %v1208, 80
  %v2618 = vpop.permute.xlu0 %2617
  %2619 = vrot.lane.b32.xlu0 %v1213, 80
  %v2620 = vpop.permute.xlu0 %2619
  %2621 = vrot.lane.b32.xlu0 %v1216, 80
  %v2622 = vpop.permute.xlu0 %2621
  %2623 = vrot.lane.b32.xlu0 %v1221, 80
  %v2624 = vpop.permute.xlu0 %2623
  %2625 = vrot.lane.b32.xlu0 %v1224, 80
  %v2626 = vpop.permute.xlu0 %2625
  %2627 = vrot.lane.b32.xlu0 %v1229, 80
  %v2628 = vpop.permute.xlu0 %2627
  %2629 = vrot.lane.b32.xlu0 %v1232, 80
  %v2630 = vpop.permute.xlu0 %2629
  %2631 = vrot.lane.b32.xlu0 %v1237, 80
  %v2632 = vpop.permute.xlu0 %2631
  %2633 = vrot.lane.b32.xlu0 %v1240, 80
  %v2634 = vpop.permute.xlu0 %2633
  %2635 = vrot.lane.b32.xlu0 %v1245, 80
  %v2636 = vpop.permute.xlu0 %2635
  %2637 = vrot.lane.b32.xlu0 %v1248, 80
  %v2638 = vpop.permute.xlu0 %2637
  %2639 = vrot.lane.b32.xlu0 %v1253, 80
  %v2640 = vpop.permute.xlu0 %2639
  %2641 = vrot.lane.b32.xlu0 %v1256, 80
  %v2642 = vpop.permute.xlu0 %2641
  %2643 = vrot.lane.b32.xlu0 %v1261, 80
  %v2644 = vpop.permute.xlu0 %2643
  %2645 = vrot.lane.b32.xlu0 %v1264, 80
  %v2646 = vpop.permute.xlu0 %2645
  %2647 = vrot.lane.b32.xlu0 %v1269, 80
  %v2648 = vpop.permute.xlu0 %2647
  %2649 = vrot.lane.b32.xlu0 %v1272, 80
  %v2650 = vpop.permute.xlu0 %2649
  %2651 = vrot.lane.b32.xlu0 %v1277, 80
  %v2652 = vpop.permute.xlu0 %2651
  %2653 = vrot.lane.b32.xlu0 %v1280, 80
  %v2654 = vpop.permute.xlu0 %2653
  %2655 = vrot.lane.b32.xlu0 %v1285, 80
  %v2656 = vpop.permute.xlu0 %2655
  %2657 = vrot.lane.b32.xlu0 %v1288, 80
  %v2658 = vpop.permute.xlu0 %2657
  %2659 = vrot.lane.b32.xlu0 %v1293, 80
  %v2660 = vpop.permute.xlu0 %2659
  %2661 = vrot.lane.b32.xlu0 %v1296, 80
  %v2662 = vpop.permute.xlu0 %2661
  %2663 = vrot.lane.b32.xlu0 %v1301, 80
  %v2664 = vpop.permute.xlu0 %2663
  %2665 = vrot.lane.b32.xlu0 %v1304, 80
  %v2666 = vpop.permute.xlu0 %2665
  %2667 = vrot.lane.b32.xlu0 %v1309, 80
  %v2668 = vpop.permute.xlu0 %2667
  %2669 = vrot.lane.b32.xlu0 %v1312, 80
  %v2670 = vpop.permute.xlu0 %2669
  %2671 = vrot.lane.b32.xlu0 %v1317, 80
  %v2672 = vpop.permute.xlu0 %2671
  %2673 = vrot.lane.b32.xlu0 %v1320, 80
  %v2674 = vpop.permute.xlu0 %2673
  %2675 = vrot.lane.b32.xlu0 %v1325, 80
  %v2676 = vpop.permute.xlu0 %2675
  %2677 = vrot.lane.b32.xlu0 %v1328, 80
  %v2678 = vpop.permute.xlu0 %2677
  %2679 = vrot.lane.b32.xlu0 %v1333, 80
  %v2680 = vpop.permute.xlu0 %2679
  %2681 = vrot.lane.b32.xlu0 %v1336, 80
  %v2682 = vpop.permute.xlu0 %2681
  %2683 = vrot.lane.b32.xlu0 %v1341, 80
  %v2684 = vpop.permute.xlu0 %2683
  %2685 = vrot.lane.b32.xlu0 %v1344, 80
  %v2686 = vpop.permute.xlu0 %2685
  %2687 = vrot.lane.b32.xlu0 %v1349, 80
  %v2688 = vpop.permute.xlu0 %2687
  %2689 = vrot.lane.b32.xlu0 %v1352, 80
  %v2690 = vpop.permute.xlu0 %2689
  %2691 = vrot.lane.b32.xlu0 %v1357, 80
  %v2692 = vpop.permute.xlu0 %2691
  %2693 = vrot.lane.b32.xlu0 %v1360, 80
  %v2694 = vpop.permute.xlu0 %2693
  %2695 = vrot.lane.b32.xlu0 %v1365, 80
  %v2696 = vpop.permute.xlu0 %2695
  %2697 = vrot.lane.b32.xlu0 %v1368, 80
  %v2698 = vpop.permute.xlu0 %2697
  %v2763 = vadd.f32 %v2507, %v2572
  %v2764 = vadd.f32 %v2508, %v2574
  %v2765 = vadd.f32 %v2509, %v2576
  %v2766 = vadd.f32 %v2510, %v2578
  %v2767 = vadd.f32 %v2511, %v2580
  %v2768 = vadd.f32 %v2512, %v2582
  %v2769 = vadd.f32 %v2513, %v2584
  %v2770 = vadd.f32 %v2514, %v2586
  %v2771 = vadd.f32 %v2515, %v2588
  %v2772 = vadd.f32 %v2516, %v2590
  %v2773 = vadd.f32 %v2517, %v2592
  %v2774 = vadd.f32 %v2518, %v2594
  %v2775 = vadd.f32 %v2519, %v2596
  %v2776 = vadd.f32 %v2520, %v2598
  %v2777 = vadd.f32 %v2521, %v2600
  %v2778 = vadd.f32 %v2522, %v2602
  %v2779 = vadd.f32 %v2523, %v2604
  %v2780 = vadd.f32 %v2524, %v2606
  %v2781 = vadd.f32 %v2525, %v2608
  %v2782 = vadd.f32 %v2526, %v2610
  %v2783 = vadd.f32 %v2527, %v2612
  %v2784 = vadd.f32 %v2528, %v2614
  %v2785 = vadd.f32 %v2529, %v2616
  %v2786 = vadd.f32 %v2530, %v2618
  %v2787 = vadd.f32 %v2531, %v2620
  %v2788 = vadd.f32 %v2532, %v2622
  %v2789 = vadd.f32 %v2533, %v2624
  %v2790 = vadd.f32 %v2534, %v2626
  %v2791 = vadd.f32 %v2535, %v2628
  %v2792 = vadd.f32 %v2536, %v2630
  %v2793 = vadd.f32 %v2537, %v2632
  %v2794 = vadd.f32 %v2538, %v2634
  %v2795 = vadd.f32 %v2539, %v2636
  %v2796 = vadd.f32 %v2540, %v2638
  %v2797 = vadd.f32 %v2541, %v2640
  %v2798 = vadd.f32 %v2542, %v2642
  %v2799 = vadd.f32 %v2543, %v2644
  %v2800 = vadd.f32 %v2544, %v2646
  %v2801 = vadd.f32 %v2545, %v2648
  %v2802 = vadd.f32 %v2546, %v2650
  %v2803 = vadd.f32 %v2547, %v2652
  %v2804 = vadd.f32 %v2548, %v2654
  %v2805 = vadd.f32 %v2549, %v2656
  %v2806 = vadd.f32 %v2550, %v2658
  %v2807 = vadd.f32 %v2551, %v2660
  %v2808 = vadd.f32 %v2552, %v2662
  %v2809 = vadd.f32 %v2553, %v2664
  %v2810 = vadd.f32 %v2554, %v2666
  %v2811 = vadd.f32 %v2555, %v2668
  %v2812 = vadd.f32 %v2556, %v2670
  %v2813 = vadd.f32 %v2557, %v2672
  %v2814 = vadd.f32 %v2558, %v2674
  %v2815 = vadd.f32 %v2559, %v2676
  %v2816 = vadd.f32 %v2560, %v2678
  %v2817 = vadd.f32 %v2561, %v2680
  %v2818 = vadd.f32 %v2562, %v2682
  %v2819 = vadd.f32 %v2563, %v2684
  %v2820 = vadd.f32 %v2564, %v2686
  %v2821 = vadd.f32 %v2565, %v2688
  %v2822 = vadd.f32 %v2566, %v2690
  %v2823 = vadd.f32 %v2567, %v2692
  %v2824 = vadd.f32 %v2568, %v2694
  %v2825 = vadd.f32 %v2569, %v2696
  %v2826 = vadd.f32 %v2570, %v2698
  %v2827 = vrot.slane %v1237, 1
  %v2828 = vrot.slane %v1240, 1
  %v2829 = vsel %vm1852, %v2827, %v2828
  %v2830 = vrot.slane %v1365, 1
  %v2831 = vrot.slane %v1368, 1
  %v2832 = vsel %vm1852, %v2830, %v2831
  %v2835 = vsel %vm1852, %v2828, 0.0
  %v2836 = vsel %vm1852, %v2831, 0.0
  %2839 = vrot.lane.b32.xlu0 %v1855, 68
  %v2840 = vpop.permute.xlu0 %2839
  %2841 = vrot.lane.b32.xlu0 %v1973, 68
  %v2842 = vpop.permute.xlu0 %2841
  %2843 = vrot.lane.b32.xlu0 %v1858, 68
  %v2844 = vpop.permute.xlu0 %2843
  %2845 = vrot.lane.b32.xlu0 %v1974, 68
  %v2846 = vpop.permute.xlu0 %2845
  %2847 = vrot.lane.b32.xlu0 %v1861, 68
  %v2848 = vpop.permute.xlu0 %2847
  %2849 = vrot.lane.b32.xlu0 %v1975, 68
  %v2850 = vpop.permute.xlu0 %2849
  %2851 = vrot.lane.b32.xlu0 %v1864, 68
  %v2852 = vpop.permute.xlu0 %2851
  %2853 = vrot.lane.b32.xlu0 %v1976, 68
  %v2854 = vpop.permute.xlu0 %2853
  %2855 = vrot.lane.b32.xlu0 %v1867, 68
  %v2856 = vpop.permute.xlu0 %2855
  %2857 = vrot.lane.b32.xlu0 %v1977, 68
  %v2858 = vpop.permute.xlu0 %2857
  %2859 = vrot.lane.b32.xlu0 %v1870, 68
  %v2860 = vpop.permute.xlu0 %2859
  %2861 = vrot.lane.b32.xlu0 %v1978, 68
  %v2862 = vpop.permute.xlu0 %2861
  %2863 = vrot.lane.b32.xlu0 %v1873, 68
  %v2864 = vpop.permute.xlu0 %2863
  %2865 = vrot.lane.b32.xlu0 %v1979, 68
  %v2866 = vpop.permute.xlu0 %2865
  %2867 = vrot.lane.b32.xlu0 %v1876, 68
  %v2868 = vpop.permute.xlu0 %2867
  %2869 = vrot.lane.b32.xlu0 %v1980, 68
  %v2870 = vpop.permute.xlu0 %2869
  %2871 = vrot.lane.b32.xlu0 %v1879, 68
  %v2872 = vpop.permute.xlu0 %2871
  %2873 = vrot.lane.b32.xlu0 %v1981, 68
  %v2874 = vpop.permute.xlu0 %2873
  %2875 = vrot.lane.b32.xlu0 %v1882, 68
  %v2876 = vpop.permute.xlu0 %2875
  %2877 = vrot.lane.b32.xlu0 %v1982, 68
  %v2878 = vpop.permute.xlu0 %2877
  %2879 = vrot.lane.b32.xlu0 %v1885, 68
  %v2880 = vpop.permute.xlu0 %2879
  %2881 = vrot.lane.b32.xlu0 %v1983, 68
  %v2882 = vpop.permute.xlu0 %2881
  %2883 = vrot.lane.b32.xlu0 %v1888, 68
  %v2884 = vpop.permute.xlu0 %2883
  %2885 = vrot.lane.b32.xlu0 %v1984, 68
  %v2886 = vpop.permute.xlu0 %2885
  %2887 = vrot.lane.b32.xlu0 %v1891, 68
  %v2888 = vpop.permute.xlu0 %2887
  %2889 = vrot.lane.b32.xlu0 %v1985, 68
  %v2890 = vpop.permute.xlu0 %2889
  %2891 = vrot.lane.b32.xlu0 %v1894, 68
  %v2892 = vpop.permute.xlu0 %2891
  %2893 = vrot.lane.b32.xlu0 %v1986, 68
  %v2894 = vpop.permute.xlu0 %2893
  %2895 = vrot.lane.b32.xlu0 %v1897, 68
  %v2896 = vpop.permute.xlu0 %2895
  %2897 = vrot.lane.b32.xlu0 %v1987, 68
  %v2898 = vpop.permute.xlu0 %2897
  %2899 = vrot.lane.b32.xlu0 %v2829, 68
  %v2900 = vpop.permute.xlu0 %2899
  %2901 = vrot.lane.b32.xlu0 %v2835, 68
  %v2902 = vpop.permute.xlu0 %2901
  %2903 = vrot.lane.b32.xlu0 %v1900, 68
  %v2904 = vpop.permute.xlu0 %2903
  %2905 = vrot.lane.b32.xlu0 %v1988, 68
  %v2906 = vpop.permute.xlu0 %2905
  %2907 = vrot.lane.b32.xlu0 %v1903, 68
  %v2908 = vpop.permute.xlu0 %2907
  %2909 = vrot.lane.b32.xlu0 %v1989, 68
  %v2910 = vpop.permute.xlu0 %2909
  %2911 = vrot.lane.b32.xlu0 %v1906, 68
  %v2912 = vpop.permute.xlu0 %2911
  %2913 = vrot.lane.b32.xlu0 %v1990, 68
  %v2914 = vpop.permute.xlu0 %2913
  %2915 = vrot.lane.b32.xlu0 %v1909, 68
  %v2916 = vpop.permute.xlu0 %2915
  %2917 = vrot.lane.b32.xlu0 %v1991, 68
  %v2918 = vpop.permute.xlu0 %2917
  %2919 = vrot.lane.b32.xlu0 %v1912, 68
  %v2920 = vpop.permute.xlu0 %2919
  %2921 = vrot.lane.b32.xlu0 %v1992, 68
  %v2922 = vpop.permute.xlu0 %2921
  %2923 = vrot.lane.b32.xlu0 %v1915, 68
  %v2924 = vpop.permute.xlu0 %2923
  %2925 = vrot.lane.b32.xlu0 %v1993, 68
  %v2926 = vpop.permute.xlu0 %2925
  %2927 = vrot.lane.b32.xlu0 %v1918, 68
  %v2928 = vpop.permute.xlu0 %2927
  %2929 = vrot.lane.b32.xlu0 %v1994, 68
  %v2930 = vpop.permute.xlu0 %2929
  %2931 = vrot.lane.b32.xlu0 %v1921, 68
  %v2932 = vpop.permute.xlu0 %2931
  %2933 = vrot.lane.b32.xlu0 %v1995, 68
  %v2934 = vpop.permute.xlu0 %2933
  %2935 = vrot.lane.b32.xlu0 %v1924, 68
  %v2936 = vpop.permute.xlu0 %2935
  %2937 = vrot.lane.b32.xlu0 %v1996, 68
  %v2938 = vpop.permute.xlu0 %2937
  %2939 = vrot.lane.b32.xlu0 %v1927, 68
  %v2940 = vpop.permute.xlu0 %2939
  %2941 = vrot.lane.b32.xlu0 %v1997, 68
  %v2942 = vpop.permute.xlu0 %2941
  %2943 = vrot.lane.b32.xlu0 %v1930, 68
  %v2944 = vpop.permute.xlu0 %2943
  %2945 = vrot.lane.b32.xlu0 %v1998, 68
  %v2946 = vpop.permute.xlu0 %2945
  %2947 = vrot.lane.b32.xlu0 %v1933, 68
  %v2948 = vpop.permute.xlu0 %2947
  %2949 = vrot.lane.b32.xlu0 %v1999, 68
  %v2950 = vpop.permute.xlu0 %2949
  %2951 = vrot.lane.b32.xlu0 %v1936, 68
  %v2952 = vpop.permute.xlu0 %2951
  %2953 = vrot.lane.b32.xlu0 %v2000, 68
  %v2954 = vpop.permute.xlu0 %2953
  %2955 = vrot.lane.b32.xlu0 %v1939, 68
  %v2956 = vpop.permute.xlu0 %2955
  %2957 = vrot.lane.b32.xlu0 %v2001, 68
  %v2958 = vpop.permute.xlu0 %2957
  %2959 = vrot.lane.b32.xlu0 %v1942, 68
  %v2960 = vpop.permute.xlu0 %2959
  %2961 = vrot.lane.b32.xlu0 %v2002, 68
  %v2962 = vpop.permute.xlu0 %2961
  %2963 = vrot.lane.b32.xlu0 %v2832, 68
  %v2964 = vpop.permute.xlu0 %2963
  %2965 = vrot.lane.b32.xlu0 %v2836, 68
  %v2966 = vpop.permute.xlu0 %2965
  %v3031 = vadd.f32 %v2763, %v2840
  %v3032 = vadd.f32 %v2764, %v2842
  %v3033 = vadd.f32 %v2765, %v2844
  %v3034 = vadd.f32 %v2766, %v2846
  %v3035 = vadd.f32 %v2767, %v2848
  %v3036 = vadd.f32 %v2768, %v2850
  %v3037 = vadd.f32 %v2769, %v2852
  %v3038 = vadd.f32 %v2770, %v2854
  %v3039 = vadd.f32 %v2771, %v2856
  %v3040 = vadd.f32 %v2772, %v2858
  %v3041 = vadd.f32 %v2773, %v2860
  %v3042 = vadd.f32 %v2774, %v2862
  %v3043 = vadd.f32 %v2775, %v2864
  %v3044 = vadd.f32 %v2776, %v2866
  %v3045 = vadd.f32 %v2777, %v2868
  %v3046 = vadd.f32 %v2778, %v2870
  %v3047 = vadd.f32 %v2779, %v2872
  %v3048 = vadd.f32 %v2780, %v2874
  %v3049 = vadd.f32 %v2781, %v2876
  %v3050 = vadd.f32 %v2782, %v2878
  %v3051 = vadd.f32 %v2783, %v2880
  %v3052 = vadd.f32 %v2784, %v2882
  %v3053 = vadd.f32 %v2785, %v2884
  %v3054 = vadd.f32 %v2786, %v2886
  %v3055 = vadd.f32 %v2787, %v2888
  %v3056 = vadd.f32 %v2788, %v2890
  %v3057 = vadd.f32 %v2789, %v2892
  %v3058 = vadd.f32 %v2790, %v2894
  %v3059 = vadd.f32 %v2791, %v2896
  %v3060 = vadd.f32 %v2792, %v2898
  %v3061 = vadd.f32 %v2793, %v2900
  %v3062 = vadd.f32 %v2794, %v2902
  %v3063 = vadd.f32 %v2795, %v2904
  %v3064 = vadd.f32 %v2796, %v2906
  %v3065 = vadd.f32 %v2797, %v2908
  %v3066 = vadd.f32 %v2798, %v2910
  %v3067 = vadd.f32 %v2799, %v2912
  %v3068 = vadd.f32 %v2800, %v2914
  %v3069 = vadd.f32 %v2801, %v2916
  %v3070 = vadd.f32 %v2802, %v2918
  %v3071 = vadd.f32 %v2803, %v2920
  %v3072 = vadd.f32 %v2804, %v2922
  %v3073 = vadd.f32 %v2805, %v2924
  %v3074 = vadd.f32 %v2806, %v2926
  %v3075 = vadd.f32 %v2807, %v2928
  %v3076 = vadd.f32 %v2808, %v2930
  %v3077 = vadd.f32 %v2809, %v2932
  %v3078 = vadd.f32 %v2810, %v2934
  %v3079 = vadd.f32 %v2811, %v2936
  %v3080 = vadd.f32 %v2812, %v2938
  %v3081 = vadd.f32 %v2813, %v2940
  %v3082 = vadd.f32 %v2814, %v2942
  %v3083 = vadd.f32 %v2815, %v2944
  %v3084 = vadd.f32 %v2816, %v2946
  %v3085 = vadd.f32 %v2817, %v2948
  %v3086 = vadd.f32 %v2818, %v2950
  %v3087 = vadd.f32 %v2819, %v2952
  %v3088 = vadd.f32 %v2820, %v2954
  %v3089 = vadd.f32 %v2821, %v2956
  %v3090 = vadd.f32 %v2822, %v2958
  %v3091 = vadd.f32 %v2823, %v2960
  %v3092 = vadd.f32 %v2824, %v2962
  %v3093 = vadd.f32 %v2825, %v2964
  %v3094 = vadd.f32 %v2826, %v2966
  %3095 = vrot.lane.b32.xlu0 %v1435, 56
  %v3096 = vpop.permute.xlu0 %3095
  %3097 = vrot.lane.b32.xlu0 %v1437, 56
  %v3098 = vpop.permute.xlu0 %3097
  %3099 = vrot.lane.b32.xlu0 %v1438, 56
  %v3100 = vpop.permute.xlu0 %3099
  %3101 = vrot.lane.b32.xlu0 %v1440, 56
  %v3102 = vpop.permute.xlu0 %3101
  %3103 = vrot.lane.b32.xlu0 %v1441, 56
  %v3104 = vpop.permute.xlu0 %3103
  %3105 = vrot.lane.b32.xlu0 %v1443, 56
  %v3106 = vpop.permute.xlu0 %3105
  %3107 = vrot.lane.b32.xlu0 %v1444, 56
  %v3108 = vpop.permute.xlu0 %3107
  %3109 = vrot.lane.b32.xlu0 %v1446, 56
  %v3110 = vpop.permute.xlu0 %3109
  %3111 = vrot.lane.b32.xlu0 %v1447, 56
  %v3112 = vpop.permute.xlu0 %3111
  %3113 = vrot.lane.b32.xlu0 %v1449, 56
  %v3114 = vpop.permute.xlu0 %3113
  %3115 = vrot.lane.b32.xlu0 %v1450, 56
  %v3116 = vpop.permute.xlu0 %3115
  %3117 = vrot.lane.b32.xlu0 %v1452, 56
  %v3118 = vpop.permute.xlu0 %3117
  %3119 = vrot.lane.b32.xlu0 %v1453, 56
  %v3120 = vpop.permute.xlu0 %3119
  %3121 = vrot.lane.b32.xlu0 %v1455, 56
  %v3122 = vpop.permute.xlu0 %3121
  %3123 = vrot.lane.b32.xlu0 %v1456, 56
  %v3124 = vpop.permute.xlu0 %3123
  %3125 = vrot.lane.b32.xlu0 %v1458, 56
  %v3126 = vpop.permute.xlu0 %3125
  %3127 = vrot.lane.b32.xlu0 %v1459, 56
  %v3128 = vpop.permute.xlu0 %3127
  %3129 = vrot.lane.b32.xlu0 %v1461, 56
  %v3130 = vpop.permute.xlu0 %3129
  %3131 = vrot.lane.b32.xlu0 %v1462, 56
  %v3132 = vpop.permute.xlu0 %3131
  %3133 = vrot.lane.b32.xlu0 %v1464, 56
  %v3134 = vpop.permute.xlu0 %3133
  %3135 = vrot.lane.b32.xlu0 %v1465, 56
  %v3136 = vpop.permute.xlu0 %3135
  %3137 = vrot.lane.b32.xlu0 %v1467, 56
  %v3138 = vpop.permute.xlu0 %3137
  %3139 = vrot.lane.b32.xlu0 %v1468, 56
  %v3140 = vpop.permute.xlu0 %3139
  %3141 = vrot.lane.b32.xlu0 %v1470, 56
  %v3142 = vpop.permute.xlu0 %3141
  %3143 = vrot.lane.b32.xlu0 %v1471, 56
  %v3144 = vpop.permute.xlu0 %3143
  %3145 = vrot.lane.b32.xlu0 %v1473, 56
  %v3146 = vpop.permute.xlu0 %3145
  %3147 = vrot.lane.b32.xlu0 %v1474, 56
  %v3148 = vpop.permute.xlu0 %3147
  %3149 = vrot.lane.b32.xlu0 %v1476, 56
  %v3150 = vpop.permute.xlu0 %3149
  %3151 = vrot.lane.b32.xlu0 %v2277, 56
  %v3152 = vpop.permute.xlu0 %3151
  %3153 = vrot.lane.b32.xlu0 %v2279, 56
  %v3154 = vpop.permute.xlu0 %3153
  %3155 = vrot.lane.b32.xlu0 %v1480, 56
  %v3156 = vpop.permute.xlu0 %3155
  %3157 = vrot.lane.b32.xlu0 %v1482, 56
  %v3158 = vpop.permute.xlu0 %3157
  %3159 = vrot.lane.b32.xlu0 %v1483, 56
  %v3160 = vpop.permute.xlu0 %3159
  %3161 = vrot.lane.b32.xlu0 %v1485, 56
  %v3162 = vpop.permute.xlu0 %3161
  %3163 = vrot.lane.b32.xlu0 %v1486, 56
  %v3164 = vpop.permute.xlu0 %3163
  %3165 = vrot.lane.b32.xlu0 %v1488, 56
  %v3166 = vpop.permute.xlu0 %3165
  %3167 = vrot.lane.b32.xlu0 %v1489, 56
  %v3168 = vpop.permute.xlu0 %3167
  %3169 = vrot.lane.b32.xlu0 %v1491, 56
  %v3170 = vpop.permute.xlu0 %3169
  %3171 = vrot.lane.b32.xlu0 %v1492, 56
  %v3172 = vpop.permute.xlu0 %3171
  %3173 = vrot.lane.b32.xlu0 %v1494, 56
  %v3174 = vpop.permute.xlu0 %3173
  %3175 = vrot.lane.b32.xlu0 %v1495, 56
  %v3176 = vpop.permute.xlu0 %3175
  %3177 = vrot.lane.b32.xlu0 %v1497, 56
  %v3178 = vpop.permute.xlu0 %3177
  %3179 = vrot.lane.b32.xlu0 %v1498, 56
  %v3180 = vpop.permute.xlu0 %3179
  %3181 = vrot.lane.b32.xlu0 %v1500, 56
  %v3182 = vpop.permute.xlu0 %3181
  %3183 = vrot.lane.b32.xlu0 %v1501, 56
  %v3184 = vpop.permute.xlu0 %3183
  %3185 = vrot.lane.b32.xlu0 %v1503, 56
  %v3186 = vpop.permute.xlu0 %3185
  %3187 = vrot.lane.b32.xlu0 %v1504, 56
  %v3188 = vpop.permute.xlu0 %3187
  %3189 = vrot.lane.b32.xlu0 %v1506, 56
  %v3190 = vpop.permute.xlu0 %3189
  %3191 = vrot.lane.b32.xlu0 %v1507, 56
  %v3192 = vpop.permute.xlu0 %3191
  %3193 = vrot.lane.b32.xlu0 %v1509, 56
  %v3194 = vpop.permute.xlu0 %3193
  %3195 = vrot.lane.b32.xlu0 %v1510, 56
  %v3196 = vpop.permute.xlu0 %3195
  %3197 = vrot.lane.b32.xlu0 %v1512, 56
  %v3198 = vpop.permute.xlu0 %3197
  %3199 = vrot.lane.b32.xlu0 %v1513, 56
  %v3200 = vpop.permute.xlu0 %3199
  %3201 = vrot.lane.b32.xlu0 %v1515, 56
  %v3202 = vpop.permute.xlu0 %3201
  %3203 = vrot.lane.b32.xlu0 %v1516, 56
  %v3204 = vpop.permute.xlu0 %3203
  %3205 = vrot.lane.b32.xlu0 %v1518, 56
  %v3206 = vpop.permute.xlu0 %3205
  %3207 = vrot.lane.b32.xlu0 %v1519, 56
  %v3208 = vpop.permute.xlu0 %3207
  %3209 = vrot.lane.b32.xlu0 %v1521, 56
  %v3210 = vpop.permute.xlu0 %3209
  %3211 = vrot.lane.b32.xlu0 %v2280, 56
  %v3212 = vpop.permute.xlu0 %3211
  %3213 = vrot.lane.b32.xlu0 %v2282, 56
  %v3214 = vpop.permute.xlu0 %3213
  %v3275 = vsel %vm1431, 0.0, %v3096
  %v3276 = vsel %vm1431, 0.0, %v3100
  %v3277 = vsel %vm1431, 0.0, %v3104
  %v3278 = vsel %vm1431, 0.0, %v3108
  %v3279 = vsel %vm1431, 0.0, %v3112
  %v3280 = vsel %vm1431, 0.0, %v3116
  %v3281 = vsel %vm1431, 0.0, %v3120
  %v3282 = vsel %vm1431, 0.0, %v3124
  %v3283 = vsel %vm1431, 0.0, %v3128
  %v3284 = vsel %vm1431, 0.0, %v3132
  %v3285 = vsel %vm1431, 0.0, %v3136
  %v3286 = vsel %vm1431, 0.0, %v3140
  %v3287 = vsel %vm1431, 0.0, %v3144
  %v3288 = vsel %vm1431, 0.0, %v3148
  %v3289 = vsel %vm1431, 0.0, %v3152
  %v3290 = vsel %vm1431, 0.0, %v3156
  %v3291 = vsel %vm1431, 0.0, %v3160
  %v3292 = vsel %vm1431, 0.0, %v3164
  %v3293 = vsel %vm1431, 0.0, %v3168
  %v3294 = vsel %vm1431, 0.0, %v3172
  %v3295 = vsel %vm1431, 0.0, %v3176
  %v3296 = vsel %vm1431, 0.0, %v3180
  %v3297 = vsel %vm1431, 0.0, %v3184
  %v3298 = vsel %vm1431, 0.0, %v3188
  %v3299 = vsel %vm1431, 0.0, %v3192
  %v3300 = vsel %vm1431, 0.0, %v3196
  %v3301 = vsel %vm1431, 0.0, %v3200
  %v3302 = vsel %vm1431, 0.0, %v3204
  %v3303 = vsel %vm1431, 0.0, %v3208
  %v3304 = vsel %vm1431, 0.0, %v3212
  %v3305 = vadd.f32 %v3031, %v3275
  %v3306 = vadd.f32 %v3032, %v3098
  %v3307 = vadd.f32 %v3033, %v3276
  %v3308 = vadd.f32 %v3034, %v3102
  %v3309 = vadd.f32 %v3035, %v3277
  %v3310 = vadd.f32 %v3036, %v3106
  %v3311 = vadd.f32 %v3037, %v3278
  %v3312 = vadd.f32 %v3038, %v3110
  %v3313 = vadd.f32 %v3039, %v3279
  %v3314 = vadd.f32 %v3040, %v3114
  %v3315 = vadd.f32 %v3041, %v3280
  %v3316 = vadd.f32 %v3042, %v3118
  %v3317 = vadd.f32 %v3043, %v3281
  %v3318 = vadd.f32 %v3044, %v3122
  %v3319 = vadd.f32 %v3045, %v3282
  %v3320 = vadd.f32 %v3046, %v3126
  %v3321 = vadd.f32 %v3047, %v3283
  %v3322 = vadd.f32 %v3048, %v3130
  %v3323 = vadd.f32 %v3049, %v3284
  %v3324 = vadd.f32 %v3050, %v3134
  %v3325 = vadd.f32 %v3051, %v3285
  %v3326 = vadd.f32 %v3052, %v3138
  %v3327 = vadd.f32 %v3053, %v3286
  %v3328 = vadd.f32 %v3054, %v3142
  %v3329 = vadd.f32 %v3055, %v3287
  %v3330 = vadd.f32 %v3056, %v3146
  %v3331 = vadd.f32 %v3057, %v3288
  %v3332 = vadd.f32 %v3058, %v3150
  %v3333 = vadd.f32 %v3059, %v3289
  %v3334 = vadd.f32 %v3060, %v3154
  %v3335 = vadd.f32 %v3061, 0.0
  %v3336 = vadd.f32 %v3062, 0.0
  %v3337 = vadd.f32 %v3063, %v3290
  %v3338 = vadd.f32 %v3064, %v3158
  %v3339 = vadd.f32 %v3065, %v3291
  %v3340 = vadd.f32 %v3066, %v3162
  %v3341 = vadd.f32 %v3067, %v3292
  %v3342 = vadd.f32 %v3068, %v3166
  %v3343 = vadd.f32 %v3069, %v3293
  %v3344 = vadd.f32 %v3070, %v3170
  %v3345 = vadd.f32 %v3071, %v3294
  %v3346 = vadd.f32 %v3072, %v3174
  %v3347 = vadd.f32 %v3073, %v3295
  %v3348 = vadd.f32 %v3074, %v3178
  %v3349 = vadd.f32 %v3075, %v3296
  %v3350 = vadd.f32 %v3076, %v3182
  %v3351 = vadd.f32 %v3077, %v3297
  %v3352 = vadd.f32 %v3078, %v3186
  %v3353 = vadd.f32 %v3079, %v3298
  %v3354 = vadd.f32 %v3080, %v3190
  %v3355 = vadd.f32 %v3081, %v3299
  %v3356 = vadd.f32 %v3082, %v3194
  %v3357 = vadd.f32 %v3083, %v3300
  %v3358 = vadd.f32 %v3084, %v3198
  %v3359 = vadd.f32 %v3085, %v3301
  %v3360 = vadd.f32 %v3086, %v3202
  %v3361 = vadd.f32 %v3087, %v3302
  %v3362 = vadd.f32 %v3088, %v3206
  %v3363 = vadd.f32 %v3089, %v3303
  %v3364 = vadd.f32 %v3090, %v3210
  %v3365 = vadd.f32 %v3091, %v3304
  %v3366 = vadd.f32 %v3092, %v3214
  %v3367 = vadd.f32 %v3093, 0.0
  %v3368 = vadd.f32 %v3094, 0.0
  %3370 = vrot.lane.b32.xlu0 %v1125, 44
  %v3371 = vpop.permute.xlu0 %3370
  %3372 = vrot.lane.b32.xlu0 %v1128, 44
  %v3373 = vpop.permute.xlu0 %3372
  %3374 = vrot.lane.b32.xlu0 %v1133, 44
  %v3375 = vpop.permute.xlu0 %3374
  %3376 = vrot.lane.b32.xlu0 %v1136, 44
  %v3377 = vpop.permute.xlu0 %3376
  %3378 = vrot.lane.b32.xlu0 %v1141, 44
  %v3379 = vpop.permute.xlu0 %3378
  %3380 = vrot.lane.b32.xlu0 %v1144, 44
  %v3381 = vpop.permute.xlu0 %3380
  %3382 = vrot.lane.b32.xlu0 %v1149, 44
  %v3383 = vpop.permute.xlu0 %3382
  %3384 = vrot.lane.b32.xlu0 %v1152, 44
  %v3385 = vpop.permute.xlu0 %3384
  %3386 = vrot.lane.b32.xlu0 %v1157, 44
  %v3387 = vpop.permute.xlu0 %3386
  %3388 = vrot.lane.b32.xlu0 %v1160, 44
  %v3389 = vpop.permute.xlu0 %3388
  %3390 = vrot.lane.b32.xlu0 %v1165, 44
  %v3391 = vpop.permute.xlu0 %3390
  %3392 = vrot.lane.b32.xlu0 %v1168, 44
  %v3393 = vpop.permute.xlu0 %3392
  %3394 = vrot.lane.b32.xlu0 %v1173, 44
  %v3395 = vpop.permute.xlu0 %3394
  %3396 = vrot.lane.b32.xlu0 %v1176, 44
  %v3397 = vpop.permute.xlu0 %3396
  %3398 = vrot.lane.b32.xlu0 %v1181, 44
  %v3399 = vpop.permute.xlu0 %3398
  %3400 = vrot.lane.b32.xlu0 %v1184, 44
  %v3401 = vpop.permute.xlu0 %3400
  %3402 = vrot.lane.b32.xlu0 %v1189, 44
  %v3403 = vpop.permute.xlu0 %3402
  %3404 = vrot.lane.b32.xlu0 %v1192, 44
  %v3405 = vpop.permute.xlu0 %3404
  %3406 = vrot.lane.b32.xlu0 %v1197, 44
  %v3407 = vpop.permute.xlu0 %3406
  %3408 = vrot.lane.b32.xlu0 %v1200, 44
  %v3409 = vpop.permute.xlu0 %3408
  %3410 = vrot.lane.b32.xlu0 %v1205, 44
  %v3411 = vpop.permute.xlu0 %3410
  %3412 = vrot.lane.b32.xlu0 %v1208, 44
  %v3413 = vpop.permute.xlu0 %3412
  %3414 = vrot.lane.b32.xlu0 %v1213, 44
  %v3415 = vpop.permute.xlu0 %3414
  %3416 = vrot.lane.b32.xlu0 %v1216, 44
  %v3417 = vpop.permute.xlu0 %3416
  %3418 = vrot.lane.b32.xlu0 %v1221, 44
  %v3419 = vpop.permute.xlu0 %3418
  %3420 = vrot.lane.b32.xlu0 %v1224, 44
  %v3421 = vpop.permute.xlu0 %3420
  %3422 = vrot.lane.b32.xlu0 %v1229, 44
  %v3423 = vpop.permute.xlu0 %3422
  %3424 = vrot.lane.b32.xlu0 %v1232, 44
  %v3425 = vpop.permute.xlu0 %3424
  %3426 = vrot.lane.b32.xlu0 %v1237, 44
  %v3427 = vpop.permute.xlu0 %3426
  %3428 = vrot.lane.b32.xlu0 %v1240, 44
  %v3429 = vpop.permute.xlu0 %3428
  %3430 = vrot.lane.b32.xlu0 0.0, 44
  %v3431 = vpop.permute.xlu0 %3430
  %3432 = vrot.lane.b32.xlu0 %v1253, 44
  %v3433 = vpop.permute.xlu0 %3432
  %3434 = vrot.lane.b32.xlu0 %v1256, 44
  %v3435 = vpop.permute.xlu0 %3434
  %3436 = vrot.lane.b32.xlu0 %v1261, 44
  %v3437 = vpop.permute.xlu0 %3436
  %3438 = vrot.lane.b32.xlu0 %v1264, 44
  %v3439 = vpop.permute.xlu0 %3438
  %3440 = vrot.lane.b32.xlu0 %v1269, 44
  %v3441 = vpop.permute.xlu0 %3440
  %3442 = vrot.lane.b32.xlu0 %v1272, 44
  %v3443 = vpop.permute.xlu0 %3442
  %3444 = vrot.lane.b32.xlu0 %v1277, 44
  %v3445 = vpop.permute.xlu0 %3444
  %3446 = vrot.lane.b32.xlu0 %v1280, 44
  %v3447 = vpop.permute.xlu0 %3446
  %3448 = vrot.lane.b32.xlu0 %v1285, 44
  %v3449 = vpop.permute.xlu0 %3448
  %3450 = vrot.lane.b32.xlu0 %v1288, 44
  %v3451 = vpop.permute.xlu0 %3450
  %3452 = vrot.lane.b32.xlu0 %v1293, 44
  %v3453 = vpop.permute.xlu0 %3452
  %3454 = vrot.lane.b32.xlu0 %v1296, 44
  %v3455 = vpop.permute.xlu0 %3454
  %3456 = vrot.lane.b32.xlu0 %v1301, 44
  %v3457 = vpop.permute.xlu0 %3456
  %3458 = vrot.lane.b32.xlu0 %v1304, 44
  %v3459 = vpop.permute.xlu0 %3458
  %3460 = vrot.lane.b32.xlu0 %v1309, 44
  %v3461 = vpop.permute.xlu0 %3460
  %3462 = vrot.lane.b32.xlu0 %v1312, 44
  %v3463 = vpop.permute.xlu0 %3462
  %3464 = vrot.lane.b32.xlu0 %v1317, 44
  %v3465 = vpop.permute.xlu0 %3464
  %3466 = vrot.lane.b32.xlu0 %v1320, 44
  %v3467 = vpop.permute.xlu0 %3466
  %3468 = vrot.lane.b32.xlu0 %v1325, 44
  %v3469 = vpop.permute.xlu0 %3468
  %3470 = vrot.lane.b32.xlu0 %v1328, 44
  %v3471 = vpop.permute.xlu0 %3470
  %3472 = vrot.lane.b32.xlu0 %v1333, 44
  %v3473 = vpop.permute.xlu0 %3472
  %3474 = vrot.lane.b32.xlu0 %v1336, 44
  %v3475 = vpop.permute.xlu0 %3474
  %3476 = vrot.lane.b32.xlu0 %v1341, 44
  %v3477 = vpop.permute.xlu0 %3476
  %3478 = vrot.lane.b32.xlu0 %v1344, 44
  %v3479 = vpop.permute.xlu0 %3478
  %3480 = vrot.lane.b32.xlu0 %v1349, 44
  %v3481 = vpop.permute.xlu0 %3480
  %3482 = vrot.lane.b32.xlu0 %v1352, 44
  %v3483 = vpop.permute.xlu0 %3482
  %3484 = vrot.lane.b32.xlu0 %v1357, 44
  %v3485 = vpop.permute.xlu0 %3484
  %3486 = vrot.lane.b32.xlu0 %v1360, 44
  %v3487 = vpop.permute.xlu0 %3486
  %3488 = vrot.lane.b32.xlu0 %v1365, 44
  %v3489 = vpop.permute.xlu0 %3488
  %3490 = vrot.lane.b32.xlu0 %v1368, 44
  %v3491 = vpop.permute.xlu0 %3490
  %v3553 = vadd.f32 %v3305, %v3371
  %v3554 = vadd.f32 %v3306, %v3373
  %v3555 = vadd.f32 %v3307, %v3375
  %v3556 = vadd.f32 %v3308, %v3377
  %v3557 = vadd.f32 %v3309, %v3379
  %v3558 = vadd.f32 %v3310, %v3381
  %v3559 = vadd.f32 %v3311, %v3383
  %v3560 = vadd.f32 %v3312, %v3385
  %v3561 = vadd.f32 %v3313, %v3387
  %v3562 = vadd.f32 %v3314, %v3389
  %v3563 = vadd.f32 %v3315, %v3391
  %v3564 = vadd.f32 %v3316, %v3393
  %v3565 = vadd.f32 %v3317, %v3395
  %v3566 = vadd.f32 %v3318, %v3397
  %v3567 = vadd.f32 %v3319, %v3399
  %v3568 = vadd.f32 %v3320, %v3401
  %v3569 = vadd.f32 %v3321, %v3403
  %v3570 = vadd.f32 %v3322, %v3405
  %v3571 = vadd.f32 %v3323, %v3407
  %v3572 = vadd.f32 %v3324, %v3409
  %v3573 = vadd.f32 %v3325, %v3411
  %v3574 = vadd.f32 %v3326, %v3413
  %v3575 = vadd.f32 %v3327, %v3415
  %v3576 = vadd.f32 %v3328, %v3417
  %v3577 = vadd.f32 %v3329, %v3419
  %v3578 = vadd.f32 %v3330, %v3421
  %v3579 = vadd.f32 %v3331, %v3423
  %v3580 = vadd.f32 %v3332, %v3425
  %v3581 = vadd.f32 %v3333, %v3427
  %v3582 = vadd.f32 %v3334, %v3429
  %v3583 = vadd.f32 %v3335, %v3431
  %v3584 = vadd.f32 %v3336, %v3431
  %v3585 = vadd.f32 %v3337, %v3433
  %v3586 = vadd.f32 %v3338, %v3435
  %v3587 = vadd.f32 %v3339, %v3437
  %v3588 = vadd.f32 %v3340, %v3439
  %v3589 = vadd.f32 %v3341, %v3441
  %v3590 = vadd.f32 %v3342, %v3443
  %v3591 = vadd.f32 %v3343, %v3445
  %v3592 = vadd.f32 %v3344, %v3447
  %v3593 = vadd.f32 %v3345, %v3449
  %v3594 = vadd.f32 %v3346, %v3451
  %v3595 = vadd.f32 %v3347, %v3453
  %v3596 = vadd.f32 %v3348, %v3455
  %v3597 = vadd.f32 %v3349, %v3457
  %v3598 = vadd.f32 %v3350, %v3459
  %v3599 = vadd.f32 %v3351, %v3461
  %v3600 = vadd.f32 %v3352, %v3463
  %v3601 = vadd.f32 %v3353, %v3465
  %v3602 = vadd.f32 %v3354, %v3467
  %v3603 = vadd.f32 %v3355, %v3469
  %v3604 = vadd.f32 %v3356, %v3471
  %v3605 = vadd.f32 %v3357, %v3473
  %v3606 = vadd.f32 %v3358, %v3475
  %v3607 = vadd.f32 %v3359, %v3477
  %v3608 = vadd.f32 %v3360, %v3479
  %v3609 = vadd.f32 %v3361, %v3481
  %v3610 = vadd.f32 %v3362, %v3483
  %v3611 = vadd.f32 %v3363, %v3485
  %v3612 = vadd.f32 %v3364, %v3487
  %v3613 = vadd.f32 %v3365, %v3489
  %v3614 = vadd.f32 %v3366, %v3491
  %v3615 = vadd.f32 %v3367, %v3431
  %v3616 = vadd.f32 %v3368, %v3431
  %3617 = vrot.lane.b32.xlu0 %v1858, 32
  %v3618 = vpop.permute.xlu0 %3617
  %3619 = vrot.lane.b32.xlu0 %v1974, 32
  %v3620 = vpop.permute.xlu0 %3619
  %3621 = vrot.lane.b32.xlu0 %v1861, 32
  %v3622 = vpop.permute.xlu0 %3621
  %3623 = vrot.lane.b32.xlu0 %v1975, 32
  %v3624 = vpop.permute.xlu0 %3623
  %3625 = vrot.lane.b32.xlu0 %v1864, 32
  %v3626 = vpop.permute.xlu0 %3625
  %3627 = vrot.lane.b32.xlu0 %v1976, 32
  %v3628 = vpop.permute.xlu0 %3627
  %3629 = vrot.lane.b32.xlu0 %v1867, 32
  %v3630 = vpop.permute.xlu0 %3629
  %3631 = vrot.lane.b32.xlu0 %v1977, 32
  %v3632 = vpop.permute.xlu0 %3631
  %3633 = vrot.lane.b32.xlu0 %v1870, 32
  %v3634 = vpop.permute.xlu0 %3633
  %3635 = vrot.lane.b32.xlu0 %v1978, 32
  %v3636 = vpop.permute.xlu0 %3635
  %3637 = vrot.lane.b32.xlu0 %v1873, 32
  %v3638 = vpop.permute.xlu0 %3637
  %3639 = vrot.lane.b32.xlu0 %v1979, 32
  %v3640 = vpop.permute.xlu0 %3639
  %3641 = vrot.lane.b32.xlu0 %v1876, 32
  %v3642 = vpop.permute.xlu0 %3641
  %3643 = vrot.lane.b32.xlu0 %v1980, 32
  %v3644 = vpop.permute.xlu0 %3643
  %3645 = vrot.lane.b32.xlu0 %v1879, 32
  %v3646 = vpop.permute.xlu0 %3645
  %3647 = vrot.lane.b32.xlu0 %v1981, 32
  %v3648 = vpop.permute.xlu0 %3647
  %3649 = vrot.lane.b32.xlu0 %v1882, 32
  %v3650 = vpop.permute.xlu0 %3649
  %3651 = vrot.lane.b32.xlu0 %v1982, 32
  %v3652 = vpop.permute.xlu0 %3651
  %3653 = vrot.lane.b32.xlu0 %v1885, 32
  %v3654 = vpop.permute.xlu0 %3653
  %3655 = vrot.lane.b32.xlu0 %v1983, 32
  %v3656 = vpop.permute.xlu0 %3655
  %3657 = vrot.lane.b32.xlu0 %v1888, 32
  %v3658 = vpop.permute.xlu0 %3657
  %3659 = vrot.lane.b32.xlu0 %v1984, 32
  %v3660 = vpop.permute.xlu0 %3659
  %3661 = vrot.lane.b32.xlu0 %v1891, 32
  %v3662 = vpop.permute.xlu0 %3661
  %3663 = vrot.lane.b32.xlu0 %v1985, 32
  %v3664 = vpop.permute.xlu0 %3663
  %3665 = vrot.lane.b32.xlu0 %v1894, 32
  %v3666 = vpop.permute.xlu0 %3665
  %3667 = vrot.lane.b32.xlu0 %v1986, 32
  %v3668 = vpop.permute.xlu0 %3667
  %3669 = vrot.lane.b32.xlu0 %v1897, 32
  %v3670 = vpop.permute.xlu0 %3669
  %3671 = vrot.lane.b32.xlu0 %v1987, 32
  %v3672 = vpop.permute.xlu0 %3671
  %3673 = vrot.lane.b32.xlu0 %v2829, 32
  %v3674 = vpop.permute.xlu0 %3673
  %3675 = vrot.lane.b32.xlu0 %v2835, 32
  %v3676 = vpop.permute.xlu0 %3675
  %3677 = vrot.lane.b32.xlu0 0.0, 32
  %v3678 = vpop.permute.xlu0 %3677
  %3679 = vrot.lane.b32.xlu0 %v1903, 32
  %v3680 = vpop.permute.xlu0 %3679
  %3681 = vrot.lane.b32.xlu0 %v1989, 32
  %v3682 = vpop.permute.xlu0 %3681
  %3683 = vrot.lane.b32.xlu0 %v1906, 32
  %v3684 = vpop.permute.xlu0 %3683
  %3685 = vrot.lane.b32.xlu0 %v1990, 32
  %v3686 = vpop.permute.xlu0 %3685
  %3687 = vrot.lane.b32.xlu0 %v1909, 32
  %v3688 = vpop.permute.xlu0 %3687
  %3689 = vrot.lane.b32.xlu0 %v1991, 32
  %v3690 = vpop.permute.xlu0 %3689
  %3691 = vrot.lane.b32.xlu0 %v1912, 32
  %v3692 = vpop.permute.xlu0 %3691
  %3693 = vrot.lane.b32.xlu0 %v1992, 32
  %v3694 = vpop.permute.xlu0 %3693
  %3695 = vrot.lane.b32.xlu0 %v1915, 32
  %v3696 = vpop.permute.xlu0 %3695
  %3697 = vrot.lane.b32.xlu0 %v1993, 32
  %v3698 = vpop.permute.xlu0 %3697
  %3699 = vrot.lane.b32.xlu0 %v1918, 32
  %v3700 = vpop.permute.xlu0 %3699
  %3701 = vrot.lane.b32.xlu0 %v1994, 32
  %v3702 = vpop.permute.xlu0 %3701
  %3703 = vrot.lane.b32.xlu0 %v1921, 32
  %v3704 = vpop.permute.xlu0 %3703
  %3705 = vrot.lane.b32.xlu0 %v1995, 32
  %v3706 = vpop.permute.xlu0 %3705
  %3707 = vrot.lane.b32.xlu0 %v1924, 32
  %v3708 = vpop.permute.xlu0 %3707
  %3709 = vrot.lane.b32.xlu0 %v1996, 32
  %v3710 = vpop.permute.xlu0 %3709
  %3711 = vrot.lane.b32.xlu0 %v1927, 32
  %v3712 = vpop.permute.xlu0 %3711
  %3713 = vrot.lane.b32.xlu0 %v1997, 32
  %v3714 = vpop.permute.xlu0 %3713
  %3715 = vrot.lane.b32.xlu0 %v1930, 32
  %v3716 = vpop.permute.xlu0 %3715
  %3717 = vrot.lane.b32.xlu0 %v1998, 32
  %v3718 = vpop.permute.xlu0 %3717
  %3719 = vrot.lane.b32.xlu0 %v1933, 32
  %v3720 = vpop.permute.xlu0 %3719
  %3721 = vrot.lane.b32.xlu0 %v1999, 32
  %v3722 = vpop.permute.xlu0 %3721
  %3723 = vrot.lane.b32.xlu0 %v1936, 32
  %v3724 = vpop.permute.xlu0 %3723
  %3725 = vrot.lane.b32.xlu0 %v2000, 32
  %v3726 = vpop.permute.xlu0 %3725
  %3727 = vrot.lane.b32.xlu0 %v1939, 32
  %v3728 = vpop.permute.xlu0 %3727
  %3729 = vrot.lane.b32.xlu0 %v2001, 32
  %v3730 = vpop.permute.xlu0 %3729
  %3731 = vrot.lane.b32.xlu0 %v1942, 32
  %v3732 = vpop.permute.xlu0 %3731
  %3733 = vrot.lane.b32.xlu0 %v2002, 32
  %v3734 = vpop.permute.xlu0 %3733
  %3735 = vrot.lane.b32.xlu0 %v2832, 32
  %v3736 = vpop.permute.xlu0 %3735
  %3737 = vrot.lane.b32.xlu0 %v2836, 32
  %v3738 = vpop.permute.xlu0 %3737
  %v3800 = vadd.f32 %v3553, %v3618
  %v3801 = vadd.f32 %v3554, %v3620
  %v3802 = vadd.f32 %v3555, %v3622
  %v3803 = vadd.f32 %v3556, %v3624
  %v3804 = vadd.f32 %v3557, %v3626
  %v3805 = vadd.f32 %v3558, %v3628
  %v3806 = vadd.f32 %v3559, %v3630
  %v3807 = vadd.f32 %v3560, %v3632
  %v3808 = vadd.f32 %v3561, %v3634
  %v3809 = vadd.f32 %v3562, %v3636
  %v3810 = vadd.f32 %v3563, %v3638
  %v3811 = vadd.f32 %v3564, %v3640
  %v3812 = vadd.f32 %v3565, %v3642
  %v3813 = vadd.f32 %v3566, %v3644
  %v3814 = vadd.f32 %v3567, %v3646
  %v3815 = vadd.f32 %v3568, %v3648
  %v3816 = vadd.f32 %v3569, %v3650
  %v3817 = vadd.f32 %v3570, %v3652
  %v3818 = vadd.f32 %v3571, %v3654
  %v3819 = vadd.f32 %v3572, %v3656
  %v3820 = vadd.f32 %v3573, %v3658
  %v3821 = vadd.f32 %v3574, %v3660
  %v3822 = vadd.f32 %v3575, %v3662
  %v3823 = vadd.f32 %v3576, %v3664
  %v3824 = vadd.f32 %v3577, %v3666
  %v3825 = vadd.f32 %v3578, %v3668
  %v3826 = vadd.f32 %v3579, %v3670
  %v3827 = vadd.f32 %v3580, %v3672
  %v3828 = vadd.f32 %v3581, %v3674
  %v3829 = vadd.f32 %v3582, %v3676
  %v3830 = vadd.f32 %v3583, %v3678
  %v3831 = vadd.f32 %v3584, %v3678
  %v3832 = vadd.f32 %v3585, %v3680
  %v3833 = vadd.f32 %v3586, %v3682
  %v3834 = vadd.f32 %v3587, %v3684
  %v3835 = vadd.f32 %v3588, %v3686
  %v3836 = vadd.f32 %v3589, %v3688
  %v3837 = vadd.f32 %v3590, %v3690
  %v3838 = vadd.f32 %v3591, %v3692
  %v3839 = vadd.f32 %v3592, %v3694
  %v3840 = vadd.f32 %v3593, %v3696
  %v3841 = vadd.f32 %v3594, %v3698
  %v3842 = vadd.f32 %v3595, %v3700
  %v3843 = vadd.f32 %v3596, %v3702
  %v3844 = vadd.f32 %v3597, %v3704
  %v3845 = vadd.f32 %v3598, %v3706
  %v3846 = vadd.f32 %v3599, %v3708
  %v3847 = vadd.f32 %v3600, %v3710
  %v3848 = vadd.f32 %v3601, %v3712
  %v3849 = vadd.f32 %v3602, %v3714
  %v3850 = vadd.f32 %v3603, %v3716
  %v3851 = vadd.f32 %v3604, %v3718
  %v3852 = vadd.f32 %v3605, %v3720
  %v3853 = vadd.f32 %v3606, %v3722
  %v3854 = vadd.f32 %v3607, %v3724
  %v3855 = vadd.f32 %v3608, %v3726
  %v3856 = vadd.f32 %v3609, %v3728
  %v3857 = vadd.f32 %v3610, %v3730
  %v3858 = vadd.f32 %v3611, %v3732
  %v3859 = vadd.f32 %v3612, %v3734
  %v3860 = vadd.f32 %v3613, %v3736
  %v3861 = vadd.f32 %v3614, %v3738
  %v3862 = vadd.f32 %v3615, %v3678
  %v3863 = vadd.f32 %v3616, %v3678
  %vm3864 = vcmask 97280
  %3865 = vst.msk [vmem:[%s7] sm:$0xff] %vm3864, %v3800
  %3866 = vst.msk [vmem:[%s7 + $0x8] sm:$0xff] %vm3864, %v3801
  %3867 = vst.msk [vmem:[%s7 + $0x10] sm:$0xff] %vm3864, %v3802
  %3868 = vst.msk [vmem:[%s7 + $0x18] sm:$0xff] %vm3864, %v3803
  %3869 = vst.msk [vmem:[%s7 + $0x20] sm:$0xff] %vm3864, %v3804
  %3870 = vst.msk [vmem:[%s7 + $0x28] sm:$0xff] %vm3864, %v3805
  %3871 = vst.msk [vmem:[%s7 + $0x30] sm:$0xff] %vm3864, %v3806
  %3872 = vst.msk [vmem:[%s7 + $0x38] sm:$0xff] %vm3864, %v3807
  %3873 = vst.msk [vmem:[%s7 + $0x40] sm:$0xff] %vm3864, %v3808
  %3874 = vst.msk [vmem:[%s7 + $0x48] sm:$0xff] %vm3864, %v3809
  %3875 = vst.msk [vmem:[%s7 + $0x50] sm:$0xff] %vm3864, %v3810
  %3876 = vst.msk [vmem:[%s7 + $0x58] sm:$0xff] %vm3864, %v3811
  %3877 = vst.msk [vmem:[%s7 + $0x60] sm:$0xff] %vm3864, %v3812
  %3878 = vst.msk [vmem:[%s7 + $0x68] sm:$0xff] %vm3864, %v3813
  %3879 = vst.msk [vmem:[%s7 + $0x70] sm:$0xff] %vm3864, %v3814
  %3880 = vst.msk [vmem:[%s7 + $0x78] sm:$0xff] %vm3864, %v3815
  %3881 = vst.msk [vmem:[%s7 + $0x80] sm:$0xff] %vm3864, %v3816
  %3882 = vst.msk [vmem:[%s7 + $0x88] sm:$0xff] %vm3864, %v3817
  %3883 = vst.msk [vmem:[%s7 + $0x90] sm:$0xff] %vm3864, %v3818
  %3884 = vst.msk [vmem:[%s7 + $0x98] sm:$0xff] %vm3864, %v3819
  %3885 = vst.msk [vmem:[%s7 + $0xa0] sm:$0xff] %vm3864, %v3820
  %3886 = vst.msk [vmem:[%s7 + $0xa8] sm:$0xff] %vm3864, %v3821
  %3887 = vst.msk [vmem:[%s7 + $0xb0] sm:$0xff] %vm3864, %v3822
  %3888 = vst.msk [vmem:[%s7 + $0xb8] sm:$0xff] %vm3864, %v3823
  %3889 = vst.msk [vmem:[%s7 + $0xc0] sm:$0xff] %vm3864, %v3824
  %3890 = vst.msk [vmem:[%s7 + $0xc8] sm:$0xff] %vm3864, %v3825
  %3891 = vst.msk [vmem:[%s7 + $0xd0] sm:$0xff] %vm3864, %v3826
  %3892 = vst.msk [vmem:[%s7 + $0xd8] sm:$0xff] %vm3864, %v3827
  %3893 = vst.msk [vmem:[%s7 + $0xe0] sm:$0xff] %vm3864, %v3828
  %3894 = vst.msk [vmem:[%s7 + $0xe8] sm:$0xff] %vm3864, %v3829
  %3895 = vst.msk [vmem:[%s7 + $0xf0] sm:$0xff] %vm3864, %v3830
  %3896 = vst.msk [vmem:[%s7 + $0xf8] sm:$0xff] %vm3864, %v3831
  %3897 = vst.msk [vmem:[%s7 + $0x100] sm:$0xff] %vm3864, %v3832
  %3898 = vst.msk [vmem:[%s7 + $0x108] sm:$0xff] %vm3864, %v3833
  %3899 = vst.msk [vmem:[%s7 + $0x110] sm:$0xff] %vm3864, %v3834
  %3900 = vst.msk [vmem:[%s7 + $0x118] sm:$0xff] %vm3864, %v3835
  %3901 = vst.msk [vmem:[%s7 + $0x120] sm:$0xff] %vm3864, %v3836
  %3902 = vst.msk [vmem:[%s7 + $0x128] sm:$0xff] %vm3864, %v3837
  %3903 = vst.msk [vmem:[%s7 + $0x130] sm:$0xff] %vm3864, %v3838
  %3904 = vst.msk [vmem:[%s7 + $0x138] sm:$0xff] %vm3864, %v3839
  %3905 = vst.msk [vmem:[%s7 + $0x140] sm:$0xff] %vm3864, %v3840
  %3906 = vst.msk [vmem:[%s7 + $0x148] sm:$0xff] %vm3864, %v3841
  %3907 = vst.msk [vmem:[%s7 + $0x150] sm:$0xff] %vm3864, %v3842
  %3908 = vst.msk [vmem:[%s7 + $0x158] sm:$0xff] %vm3864, %v3843
  %3909 = vst.msk [vmem:[%s7 + $0x160] sm:$0xff] %vm3864, %v3844
  %3910 = vst.msk [vmem:[%s7 + $0x168] sm:$0xff] %vm3864, %v3845
  %3911 = vst.msk [vmem:[%s7 + $0x170] sm:$0xff] %vm3864, %v3846
  %3912 = vst.msk [vmem:[%s7 + $0x178] sm:$0xff] %vm3864, %v3847
  %3913 = vst.msk [vmem:[%s7 + $0x180] sm:$0xff] %vm3864, %v3848
  %3914 = vst.msk [vmem:[%s7 + $0x188] sm:$0xff] %vm3864, %v3849
  %3915 = vst.msk [vmem:[%s7 + $0x190] sm:$0xff] %vm3864, %v3850
  %3916 = vst.msk [vmem:[%s7 + $0x198] sm:$0xff] %vm3864, %v3851
  %3917 = vst.msk [vmem:[%s7 + $0x1a0] sm:$0xff] %vm3864, %v3852
  %3918 = vst.msk [vmem:[%s7 + $0x1a8] sm:$0xff] %vm3864, %v3853
  %3919 = vst.msk [vmem:[%s7 + $0x1b0] sm:$0xff] %vm3864, %v3854
  %3920 = vst.msk [vmem:[%s7 + $0x1b8] sm:$0xff] %vm3864, %v3855
  %3921 = vst.msk [vmem:[%s7 + $0x1c0] sm:$0xff] %vm3864, %v3856
  %3922 = vst.msk [vmem:[%s7 + $0x1c8] sm:$0xff] %vm3864, %v3857
  %3923 = vst.msk [vmem:[%s7 + $0x1d0] sm:$0xff] %vm3864, %v3858
  %3924 = vst.msk [vmem:[%s7 + $0x1d8] sm:$0xff] %vm3864, %v3859
  %3925 = vst.msk [vmem:[%s7 + $0x1e0] sm:$0xff] %vm3864, %v3860
  %3926 = vst.msk [vmem:[%s7 + $0x1e8] sm:$0xff] %vm3864, %v3861
  %3927 = vst.msk [vmem:[%s7 + $0x1f0] sm:$0xff] %vm3864, %v3862
  %3928 = vst.msk [vmem:[%s7 + $0x1f8] sm:$0xff] %vm3864, %v3863
  // Predicated region
  $region30: #{qfw_bottleneck.1} parent=0 // pred_check
    _
  $region31: #{qfw_bottleneck.1} parent=0 // pred_check_branch
    %3930 = sbr.rel (0) target = $region33
  $region32: #{qfw_bottleneck.1} parent=0 // pred_region
    _
  $region33: #{qfw_bottleneck.1} parent=0 // pred_fallthru
    _
  // Predicated region
  $region34: #{qfw_bottleneck.1} parent=0 // pred_check
    _
  $region35: #{qfw_bottleneck.1} parent=0 // pred_check_branch
    %3932 = sbr.rel (0) target = $region37
  $region36: #{qfw_bottleneck.1} parent=0 // pred_region
    _
  $region37: #{qfw_bottleneck.1} parent=0 // pred_fallthru
    _

</llo_original>
